<compile_context>
chip_gen: v6e
topology: v6e:2x2x1
jax: 0.10.0
libtpu: 0.0.40
codegen_flags: <defaults>
</compile_context>

<pallas_src>
import jax
import jax.numpy as jnp
from jax.experimental import pallas as pl
from jax.experimental.pallas import tpu as pltpu


HIDDEN = 64
BN_EPS = 1e-5  # PyTorch BatchNorm2d default


# ----------------------------- Pallas kernels ------------------------------

def _conv_bn_relu_kernel(x_ref, w_ref, gamma_ref, beta_ref, o_ref):
    """One conv layer for one branch, fully fused.

    x: (M, K) bf16 im2col patches       w: (K, Cout) bf16
    gamma/beta: (1, Cout) f32           o: (M, Cout) bf16
    Rows of x are the flattened (N, Ho, Wo) positions, so per-channel mean/var
    over axis 0 reproduces PyTorch training-mode BatchNorm2d statistics
    (biased variance, as used by the BN forward pass).
    """
    acc = jnp.dot(x_ref[...], w_ref[...], preferred_element_type=jnp.float32)
    mean = jnp.mean(acc, axis=0, keepdims=True)
    var = jnp.mean(jnp.square(acc - mean), axis=0, keepdims=True)
    scale = gamma_ref[...] * jax.lax.rsqrt(var + BN_EPS)     # EUP rsqrt
    shift = beta_ref[...] - mean * scale
    o_ref[...] = jnp.maximum(acc * scale + shift, 0.0).astype(o_ref.dtype)


def conv_bn_relu_pair(x2, w2, gamma2, beta2):
    """Run the state+goal conv layers of one level in a single pallas_call.

    x2: (2, M, K) bf16, w2: (2, K, Cout) bf16, gamma2/beta2: (2, 1, Cout) f32.
    grid=(2,) "parallel": branches are independent (one per TC on v7x).
    """
    _, M, K = x2.shape
    Cout = w2.shape[-1]
    return pl.pallas_call(
        _conv_bn_relu_kernel,
        out_shape=jax.ShapeDtypeStruct((2, M, Cout), jnp.bfloat16),
        grid=(2,),
        in_specs=[
            pl.BlockSpec((None, M, K), lambda i: (i, 0, 0)),
            pl.BlockSpec((None, K, Cout), lambda i: (i, 0, 0)),
            pl.BlockSpec((None, 1, Cout), lambda i: (i, 0, 0)),
            pl.BlockSpec((None, 1, Cout), lambda i: (i, 0, 0)),
        ],
        out_specs=pl.BlockSpec((None, M, Cout), lambda i: (i, 0, 0)),
        compiler_params=pltpu.CompilerParams(
            dimension_semantics=("parallel",),
            vmem_limit_bytes=32 * 1024 * 1024),
    )(x2, w2, gamma2, beta2)


def _head_kernel(s_ref, a_ref, g_ref,
                 sw_ref, sb_ref, gw_ref, gb_ref,
                 a1w_ref, a1b_ref, a2w_ref, a2b_ref, arw_ref, arb_ref,
                 l1s_ref, l1a_ref, l1g_ref, l1b_ref,
                 l2w_ref, l2b_ref, l3w_ref, l3b_ref,
                 o_ref):
    """All eight Linear layers of the DQN head in one launch (f32)."""
    f32 = jnp.float32

    def dense(x, w_ref, b_ref, relu):
        y = jnp.dot(x, w_ref[...], preferred_element_type=f32) + b_ref[...]
        return jnp.maximum(y, 0.0) if relu else y

    s = dense(s_ref[...].astype(f32), sw_ref, sb_ref, True)       # state_rep
    g = dense(g_ref[...].astype(f32), gw_ref, gb_ref, True)       # goal_rep
    a = dense(a_ref[...].astype(f32), a1w_ref, a1b_ref, True)     # act1
    a = dense(a, a2w_ref, a2b_ref, True)                          # act2
    a = dense(a, arw_ref, arb_ref, False)                         # act_rep (no ReLU)
    # last_linear1 on cat([s, a, g], 1) == sum of three partial matmuls.
    x = (jnp.dot(s, l1s_ref[...], preferred_element_type=f32)
         + jnp.dot(a, l1a_ref[...], preferred_element_type=f32)
         + jnp.dot(g, l1g_ref[...], preferred_element_type=f32)
         + l1b_ref[...])
    x = jnp.maximum(x, 0.0)
    x = dense(x, l2w_ref, l2b_ref, True)                          # last_linear2
    o_ref[...] = dense(x, l3w_ref, l3b_ref, True)                 # last_linear3 (+ReLU per spec)


def head_forward(s_flat, a, g_flat, head_params):
    B = s_flat.shape[0]
    args = (s_flat, a, g_flat) + tuple(head_params)
    in_specs = [pl.BlockSpec(x.shape, lambda i: (0, 0)) for x in args]  # all 2-D
    return pl.pallas_call(
        _head_kernel,
        out_shape=jax.ShapeDtypeStruct((B, 1), jnp.float32),
        grid=(1,),
        in_specs=in_specs,
        out_specs=pl.BlockSpec((B, 1), lambda i: (0, 0)),
        compiler_params=pltpu.CompilerParams(
            dimension_semantics=("arbitrary",),
            vmem_limit_bytes=32 * 1024 * 1024),
    )(*args)


# ------------------------------ glue (plain JAX) ---------------------------

def im2col_pair(x, k=3, stride=2, pad=1):
    """(2,N,H,W,C) -> ((2, N*Ho*Wo, k*k*C), Ho, Wo); patch order (kh, kw, Cin)."""
    B2, N, H, W, C = x.shape
    Ho = (H - k + 2 * pad) // stride + 1
    Wo = (W - k + 2 * pad) // stride + 1
    xp = jnp.pad(x, ((0, 0), (0, 0), (pad, pad), (pad, pad), (0, 0)))
    cols = []
    for ky in range(k):
        for kx in range(k):
            cols.append(xp[:, :, ky:ky + stride * (Ho - 1) + 1:stride,
                               kx:kx + stride * (Wo - 1) + 1:stride, :])
    patches = jnp.concatenate(cols, axis=-1)          # (2, N, Ho, Wo, k*k*C)
    return patches.reshape(B2, N * Ho * Wo, k * k * C), Ho, Wo


# ------------------------------ parameter init -----------------------------

def conv_size_out(size, k=3, s=2, p=1):
    return (size - k + 2 * p) // s + 1


def init_params(h, w, dim_actions, key):
    """Parameters in the PyTorch module's native layouts."""
    convw = conv_size_out(conv_size_out(conv_size_out(w)))
    convh = conv_size_out(conv_size_out(conv_size_out(h)))
    lin_in = convw * convh * 16

    keys = iter(jax.random.split(key, 64))

    def conv_p(cin, cout):
        return (0.05 * jax.random.normal(next(keys), (cout, cin, 3, 3), jnp.float32),
                0.05 * jax.random.normal(next(keys), (cout,), jnp.float32))

    def bn_p(c):
        return jnp.ones((c,), jnp.float32), jnp.zeros((c,), jnp.float32)

    def lin_p(din, dout):
        return (0.05 * jax.random.normal(next(keys), (dout, din), jnp.float32),
                0.05 * jax.random.normal(next(keys), (dout,), jnp.float32))

    p = {}
    p['conv1'] = conv_p(4, 128); p['conv2'] = conv_p(128, 64); p['conv3'] = conv_p(64, 16)
    p['bn1'] = bn_p(128); p['bn2'] = bn_p(64); p['bn3'] = bn_p(16)
    p['conv4'] = conv_p(4, 128); p['conv5'] = conv_p(128, 64); p['conv6'] = conv_p(64, 16)
    p['bn4'] = bn_p(128); p['bn5'] = bn_p(64); p['bn6'] = bn_p(16)
    p['state_rep'] = lin_p(lin_in, HIDDEN)
    p['goal_rep'] = lin_p(lin_in, HIDDEN)
    p['act1'] = lin_p(dim_actions, HIDDEN)
    p['act2'] = lin_p(HIDDEN, HIDDEN)
    p['act_rep'] = lin_p(HIDDEN, HIDDEN)
    p['last1'] = lin_p(3 * HIDDEN, HIDDEN)
    p['last2'] = lin_p(HIDDEN, HIDDEN)
    p['last3'] = lin_p(HIDDEN, 1)
    return p, (convh, convw)


def pack_params(p, convh, convw):
    """One-time repack (outside jit) of PyTorch-layout params into kernel layout."""

    def pack_conv(w_oihw):
        # (Cout, Cin, kh, kw) -> (kh, kw, Cin, Cout) -> (kh*kw*Cin, Cout), bf16.
        cout = w_oihw.shape[0]
        return jnp.transpose(w_oihw, (2, 3, 1, 0)).reshape(-1, cout).astype(jnp.bfloat16)

    def pack_lin(w_out_in, b):
        return (jnp.transpose(w_out_in).astype(jnp.float32),
                b.reshape(1, -1).astype(jnp.float32))

    def pack_rep(w_out_in, b):
        # Re-order input features from NCHW .view() order to NHWC flatten order
        # so the wrapper needs no transpose before flattening.
        w = w_out_in.reshape(HIDDEN, 16, convh, convw)
        w = jnp.transpose(w, (0, 2, 3, 1)).reshape(HIDDEN, -1)
        return jnp.transpose(w).astype(jnp.float32), b.reshape(1, -1).astype(jnp.float32)

    packed = {}
    levels = [('conv1', 'conv4', 'bn1', 'bn4'),
              ('conv2', 'conv5', 'bn2', 'bn5'),
              ('conv3', 'conv6', 'bn3', 'bn6')]
    for lvl, (cs, cg, bns, bng) in enumerate(levels):
        # Conv biases (p[cs][1], p[cg][1]) intentionally dropped: exactly
        # cancelled by the batch-mean subtraction of the following BatchNorm.
        packed[f'convw{lvl}'] = jnp.stack([pack_conv(p[cs][0]), pack_conv(p[cg][0])])
        packed[f'bn_g{lvl}'] = jnp.stack(
            [p[bns][0].reshape(1, -1), p[bng][0].reshape(1, -1)]).astype(jnp.float32)
        packed[f'bn_b{lvl}'] = jnp.stack(
            [p[bns][1].reshape(1, -1), p[bng][1].reshape(1, -1)]).astype(jnp.float32)

    sw, sb = pack_rep(*p['state_rep'])
    gw, gb = pack_rep(*p['goal_rep'])
    a1w, a1b = pack_lin(*p['act1'])
    a2w, a2b = pack_lin(*p['act2'])
    arw, arb = pack_lin(*p['act_rep'])
    l1w, l1b = pack_lin(*p['last1'])                     # (3*HIDDEN, HIDDEN)
    l1s, l1a, l1g = (l1w[:HIDDEN], l1w[HIDDEN:2 * HIDDEN], l1w[2 * HIDDEN:])
    l2w, l2b = pack_lin(*p['last2'])
    l3w, l3b = pack_lin(*p['last3'])
    packed['head'] = (sw, sb, gw, gb, a1w, a1b, a2w, a2b, arw, arb,
                      l1s, l1a, l1g, l1b, l2w, l2b, l3w, l3b)
    return packed


# ------------------------------ forward pass -------------------------------

def dqn_forward(packed, s_nchw, a, g_nchw):
    n = s_nchw.shape[0]
    # NCHW (PyTorch convention) -> NHWC; stack state/goal on a leading axis so
    # each conv level is ONE pallas_call over grid=(2,) "parallel".
    x = jnp.stack([s_nchw, g_nchw], axis=0)                       # (2, N, 4, H, W)
    x = jnp.transpose(x, (0, 1, 3, 4, 2)).astype(jnp.bfloat16)    # (2, N, H, W, 4)

    for lvl in range(3):
        p2, ho, wo = im2col_pair(x)                               # (2, N*Ho*Wo, 9*Cin)
        y2 = conv_bn_relu_pair(p2, packed[f'convw{lvl}'],
                               packed[f'bn_g{lvl}'], packed[f'bn_b{lvl}'])
        x = y2.reshape(2, n, ho, wo, y2.shape[-1])                # bf16 NHWC

    # NHWC flatten; state_rep/goal_rep weights were re-ordered to match.
    s_flat = x[0].reshape(n, -1)
    g_flat = x[1].reshape(n, -1)
    return head_forward(s_flat, a.astype(jnp.float32), g_flat, packed['head'])


# ------------------------------ pure-JAX reference --------------------------

def dqn_reference(params, s, a, g):
    """Straightforward NCHW reference matching the PyTorch module (training-mode BN)."""
    def conv_bn_relu(x, conv, bn):
        w, b = conv
        gamma, beta = bn
        y = jax.lax.conv_general_dilated(
            x, w, window_strides=(2, 2), padding=((1, 1), (1, 1)),
            dimension_numbers=('NCHW', 'OIHW', 'NCHW'))
        y = y + b.reshape(1, -1, 1, 1)
        mean = jnp.mean(y, axis=(0, 2, 3), keepdims=True)
        var = jnp.mean(jnp.square(y - mean), axis=(0, 2, 3), keepdims=True)
        y = (y - mean) * jax.lax.rsqrt(var + BN_EPS)
        y = y * gamma.reshape(1, -1, 1, 1) + beta.reshape(1, -1, 1, 1)
        return jnp.maximum(y, 0.0)

    def dense(x, p_wb, relu=True):
        w, b = p_wb
        y = x @ w.T + b
        return jnp.maximum(y, 0.0) if relu else y

    x = s
    for c, bn in (('conv1', 'bn1'), ('conv2', 'bn2'), ('conv3', 'bn3')):
        x = conv_bn_relu(x, params[c], params[bn])
    srep = dense(x.reshape(x.shape[0], -1), params['state_rep'])
    y = g
    for c, bn in (('conv4', 'bn4'), ('conv5', 'bn5'), ('conv6', 'bn6')):
        y = conv_bn_relu(y, params[c], params[bn])
    grep = dense(y.reshape(y.shape[0], -1), params['goal_rep'])
    av = dense(a, params['act1'])
    av = dense(av, params['act2'])
    av = dense(av, params['act_rep'], relu=False)
    z = jnp.concatenate([srep, av, grep], axis=1)
    z = dense(z, params['last1'])
    z = dense(z, params['last2'])
    return dense(z, params['last3'])


# ----------------------------------- main -----------------------------------

if __name__ == "__main__":
    H = W = 16
    BATCH = 2
    DIM_ACTIONS = 8

    key = jax.random.PRNGKey(0)
    kp, ks, ka, kg = jax.random.split(key, 4)

    params, (convh, convw) = init_params(H, W, DIM_ACTIONS, kp)
    packed = pack_params(params, convh, convw)   # pre-packed once, outside jit

    s = jax.random.normal(ks, (BATCH, 4, H, W), jnp.float32)   # NCHW, like PyTorch
    a = jax.random.normal(ka, (BATCH, DIM_ACTIONS), jnp.float32)
    g = jax.random.normal(kg, (BATCH, 4, H, W), jnp.float32)

    out = jax.jit(dqn_forward)(packed, s, a, g)
    out = jax.block_until_ready(out)
    assert out.shape == (BATCH, 1), out.shape

    # Correctness check against the f32 pure-JAX reference (bf16 conv matmuls
    # in the kernel -> loose tolerance).
    ref = jax.block_until_ready(jax.jit(dqn_reference)(params, s, a, g))
    assert bool(jnp.allclose(out, ref, atol=0.1, rtol=0.1)), (
        "max abs diff", float(jnp.max(jnp.abs(out - ref))))

    print("KERNEL_OK")
</pallas_src>

<mosaic_0001>
module attributes {stable_mosaic.version = 11 : i64} {
  func.func @_conv_bn_relu_kernel(%arg0: i32, %arg1: memref<1x128x36xbf16, #tpu.memory_space<vmem>>, %arg2: memref<1x36x128xbf16, #tpu.memory_space<vmem>>, %arg3: memref<1x1x128xf32, #tpu.memory_space<vmem>>, %arg4: memref<1x1x128xf32, #tpu.memory_space<vmem>>, %arg5: memref<1x128x128xbf16, #tpu.memory_space<vmem>>) attributes {dimension_semantics = [#tpu.dimension_semantics<parallel>], iteration_bounds = array<i64: 2>, scalar_prefetch = 0 : i64, scratch_operands = 0 : i64, tpu.core_type = #tpu.core_type<tc>, window_params = [{transform_indices = @transform_0, window_bounds = array<i64: 1, 128, 36>}, {transform_indices = @transform_1, window_bounds = array<i64: 1, 36, 128>}, {transform_indices = @transform_2, window_bounds = array<i64: 1, 1, 128>}, {transform_indices = @transform_3, window_bounds = array<i64: 1, 1, 128>}, {transform_indices = @transform_4, window_bounds = array<i64: 1, 128, 128>}]} {
    %c0 = arith.constant 0 : index
    %c0_0 = arith.constant 0 : index
    %c0_1 = arith.constant 0 : index
    %0 = vector.load %arg1[%c0, %c0_0, %c0_1] : memref<1x128x36xbf16, #tpu.memory_space<vmem>>, vector<1x128x36xbf16>
    %1 = vector.shape_cast %0 : vector<1x128x36xbf16> to vector<128x36xbf16>
    %c0_2 = arith.constant 0 : index
    %c0_3 = arith.constant 0 : index
    %c0_4 = arith.constant 0 : index
    %2 = vector.load %arg2[%c0_2, %c0_3, %c0_4] : memref<1x36x128xbf16, #tpu.memory_space<vmem>>, vector<1x36x128xbf16>
    %3 = vector.shape_cast %2 : vector<1x36x128xbf16> to vector<36x128xbf16>
    %cst = arith.constant dense<0.000000e+00> : vector<128x128xf32>
    %4 = tpu.matmul %1, %3, %cst {dimension_numbers = #tpu.dot_dimension_numbers<[1], [0], [0], [1], [0, 0, 1, 1], [], []>} : vector<128x36xbf16>, vector<36x128xbf16>, vector<128x128xf32> -> vector<128x128xf32>
    %cst_5 = arith.constant dense<0.000000e+00> : vector<128xf32>
    %5 = vector.multi_reduction <add>, %4, %cst_5 [0] : vector<128x128xf32> to vector<128xf32>
    %6 = vector.shape_cast %5 : vector<128xf32> to vector<1x128xf32>
    %cst_6 = arith.constant 1.280000e+02 : f32
    %7 = vector.broadcast %cst_6 : f32 to vector<1x128xf32>
    %8 = arith.divf %6, %7 : vector<1x128xf32>
    %9 = vector.broadcast %8 : vector<1x128xf32> to vector<128x128xf32>
    %10 = arith.subf %4, %9 : vector<128x128xf32>
    %11 = arith.mulf %10, %10 : vector<128x128xf32>
    %cst_7 = arith.constant dense<0.000000e+00> : vector<128xf32>
    %12 = vector.multi_reduction <add>, %11, %cst_7 [0] : vector<128x128xf32> to vector<128xf32>
    %13 = vector.shape_cast %12 : vector<128xf32> to vector<1x128xf32>
    %cst_8 = arith.constant 1.280000e+02 : f32
    %14 = vector.broadcast %cst_8 : f32 to vector<1x128xf32>
    %15 = arith.divf %13, %14 : vector<1x128xf32>
    %c0_9 = arith.constant 0 : index
    %c0_10 = arith.constant 0 : index
    %c0_11 = arith.constant 0 : index
    %16 = vector.load %arg3[%c0_9, %c0_10, %c0_11] : memref<1x1x128xf32, #tpu.memory_space<vmem>>, vector<1x1x128xf32>
    %17 = vector.shape_cast %16 : vector<1x1x128xf32> to vector<1x128xf32>
    %cst_12 = arith.constant 9.99999974E-6 : f32
    %18 = vector.broadcast %cst_12 : f32 to vector<1x128xf32>
    %19 = arith.addf %15, %18 : vector<1x128xf32>
    %20 = math.rsqrt %19 : vector<1x128xf32>
    %21 = arith.mulf %17, %20 : vector<1x128xf32>
    %c0_13 = arith.constant 0 : index
    %c0_14 = arith.constant 0 : index
    %c0_15 = arith.constant 0 : index
    %22 = vector.load %arg4[%c0_13, %c0_14, %c0_15] : memref<1x1x128xf32, #tpu.memory_space<vmem>>, vector<1x1x128xf32>
    %23 = vector.shape_cast %22 : vector<1x1x128xf32> to vector<1x128xf32>
    %24 = arith.mulf %8, %21 : vector<1x128xf32>
    %25 = arith.subf %23, %24 : vector<1x128xf32>
    %26 = vector.broadcast %21 : vector<1x128xf32> to vector<128x128xf32>
    %27 = arith.mulf %4, %26 : vector<128x128xf32>
    %28 = vector.broadcast %25 : vector<1x128xf32> to vector<128x128xf32>
    %29 = arith.addf %27, %28 : vector<128x128xf32>
    %cst_16 = arith.constant 0.000000e+00 : f32
    %30 = vector.broadcast %cst_16 : f32 to vector<128x128xf32>
    %31 = arith.maximumf %29, %30 : vector<128x128xf32>
    %32 = arith.truncf %31 : vector<128x128xf32> to vector<128x128xbf16>
    %c0_17 = arith.constant 0 : index
    %c0_18 = arith.constant 0 : index
    %c0_19 = arith.constant 0 : index
    %33 = vector.load %arg5[%c0_17, %c0_18, %c0_19] : memref<1x128x128xbf16, #tpu.memory_space<vmem>>, vector<1x128x128xbf16>
    %34 = vector.shape_cast %33 : vector<1x128x128xbf16> to vector<128x128xbf16>
    %35 = vector.shape_cast %32 : vector<128x128xbf16> to vector<1x128x128xbf16>
    tpu.vector_store %arg5[%c0_17, %c0_18, %c0_19], %35 {strides = array<i32>} : memref<1x128x128xbf16, #tpu.memory_space<vmem>>, vector<1x128x128xbf16>,
    return
  }
  func.func @transform_0(%arg0: i32) -> (i32, i32, i32) {
    %c0_i32 = arith.constant 0 : i32
    %c0_i32_0 = arith.constant 0 : i32
    %c0_i32_1 = arith.constant 0 : i32
    return %arg0, %c0_i32, %c0_i32_0 : i32, i32, i32
  }
  func.func @transform_1(%arg0: i32) -> (i32, i32, i32) {
    %c0_i32 = arith.constant 0 : i32
    %c0_i32_0 = arith.constant 0 : i32
    %c0_i32_1 = arith.constant 0 : i32
    return %arg0, %c0_i32, %c0_i32_0 : i32, i32, i32
  }
  func.func @transform_2(%arg0: i32) -> (i32, i32, i32) {
    %c0_i32 = arith.constant 0 : i32
    %c0_i32_0 = arith.constant 0 : i32
    %c0_i32_1 = arith.constant 0 : i32
    return %arg0, %c0_i32, %c0_i32_0 : i32, i32, i32
  }
  func.func @transform_3(%arg0: i32) -> (i32, i32, i32) {
    %c0_i32 = arith.constant 0 : i32
    %c0_i32_0 = arith.constant 0 : i32
    %c0_i32_1 = arith.constant 0 : i32
    return %arg0, %c0_i32, %c0_i32_0 : i32, i32, i32
  }
  func.func @transform_4(%arg0: i32) -> (i32, i32, i32) {
    %c0_i32 = arith.constant 0 : i32
    %c0_i32_0 = arith.constant 0 : i32
    %c0_i32_1 = arith.constant 0 : i32
    return %arg0, %c0_i32, %c0_i32_0 : i32, i32, i32
  }
}

module attributes {stable_mosaic.version = 11 : i64} {
  func.func @_conv_bn_relu_kernel(%arg0: i32, %arg1: memref<1x32x1152xbf16, #tpu.memory_space<vmem>>, %arg2: memref<1x1152x64xbf16, #tpu.memory_space<vmem>>, %arg3: memref<1x1x64xf32, #tpu.memory_space<vmem>>, %arg4: memref<1x1x64xf32, #tpu.memory_space<vmem>>, %arg5: memref<1x32x64xbf16, #tpu.memory_space<vmem>>) attributes {dimension_semantics = [#tpu.dimension_semantics<parallel>], iteration_bounds = array<i64: 2>, scalar_prefetch = 0 : i64, scratch_operands = 0 : i64, tpu.core_type = #tpu.core_type<tc>, window_params = [{transform_indices = @transform_0, window_bounds = array<i64: 1, 32, 1152>}, {transform_indices = @transform_1, window_bounds = array<i64: 1, 1152, 64>}, {transform_indices = @transform_2, window_bounds = array<i64: 1, 1, 64>}, {transform_indices = @transform_3, window_bounds = array<i64: 1, 1, 64>}, {transform_indices = @transform_4, window_bounds = array<i64: 1, 32, 64>}]} {
    %c0 = arith.constant 0 : index
    %c0_0 = arith.constant 0 : index
    %c0_1 = arith.constant 0 : index
    %0 = vector.load %arg1[%c0, %c0_0, %c0_1] : memref<1x32x1152xbf16, #tpu.memory_space<vmem>>, vector<1x32x1152xbf16>
    %1 = vector.shape_cast %0 : vector<1x32x1152xbf16> to vector<32x1152xbf16>
    %c0_2 = arith.constant 0 : index
    %c0_3 = arith.constant 0 : index
    %c0_4 = arith.constant 0 : index
    %2 = vector.load %arg2[%c0_2, %c0_3, %c0_4] : memref<1x1152x64xbf16, #tpu.memory_space<vmem>>, vector<1x1152x64xbf16>
    %3 = vector.shape_cast %2 : vector<1x1152x64xbf16> to vector<1152x64xbf16>
    %cst = arith.constant dense<0.000000e+00> : vector<32x64xf32>
    %4 = tpu.matmul %1, %3, %cst {dimension_numbers = #tpu.dot_dimension_numbers<[1], [0], [0], [1], [0, 0, 1, 1], [], []>} : vector<32x1152xbf16>, vector<1152x64xbf16>, vector<32x64xf32> -> vector<32x64xf32>
    %cst_5 = arith.constant dense<0.000000e+00> : vector<64xf32>
    %5 = vector.multi_reduction <add>, %4, %cst_5 [0] : vector<32x64xf32> to vector<64xf32>
    %6 = vector.shape_cast %5 : vector<64xf32> to vector<1x64xf32>
    %cst_6 = arith.constant 3.200000e+01 : f32
    %7 = vector.broadcast %cst_6 : f32 to vector<1x64xf32>
    %8 = arith.divf %6, %7 : vector<1x64xf32>
    %9 = vector.broadcast %8 : vector<1x64xf32> to vector<32x64xf32>
    %10 = arith.subf %4, %9 : vector<32x64xf32>
    %11 = arith.mulf %10, %10 : vector<32x64xf32>
    %cst_7 = arith.constant dense<0.000000e+00> : vector<64xf32>
    %12 = vector.multi_reduction <add>, %11, %cst_7 [0] : vector<32x64xf32> to vector<64xf32>
    %13 = vector.shape_cast %12 : vector<64xf32> to vector<1x64xf32>
    %cst_8 = arith.constant 3.200000e+01 : f32
    %14 = vector.broadcast %cst_8 : f32 to vector<1x64xf32>
    %15 = arith.divf %13, %14 : vector<1x64xf32>
    %c0_9 = arith.constant 0 : index
    %c0_10 = arith.constant 0 : index
    %c0_11 = arith.constant 0 : index
    %16 = vector.load %arg3[%c0_9, %c0_10, %c0_11] : memref<1x1x64xf32, #tpu.memory_space<vmem>>, vector<1x1x64xf32>
    %17 = vector.shape_cast %16 : vector<1x1x64xf32> to vector<1x64xf32>
    %cst_12 = arith.constant 9.99999974E-6 : f32
    %18 = vector.broadcast %cst_12 : f32 to vector<1x64xf32>
    %19 = arith.addf %15, %18 : vector<1x64xf32>
    %20 = math.rsqrt %19 : vector<1x64xf32>
    %21 = arith.mulf %17, %20 : vector<1x64xf32>
    %c0_13 = arith.constant 0 : index
    %c0_14 = arith.constant 0 : index
    %c0_15 = arith.constant 0 : index
    %22 = vector.load %arg4[%c0_13, %c0_14, %c0_15] : memref<1x1x64xf32, #tpu.memory_space<vmem>>, vector<1x1x64xf32>
    %23 = vector.shape_cast %22 : vector<1x1x64xf32> to vector<1x64xf32>
    %24 = arith.mulf %8, %21 : vector<1x64xf32>
    %25 = arith.subf %23, %24 : vector<1x64xf32>
    %26 = vector.broadcast %21 : vector<1x64xf32> to vector<32x64xf32>
    %27 = arith.mulf %4, %26 : vector<32x64xf32>
    %28 = vector.broadcast %25 : vector<1x64xf32> to vector<32x64xf32>
    %29 = arith.addf %27, %28 : vector<32x64xf32>
    %cst_16 = arith.constant 0.000000e+00 : f32
    %30 = vector.broadcast %cst_16 : f32 to vector<32x64xf32>
    %31 = arith.maximumf %29, %30 : vector<32x64xf32>
    %32 = arith.truncf %31 : vector<32x64xf32> to vector<32x64xbf16>
    %c0_17 = arith.constant 0 : index
    %c0_18 = arith.constant 0 : index
    %c0_19 = arith.constant 0 : index
    %33 = vector.load %arg5[%c0_17, %c0_18, %c0_19] : memref<1x32x64xbf16, #tpu.memory_space<vmem>>, vector<1x32x64xbf16>
    %34 = vector.shape_cast %33 : vector<1x32x64xbf16> to vector<32x64xbf16>
    %35 = vector.shape_cast %32 : vector<32x64xbf16> to vector<1x32x64xbf16>
    tpu.vector_store %arg5[%c0_17, %c0_18, %c0_19], %35 {strides = array<i32>} : memref<1x32x64xbf16, #tpu.memory_space<vmem>>, vector<1x32x64xbf16>,
    return
  }
  func.func @transform_0(%arg0: i32) -> (i32, i32, i32) {
    %c0_i32 = arith.constant 0 : i32
    %c0_i32_0 = arith.constant 0 : i32
    %c0_i32_1 = arith.constant 0 : i32
    return %arg0, %c0_i32, %c0_i32_0 : i32, i32, i32
  }
  func.func @transform_1(%arg0: i32) -> (i32, i32, i32) {
    %c0_i32 = arith.constant 0 : i32
    %c0_i32_0 = arith.constant 0 : i32
    %c0_i32_1 = arith.constant 0 : i32
    return %arg0, %c0_i32, %c0_i32_0 : i32, i32, i32
  }
  func.func @transform_2(%arg0: i32) -> (i32, i32, i32) {
    %c0_i32 = arith.constant 0 : i32
    %c0_i32_0 = arith.constant 0 : i32
    %c0_i32_1 = arith.constant 0 : i32
    return %arg0, %c0_i32, %c0_i32_0 : i32, i32, i32
  }
  func.func @transform_3(%arg0: i32) -> (i32, i32, i32) {
    %c0_i32 = arith.constant 0 : i32
    %c0_i32_0 = arith.constant 0 : i32
    %c0_i32_1 = arith.constant 0 : i32
    return %arg0, %c0_i32, %c0_i32_0 : i32, i32, i32
  }
  func.func @transform_4(%arg0: i32) -> (i32, i32, i32) {
    %c0_i32 = arith.constant 0 : i32
    %c0_i32_0 = arith.constant 0 : i32
    %c0_i32_1 = arith.constant 0 : i32
    return %arg0, %c0_i32, %c0_i32_0 : i32, i32, i32
  }
}

module attributes {stable_mosaic.version = 11 : i64} {
  func.func @_conv_bn_relu_kernel(%arg0: i32, %arg1: memref<1x8x576xbf16, #tpu.memory_space<vmem>>, %arg2: memref<1x576x16xbf16, #tpu.memory_space<vmem>>, %arg3: memref<1x1x16xf32, #tpu.memory_space<vmem>>, %arg4: memref<1x1x16xf32, #tpu.memory_space<vmem>>, %arg5: memref<1x8x16xbf16, #tpu.memory_space<vmem>>) attributes {dimension_semantics = [#tpu.dimension_semantics<parallel>], iteration_bounds = array<i64: 2>, scalar_prefetch = 0 : i64, scratch_operands = 0 : i64, tpu.core_type = #tpu.core_type<tc>, window_params = [{transform_indices = @transform_0, window_bounds = array<i64: 1, 8, 576>}, {transform_indices = @transform_1, window_bounds = array<i64: 1, 576, 16>}, {transform_indices = @transform_2, window_bounds = array<i64: 1, 1, 16>}, {transform_indices = @transform_3, window_bounds = array<i64: 1, 1, 16>}, {transform_indices = @transform_4, window_bounds = array<i64: 1, 8, 16>}]} {
    %c0 = arith.constant 0 : index
    %c0_0 = arith.constant 0 : index
    %c0_1 = arith.constant 0 : index
    %0 = vector.load %arg1[%c0, %c0_0, %c0_1] : memref<1x8x576xbf16, #tpu.memory_space<vmem>>, vector<1x8x576xbf16>
    %1 = vector.shape_cast %0 : vector<1x8x576xbf16> to vector<8x576xbf16>
    %c0_2 = arith.constant 0 : index
    %c0_3 = arith.constant 0 : index
    %c0_4 = arith.constant 0 : index
    %2 = vector.load %arg2[%c0_2, %c0_3, %c0_4] : memref<1x576x16xbf16, #tpu.memory_space<vmem>>, vector<1x576x16xbf16>
    %3 = vector.shape_cast %2 : vector<1x576x16xbf16> to vector<576x16xbf16>
    %cst = arith.constant dense<0.000000e+00> : vector<8x16xf32>
    %4 = tpu.matmul %1, %3, %cst {dimension_numbers = #tpu.dot_dimension_numbers<[1], [0], [0], [1], [0, 0, 1, 1], [], []>} : vector<8x576xbf16>, vector<576x16xbf16>, vector<8x16xf32> -> vector<8x16xf32>
    %cst_5 = arith.constant dense<0.000000e+00> : vector<16xf32>
    %5 = vector.multi_reduction <add>, %4, %cst_5 [0] : vector<8x16xf32> to vector<16xf32>
    %6 = vector.shape_cast %5 : vector<16xf32> to vector<1x16xf32>
    %cst_6 = arith.constant 8.000000e+00 : f32
    %7 = vector.broadcast %cst_6 : f32 to vector<1x16xf32>
    %8 = arith.divf %6, %7 : vector<1x16xf32>
    %9 = vector.broadcast %8 : vector<1x16xf32> to vector<8x16xf32>
    %10 = arith.subf %4, %9 : vector<8x16xf32>
    %11 = arith.mulf %10, %10 : vector<8x16xf32>
    %cst_7 = arith.constant dense<0.000000e+00> : vector<16xf32>
    %12 = vector.multi_reduction <add>, %11, %cst_7 [0] : vector<8x16xf32> to vector<16xf32>
    %13 = vector.shape_cast %12 : vector<16xf32> to vector<1x16xf32>
    %cst_8 = arith.constant 8.000000e+00 : f32
    %14 = vector.broadcast %cst_8 : f32 to vector<1x16xf32>
    %15 = arith.divf %13, %14 : vector<1x16xf32>
    %c0_9 = arith.constant 0 : index
    %c0_10 = arith.constant 0 : index
    %c0_11 = arith.constant 0 : index
    %16 = vector.load %arg3[%c0_9, %c0_10, %c0_11] : memref<1x1x16xf32, #tpu.memory_space<vmem>>, vector<1x1x16xf32>
    %17 = vector.shape_cast %16 : vector<1x1x16xf32> to vector<1x16xf32>
    %cst_12 = arith.constant 9.99999974E-6 : f32
    %18 = vector.broadcast %cst_12 : f32 to vector<1x16xf32>
    %19 = arith.addf %15, %18 : vector<1x16xf32>
    %20 = math.rsqrt %19 : vector<1x16xf32>
    %21 = arith.mulf %17, %20 : vector<1x16xf32>
    %c0_13 = arith.constant 0 : index
    %c0_14 = arith.constant 0 : index
    %c0_15 = arith.constant 0 : index
    %22 = vector.load %arg4[%c0_13, %c0_14, %c0_15] : memref<1x1x16xf32, #tpu.memory_space<vmem>>, vector<1x1x16xf32>
    %23 = vector.shape_cast %22 : vector<1x1x16xf32> to vector<1x16xf32>
    %24 = arith.mulf %8, %21 : vector<1x16xf32>
    %25 = arith.subf %23, %24 : vector<1x16xf32>
    %26 = vector.broadcast %21 : vector<1x16xf32> to vector<8x16xf32>
    %27 = arith.mulf %4, %26 : vector<8x16xf32>
    %28 = vector.broadcast %25 : vector<1x16xf32> to vector<8x16xf32>
    %29 = arith.addf %27, %28 : vector<8x16xf32>
    %cst_16 = arith.constant 0.000000e+00 : f32
    %30 = vector.broadcast %cst_16 : f32 to vector<8x16xf32>
    %31 = arith.maximumf %29, %30 : vector<8x16xf32>
    %32 = arith.truncf %31 : vector<8x16xf32> to vector<8x16xbf16>
    %c0_17 = arith.constant 0 : index
    %c0_18 = arith.constant 0 : index
    %c0_19 = arith.constant 0 : index
    %33 = vector.load %arg5[%c0_17, %c0_18, %c0_19] : memref<1x8x16xbf16, #tpu.memory_space<vmem>>, vector<1x8x16xbf16>
    %34 = vector.shape_cast %33 : vector<1x8x16xbf16> to vector<8x16xbf16>
    %35 = vector.shape_cast %32 : vector<8x16xbf16> to vector<1x8x16xbf16>
    tpu.vector_store %arg5[%c0_17, %c0_18, %c0_19], %35 {strides = array<i32>} : memref<1x8x16xbf16, #tpu.memory_space<vmem>>, vector<1x8x16xbf16>,
    return
  }
  func.func @transform_0(%arg0: i32) -> (i32, i32, i32) {
    %c0_i32 = arith.constant 0 : i32
    %c0_i32_0 = arith.constant 0 : i32
    %c0_i32_1 = arith.constant 0 : i32
    return %arg0, %c0_i32, %c0_i32_0 : i32, i32, i32
  }
  func.func @transform_1(%arg0: i32) -> (i32, i32, i32) {
    %c0_i32 = arith.constant 0 : i32
    %c0_i32_0 = arith.constant 0 : i32
    %c0_i32_1 = arith.constant 0 : i32
    return %arg0, %c0_i32, %c0_i32_0 : i32, i32, i32
  }
  func.func @transform_2(%arg0: i32) -> (i32, i32, i32) {
    %c0_i32 = arith.constant 0 : i32
    %c0_i32_0 = arith.constant 0 : i32
    %c0_i32_1 = arith.constant 0 : i32
    return %arg0, %c0_i32, %c0_i32_0 : i32, i32, i32
  }
  func.func @transform_3(%arg0: i32) -> (i32, i32, i32) {
    %c0_i32 = arith.constant 0 : i32
    %c0_i32_0 = arith.constant 0 : i32
    %c0_i32_1 = arith.constant 0 : i32
    return %arg0, %c0_i32, %c0_i32_0 : i32, i32, i32
  }
  func.func @transform_4(%arg0: i32) -> (i32, i32, i32) {
    %c0_i32 = arith.constant 0 : i32
    %c0_i32_0 = arith.constant 0 : i32
    %c0_i32_1 = arith.constant 0 : i32
    return %arg0, %c0_i32, %c0_i32_0 : i32, i32, i32
  }
}

module attributes {stable_mosaic.version = 11 : i64} {
  func.func @_head_kernel(%arg0: i32, %arg1: memref<2x64xbf16, #tpu.memory_space<vmem>>, %arg2: memref<2x8xf32, #tpu.memory_space<vmem>>, %arg3: memref<2x64xbf16, #tpu.memory_space<vmem>>, %arg4: memref<64x64xf32, #tpu.memory_space<vmem>>, %arg5: memref<1x64xf32, #tpu.memory_space<vmem>>, %arg6: memref<64x64xf32, #tpu.memory_space<vmem>>, %arg7: memref<1x64xf32, #tpu.memory_space<vmem>>, %arg8: memref<8x64xf32, #tpu.memory_space<vmem>>, %arg9: memref<1x64xf32, #tpu.memory_space<vmem>>, %arg10: memref<64x64xf32, #tpu.memory_space<vmem>>, %arg11: memref<1x64xf32, #tpu.memory_space<vmem>>, %arg12: memref<64x64xf32, #tpu.memory_space<vmem>>, %arg13: memref<1x64xf32, #tpu.memory_space<vmem>>, %arg14: memref<64x64xf32, #tpu.memory_space<vmem>>, %arg15: memref<64x64xf32, #tpu.memory_space<vmem>>, %arg16: memref<64x64xf32, #tpu.memory_space<vmem>>, %arg17: memref<1x64xf32, #tpu.memory_space<vmem>>, %arg18: memref<64x64xf32, #tpu.memory_space<vmem>>, %arg19: memref<1x64xf32, #tpu.memory_space<vmem>>, %arg20: memref<64x1xf32, #tpu.memory_space<vmem>>, %arg21: memref<1x1xf32, #tpu.memory_space<vmem>>, %arg22: memref<2x1xf32, #tpu.memory_space<vmem>>) attributes {dimension_semantics = [#tpu.dimension_semantics<arbitrary>], iteration_bounds = array<i64: 1>, scalar_prefetch = 0 : i64, scratch_operands = 0 : i64, tpu.core_type = #tpu.core_type<tc>, window_params = [{pipeline_mode = #tpu.pipeline_mode<synchronous>, transform_indices = @transform_0, window_bounds = array<i64: 2, 64>}, {pipeline_mode = #tpu.pipeline_mode<synchronous>, transform_indices = @transform_1, window_bounds = array<i64: 2, 8>}, {pipeline_mode = #tpu.pipeline_mode<synchronous>, transform_indices = @transform_2, window_bounds = array<i64: 2, 64>}, {pipeline_mode = #tpu.pipeline_mode<synchronous>, transform_indices = @transform_3, window_bounds = array<i64: 64, 64>}, {pipeline_mode = #tpu.pipeline_mode<synchronous>, transform_indices = @transform_4, window_bounds = array<i64: 1, 64>}, {pipeline_mode = #tpu.pipeline_mode<synchronous>, transform_indices = @transform_5, window_bounds = array<i64: 64, 64>}, {pipeline_mode = #tpu.pipeline_mode<synchronous>, transform_indices = @transform_6, window_bounds = array<i64: 1, 64>}, {pipeline_mode = #tpu.pipeline_mode<synchronous>, transform_indices = @transform_7, window_bounds = array<i64: 8, 64>}, {pipeline_mode = #tpu.pipeline_mode<synchronous>, transform_indices = @transform_8, window_bounds = array<i64: 1, 64>}, {pipeline_mode = #tpu.pipeline_mode<synchronous>, transform_indices = @transform_9, window_bounds = array<i64: 64, 64>}, {pipeline_mode = #tpu.pipeline_mode<synchronous>, transform_indices = @transform_10, window_bounds = array<i64: 1, 64>}, {pipeline_mode = #tpu.pipeline_mode<synchronous>, transform_indices = @transform_11, window_bounds = array<i64: 64, 64>}, {pipeline_mode = #tpu.pipeline_mode<synchronous>, transform_indices = @transform_12, window_bounds = array<i64: 1, 64>}, {pipeline_mode = #tpu.pipeline_mode<synchronous>, transform_indices = @transform_13, window_bounds = array<i64: 64, 64>}, {pipeline_mode = #tpu.pipeline_mode<synchronous>, transform_indices = @transform_14, window_bounds = array<i64: 64, 64>}, {pipeline_mode = #tpu.pipeline_mode<synchronous>, transform_indices = @transform_15, window_bounds = array<i64: 64, 64>}, {pipeline_mode = #tpu.pipeline_mode<synchronous>, transform_indices = @transform_16, window_bounds = array<i64: 1, 64>}, {pipeline_mode = #tpu.pipeline_mode<synchronous>, transform_indices = @transform_17, window_bounds = array<i64: 64, 64>}, {pipeline_mode = #tpu.pipeline_mode<synchronous>, transform_indices = @transform_18, window_bounds = array<i64: 1, 64>}, {pipeline_mode = #tpu.pipeline_mode<synchronous>, transform_indices = @transform_19, window_bounds = array<i64: 64, 1>}, {pipeline_mode = #tpu.pipeline_mode<synchronous>, transform_indices = @transform_20, window_bounds = array<i64: 1, 1>}, {pipeline_mode = #tpu.pipeline_mode<synchronous>, transform_indices = @transform_21, window_bounds = array<i64: 2, 1>}]} {
    %c0 = arith.constant 0 : index
    %c0_0 = arith.constant 0 : index
    %0 = vector.load %arg1[%c0, %c0_0] : memref<2x64xbf16, #tpu.memory_space<vmem>>, vector<2x64xbf16>
    %1 = arith.extf %0 : vector<2x64xbf16> to vector<2x64xf32>
    %c0_1 = arith.constant 0 : index
    %c0_2 = arith.constant 0 : index
    %2 = vector.load %arg4[%c0_1, %c0_2] : memref<64x64xf32, #tpu.memory_space<vmem>>, vector<64x64xf32>
    %cst = arith.constant dense<0.000000e+00> : vector<2x64xf32>
    %3 = tpu.matmul %1, %2, %cst {dimension_numbers = #tpu.dot_dimension_numbers<[1], [0], [0], [1], [0, 0, 1, 1], [], []>} : vector<2x64xf32>, vector<64x64xf32>, vector<2x64xf32> -> vector<2x64xf32>
    %c0_3 = arith.constant 0 : index
    %c0_4 = arith.constant 0 : index
    %4 = vector.load %arg5[%c0_3, %c0_4] : memref<1x64xf32, #tpu.memory_space<vmem>>, vector<1x64xf32>
    %5 = vector.broadcast %4 : vector<1x64xf32> to vector<2x64xf32>
    %6 = arith.addf %3, %5 : vector<2x64xf32>
    %cst_5 = arith.constant 0.000000e+00 : f32
    %7 = vector.broadcast %cst_5 : f32 to vector<2x64xf32>
    %8 = arith.maximumf %6, %7 : vector<2x64xf32>
    %c0_6 = arith.constant 0 : index
    %c0_7 = arith.constant 0 : index
    %9 = vector.load %arg3[%c0_6, %c0_7] : memref<2x64xbf16, #tpu.memory_space<vmem>>, vector<2x64xbf16>
    %10 = arith.extf %9 : vector<2x64xbf16> to vector<2x64xf32>
    %c0_8 = arith.constant 0 : index
    %c0_9 = arith.constant 0 : index
    %11 = vector.load %arg6[%c0_8, %c0_9] : memref<64x64xf32, #tpu.memory_space<vmem>>, vector<64x64xf32>
    %cst_10 = arith.constant dense<0.000000e+00> : vector<2x64xf32>
    %12 = tpu.matmul %10, %11, %cst_10 {dimension_numbers = #tpu.dot_dimension_numbers<[1], [0], [0], [1], [0, 0, 1, 1], [], []>} : vector<2x64xf32>, vector<64x64xf32>, vector<2x64xf32> -> vector<2x64xf32>
    %c0_11 = arith.constant 0 : index
    %c0_12 = arith.constant 0 : index
    %13 = vector.load %arg7[%c0_11, %c0_12] : memref<1x64xf32, #tpu.memory_space<vmem>>, vector<1x64xf32>
    %14 = vector.broadcast %13 : vector<1x64xf32> to vector<2x64xf32>
    %15 = arith.addf %12, %14 : vector<2x64xf32>
    %cst_13 = arith.constant 0.000000e+00 : f32
    %16 = vector.broadcast %cst_13 : f32 to vector<2x64xf32>
    %17 = arith.maximumf %15, %16 : vector<2x64xf32>
    %c0_14 = arith.constant 0 : index
    %c0_15 = arith.constant 0 : index
    %18 = vector.load %arg2[%c0_14, %c0_15] : memref<2x8xf32, #tpu.memory_space<vmem>>, vector<2x8xf32>
    %c0_16 = arith.constant 0 : index
    %c0_17 = arith.constant 0 : index
    %19 = vector.load %arg8[%c0_16, %c0_17] : memref<8x64xf32, #tpu.memory_space<vmem>>, vector<8x64xf32>
    %cst_18 = arith.constant dense<0.000000e+00> : vector<2x64xf32>
    %20 = tpu.matmul %18, %19, %cst_18 {dimension_numbers = #tpu.dot_dimension_numbers<[1], [0], [0], [1], [0, 0, 1, 1], [], []>} : vector<2x8xf32>, vector<8x64xf32>, vector<2x64xf32> -> vector<2x64xf32>
    %c0_19 = arith.constant 0 : index
    %c0_20 = arith.constant 0 : index
    %21 = vector.load %arg9[%c0_19, %c0_20] : memref<1x64xf32, #tpu.memory_space<vmem>>, vector<1x64xf32>
    %22 = vector.broadcast %21 : vector<1x64xf32> to vector<2x64xf32>
    %23 = arith.addf %20, %22 : vector<2x64xf32>
    %cst_21 = arith.constant 0.000000e+00 : f32
    %24 = vector.broadcast %cst_21 : f32 to vector<2x64xf32>
    %25 = arith.maximumf %23, %24 : vector<2x64xf32>
    %c0_22 = arith.constant 0 : index
    %c0_23 = arith.constant 0 : index
    %26 = vector.load %arg10[%c0_22, %c0_23] : memref<64x64xf32, #tpu.memory_space<vmem>>, vector<64x64xf32>
    %cst_24 = arith.constant dense<0.000000e+00> : vector<2x64xf32>
    %27 = tpu.matmul %25, %26, %cst_24 {dimension_numbers = #tpu.dot_dimension_numbers<[1], [0], [0], [1], [0, 0, 1, 1], [], []>} : vector<2x64xf32>, vector<64x64xf32>, vector<2x64xf32> -> vector<2x64xf32>
    %c0_25 = arith.constant 0 : index
    %c0_26 = arith.constant 0 : index
    %28 = vector.load %arg11[%c0_25, %c0_26] : memref<1x64xf32, #tpu.memory_space<vmem>>, vector<1x64xf32>
    %29 = vector.broadcast %28 : vector<1x64xf32> to vector<2x64xf32>
    %30 = arith.addf %27, %29 : vector<2x64xf32>
    %cst_27 = arith.constant 0.000000e+00 : f32
    %31 = vector.broadcast %cst_27 : f32 to vector<2x64xf32>
    %32 = arith.maximumf %30, %31 : vector<2x64xf32>
    %c0_28 = arith.constant 0 : index
    %c0_29 = arith.constant 0 : index
    %33 = vector.load %arg12[%c0_28, %c0_29] : memref<64x64xf32, #tpu.memory_space<vmem>>, vector<64x64xf32>
    %cst_30 = arith.constant dense<0.000000e+00> : vector<2x64xf32>
    %34 = tpu.matmul %32, %33, %cst_30 {dimension_numbers = #tpu.dot_dimension_numbers<[1], [0], [0], [1], [0, 0, 1, 1], [], []>} : vector<2x64xf32>, vector<64x64xf32>, vector<2x64xf32> -> vector<2x64xf32>
    %c0_31 = arith.constant 0 : index
    %c0_32 = arith.constant 0 : index
    %35 = vector.load %arg13[%c0_31, %c0_32] : memref<1x64xf32, #tpu.memory_space<vmem>>, vector<1x64xf32>
    %36 = vector.broadcast %35 : vector<1x64xf32> to vector<2x64xf32>
    %37 = arith.addf %34, %36 : vector<2x64xf32>
    %c0_33 = arith.constant 0 : index
    %c0_34 = arith.constant 0 : index
    %38 = vector.load %arg14[%c0_33, %c0_34] : memref<64x64xf32, #tpu.memory_space<vmem>>, vector<64x64xf32>
    %cst_35 = arith.constant dense<0.000000e+00> : vector<2x64xf32>
    %39 = tpu.matmul %8, %38, %cst_35 {dimension_numbers = #tpu.dot_dimension_numbers<[1], [0], [0], [1], [0, 0, 1, 1], [], []>} : vector<2x64xf32>, vector<64x64xf32>, vector<2x64xf32> -> vector<2x64xf32>
    %c0_36 = arith.constant 0 : index
    %c0_37 = arith.constant 0 : index
    %40 = vector.load %arg15[%c0_36, %c0_37] : memref<64x64xf32, #tpu.memory_space<vmem>>, vector<64x64xf32>
    %cst_38 = arith.constant dense<0.000000e+00> : vector<2x64xf32>
    %41 = tpu.matmul %37, %40, %cst_38 {dimension_numbers = #tpu.dot_dimension_numbers<[1], [0], [0], [1], [0, 0, 1, 1], [], []>} : vector<2x64xf32>, vector<64x64xf32>, vector<2x64xf32> -> vector<2x64xf32>
    %42 = arith.addf %39, %41 : vector<2x64xf32>
    %c0_39 = arith.constant 0 : index
    %c0_40 = arith.constant 0 : index
    %43 = vector.load %arg16[%c0_39, %c0_40] : memref<64x64xf32, #tpu.memory_space<vmem>>, vector<64x64xf32>
    %cst_41 = arith.constant dense<0.000000e+00> : vector<2x64xf32>
    %44 = tpu.matmul %17, %43, %cst_41 {dimension_numbers = #tpu.dot_dimension_numbers<[1], [0], [0], [1], [0, 0, 1, 1], [], []>} : vector<2x64xf32>, vector<64x64xf32>, vector<2x64xf32> -> vector<2x64xf32>
    %45 = arith.addf %42, %44 : vector<2x64xf32>
    %c0_42 = arith.constant 0 : index
    %c0_43 = arith.constant 0 : index
    %46 = vector.load %arg17[%c0_42, %c0_43] : memref<1x64xf32, #tpu.memory_space<vmem>>, vector<1x64xf32>
    %47 = vector.broadcast %46 : vector<1x64xf32> to vector<2x64xf32>
    %48 = arith.addf %45, %47 : vector<2x64xf32>
    %cst_44 = arith.constant 0.000000e+00 : f32
    %49 = vector.broadcast %cst_44 : f32 to vector<2x64xf32>
    %50 = arith.maximumf %48, %49 : vector<2x64xf32>
    %c0_45 = arith.constant 0 : index
    %c0_46 = arith.constant 0 : index
    %51 = vector.load %arg18[%c0_45, %c0_46] : memref<64x64xf32, #tpu.memory_space<vmem>>, vector<64x64xf32>
    %cst_47 = arith.constant dense<0.000000e+00> : vector<2x64xf32>
    %52 = tpu.matmul %50, %51, %cst_47 {dimension_numbers = #tpu.dot_dimension_numbers<[1], [0], [0], [1], [0, 0, 1, 1], [], []>} : vector<2x64xf32>, vector<64x64xf32>, vector<2x64xf32> -> vector<2x64xf32>
    %c0_48 = arith.constant 0 : index
    %c0_49 = arith.constant 0 : index
    %53 = vector.load %arg19[%c0_48, %c0_49] : memref<1x64xf32, #tpu.memory_space<vmem>>, vector<1x64xf32>
    %54 = vector.broadcast %53 : vector<1x64xf32> to vector<2x64xf32>
    %55 = arith.addf %52, %54 : vector<2x64xf32>
    %cst_50 = arith.constant 0.000000e+00 : f32
    %56 = vector.broadcast %cst_50 : f32 to vector<2x64xf32>
    %57 = arith.maximumf %55, %56 : vector<2x64xf32>
    %c0_51 = arith.constant 0 : index
    %c0_52 = arith.constant 0 : index
    %58 = vector.load %arg20[%c0_51, %c0_52] : memref<64x1xf32, #tpu.memory_space<vmem>>, vector<64x1xf32>
    %cst_53 = arith.constant dense<0.000000e+00> : vector<2x1xf32>
    %59 = tpu.matmul %57, %58, %cst_53 {dimension_numbers = #tpu.dot_dimension_numbers<[1], [0], [0], [1], [0, 0, 1, 1], [], []>} : vector<2x64xf32>, vector<64x1xf32>, vector<2x1xf32> -> vector<2x1xf32>
    %c0_54 = arith.constant 0 : index
    %c0_55 = arith.constant 0 : index
    %60 = vector.load %arg21[%c0_54, %c0_55] : memref<1x1xf32, #tpu.memory_space<vmem>>, vector<1x1xf32>
    %61 = vector.broadcast %60 : vector<1x1xf32> to vector<2x1xf32>
    %62 = arith.addf %59, %61 : vector<2x1xf32>
    %cst_56 = arith.constant 0.000000e+00 : f32
    %63 = vector.broadcast %cst_56 : f32 to vector<2x1xf32>
    %64 = arith.maximumf %62, %63 : vector<2x1xf32>
    %c0_57 = arith.constant 0 : index
    %c0_58 = arith.constant 0 : index
    %65 = vector.load %arg22[%c0_57, %c0_58] : memref<2x1xf32, #tpu.memory_space<vmem>>, vector<2x1xf32>
    tpu.vector_store %arg22[%c0_57, %c0_58], %64 {strides = array<i32>} : memref<2x1xf32, #tpu.memory_space<vmem>>, vector<2x1xf32>,
    return
  }
  func.func @transform_0(%arg0: i32) -> (i32, i32) {
    %c0_i32 = arith.constant 0 : i32
    %c0_i32_0 = arith.constant 0 : i32
    %c0_i32_1 = arith.constant 0 : i32
    return %c0_i32, %c0_i32_0 : i32, i32
  }
  func.func @transform_1(%arg0: i32) -> (i32, i32) {
    %c0_i32 = arith.constant 0 : i32
    %c0_i32_0 = arith.constant 0 : i32
    %c0_i32_1 = arith.constant 0 : i32
    return %c0_i32, %c0_i32_0 : i32, i32
  }
  func.func @transform_2(%arg0: i32) -> (i32, i32) {
    %c0_i32 = arith.constant 0 : i32
    %c0_i32_0 = arith.constant 0 : i32
    %c0_i32_1 = arith.constant 0 : i32
    return %c0_i32, %c0_i32_0 : i32, i32
  }
  func.func @transform_3(%arg0: i32) -> (i32, i32) {
    %c0_i32 = arith.constant 0 : i32
    %c0_i32_0 = arith.constant 0 : i32
    %c0_i32_1 = arith.constant 0 : i32
    return %c0_i32, %c0_i32_0 : i32, i32
  }
  func.func @transform_4(%arg0: i32) -> (i32, i32) {
    %c0_i32 = arith.constant 0 : i32
    %c0_i32_0 = arith.constant 0 : i32
    %c0_i32_1 = arith.constant 0 : i32
    return %c0_i32, %c0_i32_0 : i32, i32
  }
  func.func @transform_5(%arg0: i32) -> (i32, i32) {
    %c0_i32 = arith.constant 0 : i32
    %c0_i32_0 = arith.constant 0 : i32
    %c0_i32_1 = arith.constant 0 : i32
    return %c0_i32, %c0_i32_0 : i32, i32
  }
  func.func @transform_6(%arg0: i32) -> (i32, i32) {
    %c0_i32 = arith.constant 0 : i32
    %c0_i32_0 = arith.constant 0 : i32
    %c0_i32_1 = arith.constant 0 : i32
    return %c0_i32, %c0_i32_0 : i32, i32
  }
  func.func @transform_7(%arg0: i32) -> (i32, i32) {
    %c0_i32 = arith.constant 0 : i32
    %c0_i32_0 = arith.constant 0 : i32
    %c0_i32_1 = arith.constant 0 : i32
    return %c0_i32, %c0_i32_0 : i32, i32
  }
  func.func @transform_8(%arg0: i32) -> (i32, i32) {
    %c0_i32 = arith.constant 0 : i32
    %c0_i32_0 = arith.constant 0 : i32
    %c0_i32_1 = arith.constant 0 : i32
    return %c0_i32, %c0_i32_0 : i32, i32
  }
  func.func @transform_9(%arg0: i32) -> (i32, i32) {
    %c0_i32 = arith.constant 0 : i32
    %c0_i32_0 = arith.constant 0 : i32
    %c0_i32_1 = arith.constant 0 : i32
    return %c0_i32, %c0_i32_0 : i32, i32
  }
  func.func @transform_10(%arg0: i32) -> (i32, i32) {
    %c0_i32 = arith.constant 0 : i32
    %c0_i32_0 = arith.constant 0 : i32
    %c0_i32_1 = arith.constant 0 : i32
    return %c0_i32, %c0_i32_0 : i32, i32
  }
  func.func @transform_11(%arg0: i32) -> (i32, i32) {
    %c0_i32 = arith.constant 0 : i32
    %c0_i32_0 = arith.constant 0 : i32
    %c0_i32_1 = arith.constant 0 : i32
    return %c0_i32, %c0_i32_0 : i32, i32
  }
  func.func @transform_12(%arg0: i32) -> (i32, i32) {
    %c0_i32 = arith.constant 0 : i32
    %c0_i32_0 = arith.constant 0 : i32
    %c0_i32_1 = arith.constant 0 : i32
    return %c0_i32, %c0_i32_0 : i32, i32
  }
  func.func @transform_13(%arg0: i32) -> (i32, i32) {
    %c0_i32 = arith.constant 0 : i32
    %c0_i32_0 = arith.constant 0 : i32
    %c0_i32_1 = arith.constant 0 : i32
    return %c0_i32, %c0_i32_0 : i32, i32
  }
  func.func @transform_14(%arg0: i32) -> (i32, i32) {
    %c0_i32 = arith.constant 0 : i32
    %c0_i32_0 = arith.constant 0 : i32
    %c0_i32_1 = arith.constant 0 : i32
    return %c0_i32, %c0_i32_0 : i32, i32
  }
  func.func @transform_15(%arg0: i32) -> (i32, i32) {
    %c0_i32 = arith.constant 0 : i32
    %c0_i32_0 = arith.constant 0 : i32
    %c0_i32_1 = arith.constant 0 : i32
    return %c0_i32, %c0_i32_0 : i32, i32
  }
  func.func @transform_16(%arg0: i32) -> (i32, i32) {
    %c0_i32 = arith.constant 0 : i32
    %c0_i32_0 = arith.constant 0 : i32
    %c0_i32_1 = arith.constant 0 : i32
    return %c0_i32, %c0_i32_0 : i32, i32
  }
  func.func @transform_17(%arg0: i32) -> (i32, i32) {
    %c0_i32 = arith.constant 0 : i32
    %c0_i32_0 = arith.constant 0 : i32
    %c0_i32_1 = arith.constant 0 : i32
    return %c0_i32, %c0_i32_0 : i32, i32
  }
  func.func @transform_18(%arg0: i32) -> (i32, i32) {
    %c0_i32 = arith.constant 0 : i32
    %c0_i32_0 = arith.constant 0 : i32
    %c0_i32_1 = arith.constant 0 : i32
    return %c0_i32, %c0_i32_0 : i32, i32
  }
  func.func @transform_19(%arg0: i32) -> (i32, i32) {
    %c0_i32 = arith.constant 0 : i32
    %c0_i32_0 = arith.constant 0 : i32
    %c0_i32_1 = arith.constant 0 : i32
    return %c0_i32, %c0_i32_0 : i32, i32
  }
  func.func @transform_20(%arg0: i32) -> (i32, i32) {
    %c0_i32 = arith.constant 0 : i32
    %c0_i32_0 = arith.constant 0 : i32
    %c0_i32_1 = arith.constant 0 : i32
    return %c0_i32, %c0_i32_0 : i32, i32
  }
  func.func @transform_21(%arg0: i32) -> (i32, i32) {
    %c0_i32 = arith.constant 0 : i32
    %c0_i32_0 = arith.constant 0 : i32
    %c0_i32_1 = arith.constant 0 : i32
    return %c0_i32, %c0_i32_0 : i32, i32
  }
}

</mosaic_0001>

<llo_original>
// kernel: dqn_forward.4
$region0: #{dqn_forward.4}
  #allocation0 [shape = 'u32[]', space=smem, size = 0x4, offset = 0x4, fixed_abs, tag = 'smem constant byte address 0x4 - core index']
  #allocation1 [shape = 'u32[144,128]{1,0:T(1,128)}', space=vmem, size = 0x12000, scoped, tag = 'internal scratch']
  %s0 = inlined_call_operand.vmem [shape: bf16[2,128,36], index: 0, kind: input, shape index: {}]
  %s1 = inlined_call_operand.vmem [shape: bf16[2,36,128], index: 1, kind: input, shape index: {}]
  %s2 = inlined_call_operand.vmem [shape: f32[2,1,128], index: 2, kind: input, shape index: {}]
  %s3 = inlined_call_operand.vmem [shape: f32[2,1,128], index: 3, kind: input, shape index: {}]
  %s4 = inlined_call_operand.vmem [shape: bf16[2,128,128], index: 4, kind: output, shape index: {}]
  %s5 = sld [smem:[#allocation0]]
  $region49: #{dqn_forward.4} parent=0
    _
  %s7 = ssub.s32 1, %s5
  %s8 = scalar_select 0, %s7, %s5
  loop: start=0, step=1, limit=4
  $region2: #{dqn_forward.4} parent=0 // loop_pre_header
    _
  $region3: #{dqn_forward.4} parent=0 // loop_header
    %s10 = sphi 0, %s14
    %p11 = scmp.ge.s32.totalorder %s10, 4
    %s20 = sphi 0, %s22
    %s23 = sphi 0, %s20
    %s24 = sphi 0, %s23
    %s40 = sphi 0, %s24
    %s46 = sphi 0, %s48
    %s49 = sphi 0, %s46
    %s50 = sphi 0, %s49
    %s66 = sphi 0, %s50
    %s72 = sphi 0, %s74
    %s75 = sphi 0, %s72
    %s76 = sphi 0, %s75
    %s92 = sphi 0, %s76
    %s98 = sphi 0, %s100
    %s101 = sphi 0, %s98
    %s102 = sphi 0, %s101
    %s118 = sphi 0, %s102
    %s124 = sphi 0, %s126
    %s127 = sphi 0, %s124
    %s128 = sphi 0, %s127
    %s144 = sphi 0, %s128
  $region4: #{dqn_forward.4} parent=0 // loop_header_branch
    %13 = sbr.rel (%p11) target = $region8
  $region5: #{dqn_forward.4} parent=0 // loop_body
    %s15 = ssub.s32 %s10, 1
    %s16 = ssub.s32 %s10, 2
    %s17 = sadd.s32 %s10, 1
    %s18 = ssub.s32 %s10, %s17
    %p19 = scmp.eq.s32.totalorder %s18, 0
    %s21 = sadd.s32 %s20, 1
    %s22 = scalar_select %p19, %s20, %s21
    %p25 = pneg %p19
    %p26 = scmp.eq.s32.totalorder %s10, 1
    %p27 = por %p25, %p26
    %p28 = scmp.ne.s32.totalorder %s20, %s23
    %p29 = scmp.eq.s32.totalorder %s10, 0
    %p30 = por %p28, %p29
    %p31 = scmp.ne.s32.totalorder %s20, %s23
    %p32 = scmp.eq.s32.totalorder %s15, 1
    %p33 = por %p31, %p32
    %p34 = scmp.ne.s32.totalorder %s23, %s24
    %p35 = scmp.eq.s32.totalorder %s15, 0
    %p36 = por %p34, %p35
    %p37 = scmp.ne.s32.totalorder %s23, %s24
    %p38 = scmp.eq.s32.totalorder %s16, 1
    %p39 = por %p37, %p38
    %p41 = scmp.ne.s32.totalorder %s24, %s40
    %p42 = scmp.eq.s32.totalorder %s16, 0
    %p43 = por %p41, %p42
    %s44 = ssub.s32 %s10, %s17
    %p45 = scmp.eq.s32.totalorder %s44, 0
    %s47 = sadd.s32 %s46, 1
    %s48 = scalar_select %p45, %s46, %s47
    %p51 = pneg %p45
    %p52 = scmp.eq.s32.totalorder %s10, 1
    %p53 = por %p51, %p52
    %p54 = scmp.ne.s32.totalorder %s46, %s49
    %p55 = scmp.eq.s32.totalorder %s10, 0
    %p56 = por %p54, %p55
    %p57 = scmp.ne.s32.totalorder %s46, %s49
    %p58 = scmp.eq.s32.totalorder %s15, 1
    %p59 = por %p57, %p58
    %p60 = scmp.ne.s32.totalorder %s49, %s50
    %p61 = scmp.eq.s32.totalorder %s15, 0
    %p62 = por %p60, %p61
    %p63 = scmp.ne.s32.totalorder %s49, %s50
    %p64 = scmp.eq.s32.totalorder %s16, 1
    %p65 = por %p63, %p64
    %p67 = scmp.ne.s32.totalorder %s50, %s66
    %p68 = scmp.eq.s32.totalorder %s16, 0
    %p69 = por %p67, %p68
    %s70 = ssub.s32 %s10, %s17
    %p71 = scmp.eq.s32.totalorder %s70, 0
    %s73 = sadd.s32 %s72, 1
    %s74 = scalar_select %p71, %s72, %s73
    %p77 = pneg %p71
    %p78 = scmp.eq.s32.totalorder %s10, 1
    %p79 = por %p77, %p78
    %p80 = scmp.ne.s32.totalorder %s72, %s75
    %p81 = scmp.eq.s32.totalorder %s10, 0
    %p82 = por %p80, %p81
    %p83 = scmp.ne.s32.totalorder %s72, %s75
    %p84 = scmp.eq.s32.totalorder %s15, 1
    %p85 = por %p83, %p84
    %p86 = scmp.ne.s32.totalorder %s75, %s76
    %p87 = scmp.eq.s32.totalorder %s15, 0
    %p88 = por %p86, %p87
    %p89 = scmp.ne.s32.totalorder %s75, %s76
    %p90 = scmp.eq.s32.totalorder %s16, 1
    %p91 = por %p89, %p90
    %p93 = scmp.ne.s32.totalorder %s76, %s92
    %p94 = scmp.eq.s32.totalorder %s16, 0
    %p95 = por %p93, %p94
    %s96 = ssub.s32 %s10, %s17
    %p97 = scmp.eq.s32.totalorder %s96, 0
    %s99 = sadd.s32 %s98, 1
    %s100 = scalar_select %p97, %s98, %s99
    %p103 = pneg %p97
    %p104 = scmp.eq.s32.totalorder %s10, 1
    %p105 = por %p103, %p104
    %p106 = scmp.ne.s32.totalorder %s98, %s101
    %p107 = scmp.eq.s32.totalorder %s10, 0
    %p108 = por %p106, %p107
    %p109 = scmp.ne.s32.totalorder %s98, %s101
    %p110 = scmp.eq.s32.totalorder %s15, 1
    %p111 = por %p109, %p110
    %p112 = scmp.ne.s32.totalorder %s101, %s102
    %p113 = scmp.eq.s32.totalorder %s15, 0
    %p114 = por %p112, %p113
    %p115 = scmp.ne.s32.totalorder %s101, %s102
    %p116 = scmp.eq.s32.totalorder %s16, 1
    %p117 = por %p115, %p116
    %p119 = scmp.ne.s32.totalorder %s102, %s118
    %p120 = scmp.eq.s32.totalorder %s16, 0
    %p121 = por %p119, %p120
    %s122 = ssub.s32 %s10, %s17
    %p123 = scmp.eq.s32.totalorder %s122, 0
    %s125 = sadd.s32 %s124, 1
    %s126 = scalar_select %p123, %s124, %s125
    %p129 = pneg %p123
    %p130 = scmp.eq.s32.totalorder %s10, 1
    %p131 = por %p129, %p130
    %p132 = scmp.ne.s32.totalorder %s124, %s127
    %p133 = scmp.eq.s32.totalorder %s10, 0
    %p134 = por %p132, %p133
    %p135 = scmp.ne.s32.totalorder %s124, %s127
    %p136 = scmp.eq.s32.totalorder %s15, 1
    %p137 = por %p135, %p136
    %p138 = scmp.ne.s32.totalorder %s127, %s128
    %p139 = scmp.eq.s32.totalorder %s15, 0
    %p140 = por %p138, %p139
    %p141 = scmp.ne.s32.totalorder %s127, %s128
    %p142 = scmp.eq.s32.totalorder %s16, 1
    %p143 = por %p141, %p142
    %p145 = scmp.ne.s32.totalorder %s128, %s144
    %p146 = scmp.eq.s32.totalorder %s16, 0
    %p147 = por %p145, %p146
    %p148 = scmp.le.s32.totalorder 1, %s10
    %p149 = scmp.lt.s32.totalorder %s10, 3
    %p150 = pnand %p148, %p149
    %p151 = pneg %p150
    // Predicated region
    $region9: #{dqn_forward.4} parent=5 // pred_check
      _
    $region10: #{dqn_forward.4} parent=5 // pred_check_branch
      %153 = sbr.rel (%p150) target = $region12
    $region11: #{dqn_forward.4} parent=5 // pred_region
      %s154 = ssub.s32 %s10, 1
    $region12: #{dqn_forward.4} parent=5 // pred_fallthru
      _
    %p155 = scmp.lt.s32.totalorder %s10, 2
    // Predicated region
    $region13: #{dqn_forward.4} parent=5 // pred_check
      %p156 = pneg %p155
    $region14: #{dqn_forward.4} parent=5 // pred_check_branch
      %158 = sbr.rel (%p156) target = $region16
    $region15: #{dqn_forward.4} parent=5 // pred_region
      // Predicated region
      $region17: #{dqn_forward.4} parent=15 // pred_check
        %p159 = pneg %p30
      $region18: #{dqn_forward.4} parent=15 // pred_check_branch
        %161 = sbr.rel (%p159) target = $region20
      $region19: #{dqn_forward.4} parent=15 // pred_region
        %p162 = scmp.lt.s32.totalorder %s10, 1
        %s163 = scalar_select %p162, %s10, 1
        %s164 = smul.addr %s163, 16
        %s165 = smul.addr %s164, 4
        %s166 = scalar_lea.vmem %s0, %s165
      $region20: #{dqn_forward.4} parent=15 // pred_fallthru
        _
      // Predicated region
      $region21: #{dqn_forward.4} parent=15 // pred_check
        %p167 = pneg %p56
      $region22: #{dqn_forward.4} parent=15 // pred_check_branch
        %169 = sbr.rel (%p167) target = $region24
      $region23: #{dqn_forward.4} parent=15 // pred_region
        %p170 = scmp.lt.s32.totalorder %s10, 1
        %s171 = scalar_select %p170, %s10, 1
        %s172 = smul.addr %s171, 5
        %s173 = smul.addr %s172, 4
        %s174 = scalar_lea.vmem %s1, %s173
      $region24: #{dqn_forward.4} parent=15 // pred_fallthru
        _
      // Predicated region
      $region25: #{dqn_forward.4} parent=15 // pred_check
        %p175 = pneg %p82
      $region26: #{dqn_forward.4} parent=15 // pred_check_branch
        %177 = sbr.rel (%p175) target = $region28
      $region27: #{dqn_forward.4} parent=15 // pred_region
        %p178 = scmp.lt.s32.totalorder %s10, 1
        %s179 = scalar_select %p178, %s10, 1
        %s180 = scalar_lea.vmem %s2, %s179
      $region28: #{dqn_forward.4} parent=15 // pred_fallthru
        _
      // Predicated region
      $region29: #{dqn_forward.4} parent=15 // pred_check
        %p181 = pneg %p108
      $region30: #{dqn_forward.4} parent=15 // pred_check_branch
        %183 = sbr.rel (%p181) target = $region32
      $region31: #{dqn_forward.4} parent=15 // pred_region
        %p184 = scmp.lt.s32.totalorder %s10, 1
        %s185 = scalar_select %p184, %s10, 1
        %s186 = scalar_lea.vmem %s3, %s185
      $region32: #{dqn_forward.4} parent=15 // pred_fallthru
        _
    $region16: #{dqn_forward.4} parent=5 // pred_fallthru
      _
    %p187 = scmp.le.s32.totalorder 1, %s10
    %p188 = scmp.lt.s32.totalorder %s10, 3
    %p189 = pnand %p187, %p188
    %p190 = pneg %p189
    // Predicated region
    $region33: #{dqn_forward.4} parent=5 // pred_check
      _
    $region34: #{dqn_forward.4} parent=5 // pred_check_branch
      %192 = sbr.rel (%p189) target = $region36
    $region35: #{dqn_forward.4} parent=5 // pred_region
      %s193 = ssub.s32 %s10, 1
      %p194 = scmp.lt.s32.totalorder %s15, 1
      %s195 = scalar_select %p194, %s15, 1
      %s196 = smul.addr %s195, 16
      %s197 = smul.addr %s196, 4
      %s198 = scalar_lea.vmem %s0, %s197
      %p199 = pneg %p36
      %p200 = pneg %p33
      %p201 = scmp.lt.s32.totalorder %s15, 1
      %s202 = scalar_select %p201, %s15, 1
      %s203 = smul.addr %s202, 5
      %s204 = smul.addr %s203, 4
      %s205 = scalar_lea.vmem %s1, %s204
      %p206 = pneg %p62
      %p207 = pneg %p59
      %p208 = scmp.lt.s32.totalorder %s15, 1
      %s209 = scalar_select %p208, %s15, 1
      %s210 = scalar_lea.vmem %s2, %s209
      %p211 = pneg %p88
      %p212 = pneg %p85
      %p213 = scmp.lt.s32.totalorder %s15, 1
      %s214 = scalar_select %p213, %s15, 1
      %s215 = scalar_lea.vmem %s3, %s214
      %p216 = pneg %p114
      %p217 = pneg %p111
      %p218 = pneg %p140
      %p219 = pneg %p137
      %p220 = scmp.lt.s32.totalorder %s15, 1
      %s221 = scalar_select %p220, %s15, 1
      %s222 = smul.addr %s221, 16
      %s223 = smul.addr %s222, 4
      %s224 = scalar_lea.vmem %s4, %s223
      %p225 = scmp.lt.s32.totalorder %s15, 1
      %s226 = scalar_select %p225, %s15, 1
      %s227 = smul.addr %s226, 16
      %s228 = smul.addr %s227, 4
      %s229 = scalar_lea.vmem %s0, %s228
      %p230 = scmp.lt.s32.totalorder %s15, 1
      %s231 = scalar_select %p230, %s15, 1
      %s232 = smul.addr %s231, 5
      %s233 = smul.addr %s232, 4
      %s234 = scalar_lea.vmem %s1, %s233
      %p235 = scmp.lt.s32.totalorder %s15, 1
      %s236 = scalar_select %p235, %s15, 1
      %s237 = scalar_lea.vmem %s2, %s236
      %p238 = scmp.lt.s32.totalorder %s15, 1
      %s239 = scalar_select %p238, %s15, 1
      %s240 = scalar_lea.vmem %s3, %s239
      %p241 = scmp.lt.s32.totalorder %s15, 1
      %s242 = scalar_select %p241, %s15, 1
      %s243 = smul.addr %s242, 16
      %s244 = smul.addr %s243, 4
      %s245 = scalar_lea.vmem %s4, %s244
      %v247 = vld [vmem:[%s229] sm:$0xf]
      %v248 = vld [vmem:[%s229 + $0x4] sm:$0xf]
      %v249 = vld [vmem:[%s229 + $0x8] sm:$0xf]
      %v250 = vld [vmem:[%s229 + $0xc] sm:$0xf]
      %v251 = vld [vmem:[%s229 + $0x10] sm:$0xf]
      %v252 = vld [vmem:[%s229 + $0x14] sm:$0xf]
      %v253 = vld [vmem:[%s229 + $0x18] sm:$0xf]
      %v254 = vld [vmem:[%s229 + $0x1c] sm:$0xf]
      %v255 = vld [vmem:[%s229 + $0x20] sm:$0xf]
      %v256 = vld [vmem:[%s229 + $0x24] sm:$0xf]
      %v257 = vld [vmem:[%s229 + $0x28] sm:$0xf]
      %v258 = vld [vmem:[%s229 + $0x2c] sm:$0xf]
      %v259 = vld [vmem:[%s229 + $0x30] sm:$0xf]
      %v260 = vld [vmem:[%s229 + $0x34] sm:$0xf]
      %v261 = vld [vmem:[%s229 + $0x38] sm:$0xf]
      %v262 = vld [vmem:[%s229 + $0x3c] sm:$0xf]
      %v263 = vld [vmem:[%s234] sm:$0xf]
      %v264 = vld [vmem:[%s234 + $0x4] sm:$0xf]
      %v265 = vld [vmem:[%s234 + $0x8] sm:$0xf]
      %v266 = vld [vmem:[%s234 + $0xc] sm:$0xf]
      %v267 = vld [vmem:[%s234 + $0x10] sm:$0x3]
      %v284 = vunpack.c.l.b16 %v247
      %v285 = vunpack.c.l.b16 %v248
      %v286 = vunpack.c.l.b16 %v249
      %v287 = vunpack.c.l.b16 %v250
      %v288 = vunpack.c.l.b16 %v251
      %v289 = vunpack.c.l.b16 %v252
      %v290 = vunpack.c.l.b16 %v253
      %v291 = vunpack.c.l.b16 %v254
      %v292 = vunpack.c.l.b16 %v255
      %v293 = vunpack.c.l.b16 %v256
      %v294 = vunpack.c.l.b16 %v257
      %v295 = vunpack.c.l.b16 %v258
      %v296 = vunpack.c.l.b16 %v259
      %v297 = vunpack.c.l.b16 %v260
      %v298 = vunpack.c.l.b16 %v261
      %v299 = vunpack.c.l.b16 %v262
      %v300 = vpack.c.b16 %v285, %v284
      %v301 = vpack.c.b16 %v287, %v286
      %v302 = vpack.c.b16 %v289, %v288
      %v303 = vpack.c.b16 %v291, %v290
      %v304 = vpack.c.b16 %v293, %v292
      %v305 = vpack.c.b16 %v295, %v294
      %v306 = vpack.c.b16 %v297, %v296
      %v307 = vpack.c.b16 %v299, %v298
      %v313 = vunpack.c.l.b16 %v263
      %v314 = vunpack.c.l.b16 %v264
      %v315 = vunpack.c.l.b16 %v265
      %v316 = vunpack.c.l.b16 %v266
      %v317 = vunpack.c.l.b16 %v267
      %v318 = vpack.c.b16 %v314, %v313
      %v319 = vpack.c.b16 %v316, %v315
      %v320 = vpack.c.b16 %v317, %v317
      %vm323 = vcmask 293888
      %v325 = vsel %vm323, %v300, 0
      %v328 = vsel %vm323, %v301, 0
      %v331 = vsel %vm323, %v302, 0
      %v334 = vsel %vm323, %v303, 0
      %v337 = vsel %vm323, %v304, 0
      %v340 = vsel %vm323, %v305, 0
      %v343 = vsel %vm323, %v306, 0
      %v346 = vsel %vm323, %v307, 0
      %vm348 = vcmask 1041408
      %v350 = vsel %vm348, %v320, 0
      %352 = vmatprep.subr.bf16.mxu0 0
      %353 = vmatpush1.bf16.msra.mxu0 0
      %354 = vmatprep.subr.bf16.mxu0 0
      %355 = vmatpush1.bf16.msra.mxu0 0
      %356 = vmatprep.subr.bf16.mxu0 0
      %357 = vmatpush1.bf16.msra.mxu0 0
      %358 = vmatprep.subr.bf16.mxu0 0
      %359 = vmatpush1.bf16.msra.mxu0 0
      %360 = vmatprep.subr.bf16.mxu0 0
      %361 = vmatpush1.bf16.msra.mxu0 0
      %362 = vmatprep.subr.bf16.mxu0 0
      %363 = vmatpush1.bf16.msra.mxu0 %v350
      %364 = vmatprep.subr.bf16.mxu0 0
      %365 = vmatpush1.bf16.msra.mxu0 %v319
      %366 = vmatprep.subr.bf16.mxu0 0
      %367 = vmatpush1.bf16.msra.mxu0 %v318
      %368 = vmatprep.subr.bf16.mxu0 0
      %369 = vmatpush2.bf16.msra.mxu0 0
      %370 = vmatprep.subr.bf16.mxu0 0
      %371 = vmatpush2.bf16.msra.mxu0 0
      %372 = vmatprep.subr.bf16.mxu0 0
      %373 = vmatpush2.bf16.msra.mxu0 0
      %374 = vmatprep.subr.bf16.mxu0 0
      %375 = vmatpush2.bf16.msra.mxu0 0
      %376 = vmatprep.subr.bf16.mxu0 0
      %377 = vmatpush2.bf16.msra.mxu0 0
      %378 = vmatprep.subr.bf16.mxu0 0
      %379 = vmatpush2.bf16.msra.mxu0 0
      %380 = vmatprep.subr.bf16.mxu0 0
      %381 = vmatpush2.bf16.msra.mxu0 0
      %382 = vmatprep.subr.bf16.mxu0 0
      %383 = vmatpush2.bf16.msra.mxu0 0
      %384 = vmatprep.mubr.bf16.mxu0 0
      %385 = vmatmul.mubr.bf16.gmra.mxu0 %v325
      %v386 = vpop.f32.mrf.mxu0
      %v387 = vadd.f32 0.0, %v386
      %v388 = vpop.f32.mrf.mxu0
      %v389 = vpop.f32.mrf.mxu0
      %v390 = vadd.f32 0.0, %v389
      %v391 = vpop.f32.mrf.mxu0
      %392 = vmatprep.mubr.bf16.mxu0 0
      %393 = vmatmul.mubr.bf16.gmra.mxu0 %v328
      %v394 = vpop.f32.mrf.mxu0
      %v395 = vadd.f32 0.0, %v394
      %v396 = vpop.f32.mrf.mxu0
      %v397 = vpop.f32.mrf.mxu0
      %v398 = vadd.f32 0.0, %v397
      %v399 = vpop.f32.mrf.mxu0
      %400 = vmatprep.mubr.bf16.mxu0 0
      %401 = vmatmul.mubr.bf16.gmra.mxu0 %v331
      %v402 = vpop.f32.mrf.mxu0
      %v403 = vadd.f32 0.0, %v402
      %v404 = vpop.f32.mrf.mxu0
      %v405 = vpop.f32.mrf.mxu0
      %v406 = vadd.f32 0.0, %v405
      %v407 = vpop.f32.mrf.mxu0
      %408 = vmatprep.mubr.bf16.mxu0 0
      %409 = vmatmul.mubr.bf16.gmra.mxu0 %v334
      %v410 = vpop.f32.mrf.mxu0
      %v411 = vadd.f32 0.0, %v410
      %v412 = vpop.f32.mrf.mxu0
      %v413 = vpop.f32.mrf.mxu0
      %v414 = vadd.f32 0.0, %v413
      %v415 = vpop.f32.mrf.mxu0
      %416 = vmatprep.mubr.bf16.mxu0 0
      %417 = vmatmul.mubr.bf16.gmra.mxu0 %v337
      %v418 = vpop.f32.mrf.mxu0
      %v419 = vadd.f32 0.0, %v418
      %v420 = vpop.f32.mrf.mxu0
      %v421 = vpop.f32.mrf.mxu0
      %v422 = vadd.f32 0.0, %v421
      %v423 = vpop.f32.mrf.mxu0
      %424 = vmatprep.mubr.bf16.mxu0 0
      %425 = vmatmul.mubr.bf16.gmra.mxu0 %v340
      %v426 = vpop.f32.mrf.mxu0
      %v427 = vadd.f32 0.0, %v426
      %v428 = vpop.f32.mrf.mxu0
      %v429 = vpop.f32.mrf.mxu0
      %v430 = vadd.f32 0.0, %v429
      %v431 = vpop.f32.mrf.mxu0
      %432 = vmatprep.mubr.bf16.mxu0 0
      %433 = vmatmul.mubr.bf16.gmra.mxu0 %v343
      %v434 = vpop.f32.mrf.mxu0
      %v435 = vadd.f32 0.0, %v434
      %v436 = vpop.f32.mrf.mxu0
      %v437 = vpop.f32.mrf.mxu0
      %v438 = vadd.f32 0.0, %v437
      %v439 = vpop.f32.mrf.mxu0
      %440 = vmatprep.mubr.bf16.mxu0 0
      %441 = vmatmul.mubr.bf16.gmra.mxu0 %v346
      %v442 = vpop.f32.mrf.mxu0
      %v443 = vadd.f32 0.0, %v442
      %v444 = vpop.f32.mrf.mxu0
      %v445 = vpop.f32.mrf.mxu0
      %v446 = vadd.f32 0.0, %v445
      %v447 = vpop.f32.mrf.mxu0
      %448 = vdwg.mxu0
      %v449 = vadd.f32 %v387, %v390
      %v450 = vadd.f32 %v449, %v395
      %v451 = vadd.f32 %v450, %v398
      %v452 = vadd.f32 %v451, %v403
      %v453 = vadd.f32 %v452, %v406
      %v454 = vadd.f32 %v453, %v411
      %v455 = vadd.f32 %v454, %v414
      %v456 = vadd.f32 %v455, %v419
      %v457 = vadd.f32 %v456, %v422
      %v458 = vadd.f32 %v457, %v427
      %v459 = vadd.f32 %v458, %v430
      %v460 = vadd.f32 %v459, %v435
      %v461 = vadd.f32 %v460, %v438
      %v462 = vadd.f32 %v461, %v443
      %v463 = vadd.f32 %v462, %v446
      %v464 = vrot.slane %v463, 4
      %v465 = vadd.f32 %v463, %v464
      %v466 = vrot.slane %v465, 2
      %v467 = vadd.f32 %v465, %v466
      %v468 = vrot.slane %v467, 1
      %v469 = vadd.f32 %v467, %v468
      %v470 = vrcp.pop 128.0
      %v471 = vmul.f32 %v469, %v470
      %v472 = vsub.f32 %v387, %v471
      %v473 = vsub.f32 %v390, %v471
      %v474 = vsub.f32 %v395, %v471
      %v475 = vsub.f32 %v398, %v471
      %v476 = vsub.f32 %v403, %v471
      %v477 = vsub.f32 %v406, %v471
      %v478 = vsub.f32 %v411, %v471
      %v479 = vsub.f32 %v414, %v471
      %v480 = vsub.f32 %v419, %v471
      %v481 = vsub.f32 %v422, %v471
      %v482 = vsub.f32 %v427, %v471
      %v483 = vsub.f32 %v430, %v471
      %v484 = vsub.f32 %v435, %v471
      %v485 = vsub.f32 %v438, %v471
      %v486 = vsub.f32 %v443, %v471
      %v487 = vsub.f32 %v446, %v471
      %v488 = vmul.f32 %v472, %v472
      %v489 = vmul.f32 %v473, %v473
      %v490 = vmul.f32 %v474, %v474
      %v491 = vmul.f32 %v475, %v475
      %v492 = vmul.f32 %v476, %v476
      %v493 = vmul.f32 %v477, %v477
      %v494 = vmul.f32 %v478, %v478
      %v495 = vmul.f32 %v479, %v479
      %v496 = vmul.f32 %v480, %v480
      %v497 = vmul.f32 %v481, %v481
      %v498 = vmul.f32 %v482, %v482
      %v499 = vmul.f32 %v483, %v483
      %v500 = vmul.f32 %v484, %v484
      %v501 = vmul.f32 %v485, %v485
      %v502 = vmul.f32 %v486, %v486
      %v503 = vmul.f32 %v487, %v487
      %v504 = vadd.f32 %v488, %v489
      %v505 = vadd.f32 %v504, %v490
      %v506 = vadd.f32 %v505, %v491
      %v507 = vadd.f32 %v506, %v492
      %v508 = vadd.f32 %v507, %v493
      %v509 = vadd.f32 %v508, %v494
      %v510 = vadd.f32 %v509, %v495
      %v511 = vadd.f32 %v510, %v496
      %v512 = vadd.f32 %v511, %v497
      %v513 = vadd.f32 %v512, %v498
      %v514 = vadd.f32 %v513, %v499
      %v515 = vadd.f32 %v514, %v500
      %v516 = vadd.f32 %v515, %v501
      %v517 = vadd.f32 %v516, %v502
      %v518 = vadd.f32 %v517, %v503
      %v519 = vrot.slane %v518, 4
      %v520 = vadd.f32 %v518, %v519
      %v521 = vrot.slane %v520, 2
      %v522 = vadd.f32 %v520, %v521
      %v523 = vrot.slane %v522, 1
      %v524 = vadd.f32 %v522, %v523
      %v525 = vmul.f32 %v524, %v470
      %v526 = vld [vmem:[%s237] sm:$0x1]
      %v527 = vadd.f32 %v525, 1e-05
      %v528 = vrsqrt.pop %v527
      %v529 = vmul.f32 %v526, %v528
      %v530 = vld [vmem:[%s240] sm:$0x1]
      %v531 = vmul.f32 %v471, %v529
      %v532 = vsub.f32 %v530, %v531
      %v534 = vlaneseq
      %v535 = vshrl.u32 %v534, 7
      %v536 = vsub.s32 0, %v535
      %v537 = vrot.slane %v529, %v536
      %v539 = vmul.f32 %v387, %v537
      %v540 = vmul.f32 %v390, %v537
      %v541 = vmul.f32 %v395, %v537
      %v542 = vmul.f32 %v398, %v537
      %v543 = vmul.f32 %v403, %v537
      %v544 = vmul.f32 %v406, %v537
      %v545 = vmul.f32 %v411, %v537
      %v546 = vmul.f32 %v414, %v537
      %v547 = vmul.f32 %v419, %v537
      %v548 = vmul.f32 %v422, %v537
      %v549 = vmul.f32 %v427, %v537
      %v550 = vmul.f32 %v430, %v537
      %v551 = vmul.f32 %v435, %v537
      %v552 = vmul.f32 %v438, %v537
      %v553 = vmul.f32 %v443, %v537
      %v554 = vmul.f32 %v446, %v537
      %v556 = vlaneseq
      %v557 = vshrl.u32 %v556, 7
      %v558 = vsub.s32 0, %v557
      %v559 = vrot.slane %v532, %v558
      %v561 = vadd.f32 %v539, %v559
      %v562 = vadd.f32 %v540, %v559
      %v563 = vadd.f32 %v541, %v559
      %v564 = vadd.f32 %v542, %v559
      %v565 = vadd.f32 %v543, %v559
      %v566 = vadd.f32 %v544, %v559
      %v567 = vadd.f32 %v545, %v559
      %v568 = vadd.f32 %v546, %v559
      %v569 = vadd.f32 %v547, %v559
      %v570 = vadd.f32 %v548, %v559
      %v571 = vadd.f32 %v549, %v559
      %v572 = vadd.f32 %v550, %v559
      %v573 = vadd.f32 %v551, %v559
      %v574 = vadd.f32 %v552, %v559
      %v575 = vadd.f32 %v553, %v559
      %v576 = vadd.f32 %v554, %v559
      %v577 = vmax.f32 %v561, 0.0
      %v578 = vmax.f32 %v562, 0.0
      %v579 = vmax.f32 %v563, 0.0
      %v580 = vmax.f32 %v564, 0.0
      %v581 = vmax.f32 %v565, 0.0
      %v582 = vmax.f32 %v566, 0.0
      %v583 = vmax.f32 %v567, 0.0
      %v584 = vmax.f32 %v568, 0.0
      %v585 = vmax.f32 %v569, 0.0
      %v586 = vmax.f32 %v570, 0.0
      %v587 = vmax.f32 %v571, 0.0
      %v588 = vmax.f32 %v572, 0.0
      %v589 = vmax.f32 %v573, 0.0
      %v590 = vmax.f32 %v574, 0.0
      %v591 = vmax.f32 %v575, 0.0
      %v592 = vmax.f32 %v576, 0.0
      %v593 = vpack.c.bf16 %v578, %v577
      %v594 = vpack.c.bf16 %v580, %v579
      %v595 = vpack.c.bf16 %v582, %v581
      %v596 = vpack.c.bf16 %v584, %v583
      %v597 = vpack.c.bf16 %v586, %v585
      %v598 = vpack.c.bf16 %v588, %v587
      %v599 = vpack.c.bf16 %v590, %v589
      %v600 = vpack.c.bf16 %v592, %v591
      %v609 = vunpack.c.l.b16 %v593
      %v610 = vunpack.c.h.b16 %v593
      %v611 = vunpack.c.l.b16 %v594
      %v612 = vunpack.c.h.b16 %v594
      %v613 = vunpack.c.l.b16 %v595
      %v614 = vunpack.c.h.b16 %v595
      %v615 = vunpack.c.l.b16 %v596
      %v616 = vunpack.c.h.b16 %v596
      %v617 = vunpack.c.l.b16 %v597
      %v618 = vunpack.c.h.b16 %v597
      %v619 = vunpack.c.l.b16 %v598
      %v620 = vunpack.c.h.b16 %v598
      %v621 = vunpack.c.l.b16 %v599
      %v622 = vunpack.c.h.b16 %v599
      %v623 = vunpack.c.l.b16 %v600
      %v624 = vunpack.c.h.b16 %v600
      %v625 = vpack.c.b16 %v609, %v609
      %v626 = vpack.c.b16 %v610, %v610
      %v627 = vpack.c.b16 %v611, %v611
      %v628 = vpack.c.b16 %v612, %v612
      %v629 = vpack.c.b16 %v613, %v613
      %v630 = vpack.c.b16 %v614, %v614
      %v631 = vpack.c.b16 %v615, %v615
      %v632 = vpack.c.b16 %v616, %v616
      %v633 = vpack.c.b16 %v617, %v617
      %v634 = vpack.c.b16 %v618, %v618
      %v635 = vpack.c.b16 %v619, %v619
      %v636 = vpack.c.b16 %v620, %v620
      %v637 = vpack.c.b16 %v621, %v621
      %v638 = vpack.c.b16 %v622, %v622
      %v639 = vpack.c.b16 %v623, %v623
      %v640 = vpack.c.b16 %v624, %v624
      %657 = vst [vmem:[%s245] sm:$0xf] %v625
      %658 = vst [vmem:[%s245 + $0x4] sm:$0xf] %v626
      %659 = vst [vmem:[%s245 + $0x8] sm:$0xf] %v627
      %660 = vst [vmem:[%s245 + $0xc] sm:$0xf] %v628
      %661 = vst [vmem:[%s245 + $0x10] sm:$0xf] %v629
      %662 = vst [vmem:[%s245 + $0x14] sm:$0xf] %v630
      %663 = vst [vmem:[%s245 + $0x18] sm:$0xf] %v631
      %664 = vst [vmem:[%s245 + $0x1c] sm:$0xf] %v632
      %665 = vst [vmem:[%s245 + $0x20] sm:$0xf] %v633
      %666 = vst [vmem:[%s245 + $0x24] sm:$0xf] %v634
      %667 = vst [vmem:[%s245 + $0x28] sm:$0xf] %v635
      %668 = vst [vmem:[%s245 + $0x2c] sm:$0xf] %v636
      %669 = vst [vmem:[%s245 + $0x30] sm:$0xf] %v637
      %670 = vst [vmem:[%s245 + $0x34] sm:$0xf] %v638
      %671 = vst [vmem:[%s245 + $0x38] sm:$0xf] %v639
      %672 = vst [vmem:[%s245 + $0x3c] sm:$0xf] %v640
      %p673 = scmp.lt.s32.totalorder %s15, 1
      %s674 = scalar_select %p673, %s15, 1
      %s675 = smul.addr %s674, 16
      %s676 = smul.addr %s675, 4
      %s677 = scalar_lea.vmem %s4, %s676
      // Predicated region
      $region37: #{dqn_forward.4} parent=35 // pred_check
        %p678 = pneg %p137
      $region38: #{dqn_forward.4} parent=35 // pred_check_branch
        %680 = sbr.rel (%p678) target = $region40
      $region39: #{dqn_forward.4} parent=35 // pred_region
        _
      $region40: #{dqn_forward.4} parent=35 // pred_fallthru
        _
    $region36: #{dqn_forward.4} parent=5 // pred_fallthru
      _
    %p681 = scmp.le.s32.totalorder 2, %s10
    // Predicated region
    $region41: #{dqn_forward.4} parent=5 // pred_check
      %p682 = pneg %p681
    $region42: #{dqn_forward.4} parent=5 // pred_check_branch
      %684 = sbr.rel (%p682) target = $region44
    $region43: #{dqn_forward.4} parent=5 // pred_region
      %s685 = ssub.s32 %s10, 2
      // Predicated region
      $region45: #{dqn_forward.4} parent=43 // pred_check
        %p686 = pneg %p143
      $region46: #{dqn_forward.4} parent=43 // pred_check_branch
        %688 = sbr.rel (%p686) target = $region48
      $region47: #{dqn_forward.4} parent=43 // pred_region
        %p689 = scmp.lt.s32.totalorder %s16, 1
        %s690 = scalar_select %p689, %s16, 1
        %s691 = smul.addr %s690, 16
        %s692 = smul.addr %s691, 4
        %s693 = scalar_lea.vmem %s4, %s692
      $region48: #{dqn_forward.4} parent=43 // pred_fallthru
        _
    $region44: #{dqn_forward.4} parent=5 // pred_fallthru
      _
  $region6: #{dqn_forward.4} parent=0 // loop_footer
    %s14 = sadd.s32 1, %s10
  $region7: #{dqn_forward.4} parent=0 // loop_footer_branch
    %9 = sbr.rel target = $region3
  $region8: #{dqn_forward.4} parent=0 // loop_exit
    _

// kernel: dqn_forward.5
$region0: #{dqn_forward.5}
  #allocation0 [shape = 'u32[]', space=smem, size = 0x4, offset = 0x4, fixed_abs, tag = 'smem constant byte address 0x4 - core index']
  #allocation1 [shape = 'u32[144,128]{1,0:T(1,128)}', space=vmem, size = 0x12000, scoped, tag = 'internal scratch']
  %s0 = inlined_call_operand.vmem [shape: bf16[2,32,1152], index: 0, kind: input, shape index: {}]
  %s1 = inlined_call_operand.vmem [shape: bf16[2,1152,64], index: 1, kind: input, shape index: {}]
  %s2 = inlined_call_operand.vmem [shape: f32[2,1,64], index: 2, kind: input, shape index: {}]
  %s3 = inlined_call_operand.vmem [shape: f32[2,1,64], index: 3, kind: input, shape index: {}]
  %s4 = inlined_call_operand.vmem [shape: bf16[2,32,64], index: 4, kind: output, shape index: {}]
  %s5 = sld [smem:[#allocation0]]
  $region49: #{dqn_forward.5} parent=0
    _
  %s7 = ssub.s32 1, %s5
  %s8 = scalar_select 0, %s7, %s5
  loop: start=0, step=1, limit=4
  $region2: #{dqn_forward.5} parent=0 // loop_pre_header
    _
  $region3: #{dqn_forward.5} parent=0 // loop_header
    %s10 = sphi 0, %s14
    %p11 = scmp.ge.s32.totalorder %s10, 4
    %s20 = sphi 0, %s22
    %s23 = sphi 0, %s20
    %s24 = sphi 0, %s23
    %s40 = sphi 0, %s24
    %s46 = sphi 0, %s48
    %s49 = sphi 0, %s46
    %s50 = sphi 0, %s49
    %s66 = sphi 0, %s50
    %s72 = sphi 0, %s74
    %s75 = sphi 0, %s72
    %s76 = sphi 0, %s75
    %s92 = sphi 0, %s76
    %s98 = sphi 0, %s100
    %s101 = sphi 0, %s98
    %s102 = sphi 0, %s101
    %s118 = sphi 0, %s102
    %s124 = sphi 0, %s126
    %s127 = sphi 0, %s124
    %s128 = sphi 0, %s127
    %s144 = sphi 0, %s128
  $region4: #{dqn_forward.5} parent=0 // loop_header_branch
    %13 = sbr.rel (%p11) target = $region8
  $region5: #{dqn_forward.5} parent=0 // loop_body
    %s15 = ssub.s32 %s10, 1
    %s16 = ssub.s32 %s10, 2
    %s17 = sadd.s32 %s10, 1
    %s18 = ssub.s32 %s10, %s17
    %p19 = scmp.eq.s32.totalorder %s18, 0
    %s21 = sadd.s32 %s20, 1
    %s22 = scalar_select %p19, %s20, %s21
    %p25 = pneg %p19
    %p26 = scmp.eq.s32.totalorder %s10, 1
    %p27 = por %p25, %p26
    %p28 = scmp.ne.s32.totalorder %s20, %s23
    %p29 = scmp.eq.s32.totalorder %s10, 0
    %p30 = por %p28, %p29
    %p31 = scmp.ne.s32.totalorder %s20, %s23
    %p32 = scmp.eq.s32.totalorder %s15, 1
    %p33 = por %p31, %p32
    %p34 = scmp.ne.s32.totalorder %s23, %s24
    %p35 = scmp.eq.s32.totalorder %s15, 0
    %p36 = por %p34, %p35
    %p37 = scmp.ne.s32.totalorder %s23, %s24
    %p38 = scmp.eq.s32.totalorder %s16, 1
    %p39 = por %p37, %p38
    %p41 = scmp.ne.s32.totalorder %s24, %s40
    %p42 = scmp.eq.s32.totalorder %s16, 0
    %p43 = por %p41, %p42
    %s44 = ssub.s32 %s10, %s17
    %p45 = scmp.eq.s32.totalorder %s44, 0
    %s47 = sadd.s32 %s46, 1
    %s48 = scalar_select %p45, %s46, %s47
    %p51 = pneg %p45
    %p52 = scmp.eq.s32.totalorder %s10, 1
    %p53 = por %p51, %p52
    %p54 = scmp.ne.s32.totalorder %s46, %s49
    %p55 = scmp.eq.s32.totalorder %s10, 0
    %p56 = por %p54, %p55
    %p57 = scmp.ne.s32.totalorder %s46, %s49
    %p58 = scmp.eq.s32.totalorder %s15, 1
    %p59 = por %p57, %p58
    %p60 = scmp.ne.s32.totalorder %s49, %s50
    %p61 = scmp.eq.s32.totalorder %s15, 0
    %p62 = por %p60, %p61
    %p63 = scmp.ne.s32.totalorder %s49, %s50
    %p64 = scmp.eq.s32.totalorder %s16, 1
    %p65 = por %p63, %p64
    %p67 = scmp.ne.s32.totalorder %s50, %s66
    %p68 = scmp.eq.s32.totalorder %s16, 0
    %p69 = por %p67, %p68
    %s70 = ssub.s32 %s10, %s17
    %p71 = scmp.eq.s32.totalorder %s70, 0
    %s73 = sadd.s32 %s72, 1
    %s74 = scalar_select %p71, %s72, %s73
    %p77 = pneg %p71
    %p78 = scmp.eq.s32.totalorder %s10, 1
    %p79 = por %p77, %p78
    %p80 = scmp.ne.s32.totalorder %s72, %s75
    %p81 = scmp.eq.s32.totalorder %s10, 0
    %p82 = por %p80, %p81
    %p83 = scmp.ne.s32.totalorder %s72, %s75
    %p84 = scmp.eq.s32.totalorder %s15, 1
    %p85 = por %p83, %p84
    %p86 = scmp.ne.s32.totalorder %s75, %s76
    %p87 = scmp.eq.s32.totalorder %s15, 0
    %p88 = por %p86, %p87
    %p89 = scmp.ne.s32.totalorder %s75, %s76
    %p90 = scmp.eq.s32.totalorder %s16, 1
    %p91 = por %p89, %p90
    %p93 = scmp.ne.s32.totalorder %s76, %s92
    %p94 = scmp.eq.s32.totalorder %s16, 0
    %p95 = por %p93, %p94
    %s96 = ssub.s32 %s10, %s17
    %p97 = scmp.eq.s32.totalorder %s96, 0
    %s99 = sadd.s32 %s98, 1
    %s100 = scalar_select %p97, %s98, %s99
    %p103 = pneg %p97
    %p104 = scmp.eq.s32.totalorder %s10, 1
    %p105 = por %p103, %p104
    %p106 = scmp.ne.s32.totalorder %s98, %s101
    %p107 = scmp.eq.s32.totalorder %s10, 0
    %p108 = por %p106, %p107
    %p109 = scmp.ne.s32.totalorder %s98, %s101
    %p110 = scmp.eq.s32.totalorder %s15, 1
    %p111 = por %p109, %p110
    %p112 = scmp.ne.s32.totalorder %s101, %s102
    %p113 = scmp.eq.s32.totalorder %s15, 0
    %p114 = por %p112, %p113
    %p115 = scmp.ne.s32.totalorder %s101, %s102
    %p116 = scmp.eq.s32.totalorder %s16, 1
    %p117 = por %p115, %p116
    %p119 = scmp.ne.s32.totalorder %s102, %s118
    %p120 = scmp.eq.s32.totalorder %s16, 0
    %p121 = por %p119, %p120
    %s122 = ssub.s32 %s10, %s17
    %p123 = scmp.eq.s32.totalorder %s122, 0
    %s125 = sadd.s32 %s124, 1
    %s126 = scalar_select %p123, %s124, %s125
    %p129 = pneg %p123
    %p130 = scmp.eq.s32.totalorder %s10, 1
    %p131 = por %p129, %p130
    %p132 = scmp.ne.s32.totalorder %s124, %s127
    %p133 = scmp.eq.s32.totalorder %s10, 0
    %p134 = por %p132, %p133
    %p135 = scmp.ne.s32.totalorder %s124, %s127
    %p136 = scmp.eq.s32.totalorder %s15, 1
    %p137 = por %p135, %p136
    %p138 = scmp.ne.s32.totalorder %s127, %s128
    %p139 = scmp.eq.s32.totalorder %s15, 0
    %p140 = por %p138, %p139
    %p141 = scmp.ne.s32.totalorder %s127, %s128
    %p142 = scmp.eq.s32.totalorder %s16, 1
    %p143 = por %p141, %p142
    %p145 = scmp.ne.s32.totalorder %s128, %s144
    %p146 = scmp.eq.s32.totalorder %s16, 0
    %p147 = por %p145, %p146
    %p148 = scmp.le.s32.totalorder 1, %s10
    %p149 = scmp.lt.s32.totalorder %s10, 3
    %p150 = pnand %p148, %p149
    %p151 = pneg %p150
    // Predicated region
    $region9: #{dqn_forward.5} parent=5 // pred_check
      _
    $region10: #{dqn_forward.5} parent=5 // pred_check_branch
      %153 = sbr.rel (%p150) target = $region12
    $region11: #{dqn_forward.5} parent=5 // pred_region
      %s154 = ssub.s32 %s10, 1
    $region12: #{dqn_forward.5} parent=5 // pred_fallthru
      _
    %p155 = scmp.lt.s32.totalorder %s10, 2
    // Predicated region
    $region13: #{dqn_forward.5} parent=5 // pred_check
      %p156 = pneg %p155
    $region14: #{dqn_forward.5} parent=5 // pred_check_branch
      %158 = sbr.rel (%p156) target = $region16
    $region15: #{dqn_forward.5} parent=5 // pred_region
      // Predicated region
      $region17: #{dqn_forward.5} parent=15 // pred_check
        %p159 = pneg %p30
      $region18: #{dqn_forward.5} parent=15 // pred_check_branch
        %161 = sbr.rel (%p159) target = $region20
      $region19: #{dqn_forward.5} parent=15 // pred_region
        %p162 = scmp.lt.s32.totalorder %s10, 1
        %s163 = scalar_select %p162, %s10, 1
        %s164 = smul.addr %s163, 36
        %s165 = smul.addr %s164, 4
        %s166 = scalar_lea.vmem %s0, %s165
      $region20: #{dqn_forward.5} parent=15 // pred_fallthru
        _
      // Predicated region
      $region21: #{dqn_forward.5} parent=15 // pred_check
        %p167 = pneg %p56
      $region22: #{dqn_forward.5} parent=15 // pred_check_branch
        %169 = sbr.rel (%p167) target = $region24
      $region23: #{dqn_forward.5} parent=15 // pred_region
        %p170 = scmp.lt.s32.totalorder %s10, 1
        %s171 = scalar_select %p170, %s10, 1
        %s172 = smul.addr %s171, 144
        %s173 = smul.addr %s172, 4
        %s174 = scalar_lea.vmem %s1, %s173
      $region24: #{dqn_forward.5} parent=15 // pred_fallthru
        _
      // Predicated region
      $region25: #{dqn_forward.5} parent=15 // pred_check
        %p175 = pneg %p82
      $region26: #{dqn_forward.5} parent=15 // pred_check_branch
        %177 = sbr.rel (%p175) target = $region28
      $region27: #{dqn_forward.5} parent=15 // pred_region
        %p178 = scmp.lt.s32.totalorder %s10, 1
        %s179 = scalar_select %p178, %s10, 1
        %s180 = scalar_lea.vmem %s2, %s179
      $region28: #{dqn_forward.5} parent=15 // pred_fallthru
        _
      // Predicated region
      $region29: #{dqn_forward.5} parent=15 // pred_check
        %p181 = pneg %p108
      $region30: #{dqn_forward.5} parent=15 // pred_check_branch
        %183 = sbr.rel (%p181) target = $region32
      $region31: #{dqn_forward.5} parent=15 // pred_region
        %p184 = scmp.lt.s32.totalorder %s10, 1
        %s185 = scalar_select %p184, %s10, 1
        %s186 = scalar_lea.vmem %s3, %s185
      $region32: #{dqn_forward.5} parent=15 // pred_fallthru
        _
    $region16: #{dqn_forward.5} parent=5 // pred_fallthru
      _
    %p187 = scmp.le.s32.totalorder 1, %s10
    %p188 = scmp.lt.s32.totalorder %s10, 3
    %p189 = pnand %p187, %p188
    %p190 = pneg %p189
    // Predicated region
    $region33: #{dqn_forward.5} parent=5 // pred_check
      _
    $region34: #{dqn_forward.5} parent=5 // pred_check_branch
      %192 = sbr.rel (%p189) target = $region36
    $region35: #{dqn_forward.5} parent=5 // pred_region
      %s193 = ssub.s32 %s10, 1
      %p194 = scmp.lt.s32.totalorder %s15, 1
      %s195 = scalar_select %p194, %s15, 1
      %s196 = smul.addr %s195, 36
      %s197 = smul.addr %s196, 4
      %s198 = scalar_lea.vmem %s0, %s197
      %p199 = pneg %p36
      %p200 = pneg %p33
      %p201 = scmp.lt.s32.totalorder %s15, 1
      %s202 = scalar_select %p201, %s15, 1
      %s203 = smul.addr %s202, 144
      %s204 = smul.addr %s203, 4
      %s205 = scalar_lea.vmem %s1, %s204
      %p206 = pneg %p62
      %p207 = pneg %p59
      %p208 = scmp.lt.s32.totalorder %s15, 1
      %s209 = scalar_select %p208, %s15, 1
      %s210 = scalar_lea.vmem %s2, %s209
      %p211 = pneg %p88
      %p212 = pneg %p85
      %p213 = scmp.lt.s32.totalorder %s15, 1
      %s214 = scalar_select %p213, %s15, 1
      %s215 = scalar_lea.vmem %s3, %s214
      %p216 = pneg %p114
      %p217 = pneg %p111
      %p218 = pneg %p140
      %p219 = pneg %p137
      %p220 = scmp.lt.s32.totalorder %s15, 1
      %s221 = scalar_select %p220, %s15, 1
      %s222 = smul.addr %s221, 4
      %s223 = smul.addr %s222, 4
      %s224 = scalar_lea.vmem %s4, %s223
      %p225 = scmp.lt.s32.totalorder %s15, 1
      %s226 = scalar_select %p225, %s15, 1
      %s227 = smul.addr %s226, 36
      %s228 = smul.addr %s227, 4
      %s229 = scalar_lea.vmem %s0, %s228
      %p230 = scmp.lt.s32.totalorder %s15, 1
      %s231 = scalar_select %p230, %s15, 1
      %s232 = smul.addr %s231, 144
      %s233 = smul.addr %s232, 4
      %s234 = scalar_lea.vmem %s1, %s233
      %p235 = scmp.lt.s32.totalorder %s15, 1
      %s236 = scalar_select %p235, %s15, 1
      %s237 = scalar_lea.vmem %s2, %s236
      %p238 = scmp.lt.s32.totalorder %s15, 1
      %s239 = scalar_select %p238, %s15, 1
      %s240 = scalar_lea.vmem %s3, %s239
      %p241 = scmp.lt.s32.totalorder %s15, 1
      %s242 = scalar_select %p241, %s15, 1
      %s243 = smul.addr %s242, 4
      %s244 = smul.addr %s243, 4
      %s245 = scalar_lea.vmem %s4, %s244
      %v247 = vld [vmem:[%s229] sm:$0xff]
      %v248 = vld [vmem:[%s229 + $0x8] sm:$0xff]
      %v249 = vld [vmem:[%s229 + $0x10] sm:$0xff]
      %v250 = vld [vmem:[%s229 + $0x18] sm:$0xff]
      %v251 = vld [vmem:[%s229 + $0x20] sm:$0xf]
      %v252 = vld [vmem:[%s229 + $0x24] sm:$0xff]
      %v253 = vld [vmem:[%s229 + $0x2c] sm:$0xff]
      %v254 = vld [vmem:[%s229 + $0x34] sm:$0xff]
      %v255 = vld [vmem:[%s229 + $0x3c] sm:$0xff]
      %v256 = vld [vmem:[%s229 + $0x44] sm:$0xf]
      %v257 = vld [vmem:[%s229 + $0x48] sm:$0xff]
      %v258 = vld [vmem:[%s229 + $0x50] sm:$0xff]
      %v259 = vld [vmem:[%s229 + $0x58] sm:$0xff]
      %v260 = vld [vmem:[%s229 + $0x60] sm:$0xff]
      %v261 = vld [vmem:[%s229 + $0x68] sm:$0xf]
      %v262 = vld [vmem:[%s229 + $0x6c] sm:$0xff]
      %v263 = vld [vmem:[%s229 + $0x74] sm:$0xff]
      %v264 = vld [vmem:[%s229 + $0x7c] sm:$0xff]
      %v265 = vld [vmem:[%s229 + $0x84] sm:$0xff]
      %v266 = vld [vmem:[%s229 + $0x8c] sm:$0xf]
      %v267 = vld [vmem:[%s234] sm:$0xf]
      %v268 = vld [vmem:[%s234 + $0x4] sm:$0xf]
      %v269 = vld [vmem:[%s234 + $0x8] sm:$0xf]
      %v270 = vld [vmem:[%s234 + $0xc] sm:$0xf]
      %v271 = vld [vmem:[%s234 + $0x10] sm:$0xf]
      %v272 = vld [vmem:[%s234 + $0x14] sm:$0xf]
      %v273 = vld [vmem:[%s234 + $0x18] sm:$0xf]
      %v274 = vld [vmem:[%s234 + $0x1c] sm:$0xf]
      %v275 = vld [vmem:[%s234 + $0x20] sm:$0xf]
      %v276 = vld [vmem:[%s234 + $0x24] sm:$0xf]
      %v277 = vld [vmem:[%s234 + $0x28] sm:$0xf]
      %v278 = vld [vmem:[%s234 + $0x2c] sm:$0xf]
      %v279 = vld [vmem:[%s234 + $0x30] sm:$0xf]
      %v280 = vld [vmem:[%s234 + $0x34] sm:$0xf]
      %v281 = vld [vmem:[%s234 + $0x38] sm:$0xf]
      %v282 = vld [vmem:[%s234 + $0x3c] sm:$0xf]
      %v283 = vld [vmem:[%s234 + $0x40] sm:$0xf]
      %v284 = vld [vmem:[%s234 + $0x44] sm:$0xf]
      %v285 = vld [vmem:[%s234 + $0x48] sm:$0xf]
      %v286 = vld [vmem:[%s234 + $0x4c] sm:$0xf]
      %v287 = vld [vmem:[%s234 + $0x50] sm:$0xf]
      %v288 = vld [vmem:[%s234 + $0x54] sm:$0xf]
      %v289 = vld [vmem:[%s234 + $0x58] sm:$0xf]
      %v290 = vld [vmem:[%s234 + $0x5c] sm:$0xf]
      %v291 = vld [vmem:[%s234 + $0x60] sm:$0xf]
      %v292 = vld [vmem:[%s234 + $0x64] sm:$0xf]
      %v293 = vld [vmem:[%s234 + $0x68] sm:$0xf]
      %v294 = vld [vmem:[%s234 + $0x6c] sm:$0xf]
      %v295 = vld [vmem:[%s234 + $0x70] sm:$0xf]
      %v296 = vld [vmem:[%s234 + $0x74] sm:$0xf]
      %v297 = vld [vmem:[%s234 + $0x78] sm:$0xf]
      %v298 = vld [vmem:[%s234 + $0x7c] sm:$0xf]
      %v299 = vld [vmem:[%s234 + $0x80] sm:$0xf]
      %v300 = vld [vmem:[%s234 + $0x84] sm:$0xf]
      %v301 = vld [vmem:[%s234 + $0x88] sm:$0xf]
      %v302 = vld [vmem:[%s234 + $0x8c] sm:$0xf]
      %v303 = vld [vmem:[%s234 + $0x90] sm:$0xf]
      %v304 = vld [vmem:[%s234 + $0x94] sm:$0xf]
      %v305 = vld [vmem:[%s234 + $0x98] sm:$0xf]
      %v306 = vld [vmem:[%s234 + $0x9c] sm:$0xf]
      %v307 = vld [vmem:[%s234 + $0xa0] sm:$0xf]
      %v308 = vld [vmem:[%s234 + $0xa4] sm:$0xf]
      %v309 = vld [vmem:[%s234 + $0xa8] sm:$0xf]
      %v310 = vld [vmem:[%s234 + $0xac] sm:$0xf]
      %v311 = vld [vmem:[%s234 + $0xb0] sm:$0xf]
      %v312 = vld [vmem:[%s234 + $0xb4] sm:$0xf]
      %v313 = vld [vmem:[%s234 + $0xb8] sm:$0xf]
      %v314 = vld [vmem:[%s234 + $0xbc] sm:$0xf]
      %v315 = vld [vmem:[%s234 + $0xc0] sm:$0xf]
      %v316 = vld [vmem:[%s234 + $0xc4] sm:$0xf]
      %v317 = vld [vmem:[%s234 + $0xc8] sm:$0xf]
      %v318 = vld [vmem:[%s234 + $0xcc] sm:$0xf]
      %v319 = vld [vmem:[%s234 + $0xd0] sm:$0xf]
      %v320 = vld [vmem:[%s234 + $0xd4] sm:$0xf]
      %v321 = vld [vmem:[%s234 + $0xd8] sm:$0xf]
      %v322 = vld [vmem:[%s234 + $0xdc] sm:$0xf]
      %v323 = vld [vmem:[%s234 + $0xe0] sm:$0xf]
      %v324 = vld [vmem:[%s234 + $0xe4] sm:$0xf]
      %v325 = vld [vmem:[%s234 + $0xe8] sm:$0xf]
      %v326 = vld [vmem:[%s234 + $0xec] sm:$0xf]
      %v327 = vld [vmem:[%s234 + $0xf0] sm:$0xf]
      %v328 = vld [vmem:[%s234 + $0xf4] sm:$0xf]
      %v329 = vld [vmem:[%s234 + $0xf8] sm:$0xf]
      %v330 = vld [vmem:[%s234 + $0xfc] sm:$0xf]
      %v331 = vld [vmem:[%s234 + $0x100] sm:$0xf]
      %v332 = vld [vmem:[%s234 + $0x104] sm:$0xf]
      %v333 = vld [vmem:[%s234 + $0x108] sm:$0xf]
      %v334 = vld [vmem:[%s234 + $0x10c] sm:$0xf]
      %v335 = vld [vmem:[%s234 + $0x110] sm:$0xf]
      %v336 = vld [vmem:[%s234 + $0x114] sm:$0xf]
      %v337 = vld [vmem:[%s234 + $0x118] sm:$0xf]
      %v338 = vld [vmem:[%s234 + $0x11c] sm:$0xf]
      %v339 = vld [vmem:[%s234 + $0x120] sm:$0xf]
      %v340 = vld [vmem:[%s234 + $0x124] sm:$0xf]
      %v341 = vld [vmem:[%s234 + $0x128] sm:$0xf]
      %v342 = vld [vmem:[%s234 + $0x12c] sm:$0xf]
      %v343 = vld [vmem:[%s234 + $0x130] sm:$0xf]
      %v344 = vld [vmem:[%s234 + $0x134] sm:$0xf]
      %v345 = vld [vmem:[%s234 + $0x138] sm:$0xf]
      %v346 = vld [vmem:[%s234 + $0x13c] sm:$0xf]
      %v347 = vld [vmem:[%s234 + $0x140] sm:$0xf]
      %v348 = vld [vmem:[%s234 + $0x144] sm:$0xf]
      %v349 = vld [vmem:[%s234 + $0x148] sm:$0xf]
      %v350 = vld [vmem:[%s234 + $0x14c] sm:$0xf]
      %v351 = vld [vmem:[%s234 + $0x150] sm:$0xf]
      %v352 = vld [vmem:[%s234 + $0x154] sm:$0xf]
      %v353 = vld [vmem:[%s234 + $0x158] sm:$0xf]
      %v354 = vld [vmem:[%s234 + $0x15c] sm:$0xf]
      %v355 = vld [vmem:[%s234 + $0x160] sm:$0xf]
      %v356 = vld [vmem:[%s234 + $0x164] sm:$0xf]
      %v357 = vld [vmem:[%s234 + $0x168] sm:$0xf]
      %v358 = vld [vmem:[%s234 + $0x16c] sm:$0xf]
      %v359 = vld [vmem:[%s234 + $0x170] sm:$0xf]
      %v360 = vld [vmem:[%s234 + $0x174] sm:$0xf]
      %v361 = vld [vmem:[%s234 + $0x178] sm:$0xf]
      %v362 = vld [vmem:[%s234 + $0x17c] sm:$0xf]
      %v363 = vld [vmem:[%s234 + $0x180] sm:$0xf]
      %v364 = vld [vmem:[%s234 + $0x184] sm:$0xf]
      %v365 = vld [vmem:[%s234 + $0x188] sm:$0xf]
      %v366 = vld [vmem:[%s234 + $0x18c] sm:$0xf]
      %v367 = vld [vmem:[%s234 + $0x190] sm:$0xf]
      %v368 = vld [vmem:[%s234 + $0x194] sm:$0xf]
      %v369 = vld [vmem:[%s234 + $0x198] sm:$0xf]
      %v370 = vld [vmem:[%s234 + $0x19c] sm:$0xf]
      %v371 = vld [vmem:[%s234 + $0x1a0] sm:$0xf]
      %v372 = vld [vmem:[%s234 + $0x1a4] sm:$0xf]
      %v373 = vld [vmem:[%s234 + $0x1a8] sm:$0xf]
      %v374 = vld [vmem:[%s234 + $0x1ac] sm:$0xf]
      %v375 = vld [vmem:[%s234 + $0x1b0] sm:$0xf]
      %v376 = vld [vmem:[%s234 + $0x1b4] sm:$0xf]
      %v377 = vld [vmem:[%s234 + $0x1b8] sm:$0xf]
      %v378 = vld [vmem:[%s234 + $0x1bc] sm:$0xf]
      %v379 = vld [vmem:[%s234 + $0x1c0] sm:$0xf]
      %v380 = vld [vmem:[%s234 + $0x1c4] sm:$0xf]
      %v381 = vld [vmem:[%s234 + $0x1c8] sm:$0xf]
      %v382 = vld [vmem:[%s234 + $0x1cc] sm:$0xf]
      %v383 = vld [vmem:[%s234 + $0x1d0] sm:$0xf]
      %v384 = vld [vmem:[%s234 + $0x1d4] sm:$0xf]
      %v385 = vld [vmem:[%s234 + $0x1d8] sm:$0xf]
      %v386 = vld [vmem:[%s234 + $0x1dc] sm:$0xf]
      %v387 = vld [vmem:[%s234 + $0x1e0] sm:$0xf]
      %v388 = vld [vmem:[%s234 + $0x1e4] sm:$0xf]
      %v389 = vld [vmem:[%s234 + $0x1e8] sm:$0xf]
      %v390 = vld [vmem:[%s234 + $0x1ec] sm:$0xf]
      %v391 = vld [vmem:[%s234 + $0x1f0] sm:$0xf]
      %v392 = vld [vmem:[%s234 + $0x1f4] sm:$0xf]
      %v393 = vld [vmem:[%s234 + $0x1f8] sm:$0xf]
      %v394 = vld [vmem:[%s234 + $0x1fc] sm:$0xf]
      %v395 = vld [vmem:[%s234 + $0x200] sm:$0xf]
      %v396 = vld [vmem:[%s234 + $0x204] sm:$0xf]
      %v397 = vld [vmem:[%s234 + $0x208] sm:$0xf]
      %v398 = vld [vmem:[%s234 + $0x20c] sm:$0xf]
      %v399 = vld [vmem:[%s234 + $0x210] sm:$0xf]
      %v400 = vld [vmem:[%s234 + $0x214] sm:$0xf]
      %v401 = vld [vmem:[%s234 + $0x218] sm:$0xf]
      %v402 = vld [vmem:[%s234 + $0x21c] sm:$0xf]
      %v403 = vld [vmem:[%s234 + $0x220] sm:$0xf]
      %v404 = vld [vmem:[%s234 + $0x224] sm:$0xf]
      %v405 = vld [vmem:[%s234 + $0x228] sm:$0xf]
      %v406 = vld [vmem:[%s234 + $0x22c] sm:$0xf]
      %v407 = vld [vmem:[%s234 + $0x230] sm:$0xf]
      %v408 = vld [vmem:[%s234 + $0x234] sm:$0xf]
      %v409 = vld [vmem:[%s234 + $0x238] sm:$0xf]
      %v410 = vld [vmem:[%s234 + $0x23c] sm:$0xf]
      %v431 = vunpack.c.l.b16 %v247
      %v432 = vunpack.c.h.b16 %v247
      %v433 = vunpack.c.l.b16 %v248
      %v434 = vunpack.c.h.b16 %v248
      %v435 = vunpack.c.l.b16 %v249
      %v436 = vunpack.c.h.b16 %v249
      %v437 = vunpack.c.l.b16 %v250
      %v438 = vunpack.c.h.b16 %v250
      %v439 = vunpack.c.l.b16 %v251
      %v440 = vunpack.c.l.b16 %v252
      %v441 = vunpack.c.h.b16 %v252
      %v442 = vunpack.c.l.b16 %v253
      %v443 = vunpack.c.h.b16 %v253
      %v444 = vunpack.c.l.b16 %v254
      %v445 = vunpack.c.h.b16 %v254
      %v446 = vunpack.c.l.b16 %v255
      %v447 = vunpack.c.h.b16 %v255
      %v448 = vunpack.c.l.b16 %v256
      %v449 = vunpack.c.l.b16 %v257
      %v450 = vunpack.c.h.b16 %v257
      %v451 = vunpack.c.l.b16 %v258
      %v452 = vunpack.c.h.b16 %v258
      %v453 = vunpack.c.l.b16 %v259
      %v454 = vunpack.c.h.b16 %v259
      %v455 = vunpack.c.l.b16 %v260
      %v456 = vunpack.c.h.b16 %v260
      %v457 = vunpack.c.l.b16 %v261
      %v458 = vunpack.c.l.b16 %v262
      %v459 = vunpack.c.h.b16 %v262
      %v460 = vunpack.c.l.b16 %v263
      %v461 = vunpack.c.h.b16 %v263
      %v462 = vunpack.c.l.b16 %v264
      %v463 = vunpack.c.h.b16 %v264
      %v464 = vunpack.c.l.b16 %v265
      %v465 = vunpack.c.h.b16 %v265
      %v466 = vunpack.c.l.b16 %v266
      %v467 = vpack.c.b16 %v440, %v431
      %v468 = vpack.c.b16 %v441, %v432
      %v469 = vpack.c.b16 %v442, %v433
      %v470 = vpack.c.b16 %v443, %v434
      %v471 = vpack.c.b16 %v444, %v435
      %v472 = vpack.c.b16 %v445, %v436
      %v473 = vpack.c.b16 %v446, %v437
      %v474 = vpack.c.b16 %v447, %v438
      %v475 = vpack.c.b16 %v448, %v439
      %v476 = vpack.c.b16 %v458, %v449
      %v477 = vpack.c.b16 %v459, %v450
      %v478 = vpack.c.b16 %v460, %v451
      %v479 = vpack.c.b16 %v461, %v452
      %v480 = vpack.c.b16 %v462, %v453
      %v481 = vpack.c.b16 %v463, %v454
      %v482 = vpack.c.b16 %v464, %v455
      %v483 = vpack.c.b16 %v465, %v456
      %v484 = vpack.c.b16 %v466, %v457
      %v647 = vunpack.c.l.b16 %v267
      %v648 = vunpack.c.l.b16 %v268
      %v649 = vunpack.c.l.b16 %v269
      %v650 = vunpack.c.l.b16 %v270
      %v651 = vunpack.c.l.b16 %v271
      %v652 = vunpack.c.l.b16 %v272
      %v653 = vunpack.c.l.b16 %v273
      %v654 = vunpack.c.l.b16 %v274
      %v655 = vunpack.c.l.b16 %v275
      %v656 = vunpack.c.l.b16 %v276
      %v657 = vunpack.c.l.b16 %v277
      %v658 = vunpack.c.l.b16 %v278
      %v659 = vunpack.c.l.b16 %v279
      %v660 = vunpack.c.l.b16 %v280
      %v661 = vunpack.c.l.b16 %v281
      %v662 = vunpack.c.l.b16 %v282
      %v663 = vunpack.c.l.b16 %v283
      %v664 = vunpack.c.l.b16 %v284
      %v665 = vunpack.c.l.b16 %v285
      %v666 = vunpack.c.l.b16 %v286
      %v667 = vunpack.c.l.b16 %v287
      %v668 = vunpack.c.l.b16 %v288
      %v669 = vunpack.c.l.b16 %v289
      %v670 = vunpack.c.l.b16 %v290
      %v671 = vunpack.c.l.b16 %v291
      %v672 = vunpack.c.l.b16 %v292
      %v673 = vunpack.c.l.b16 %v293
      %v674 = vunpack.c.l.b16 %v294
      %v675 = vunpack.c.l.b16 %v295
      %v676 = vunpack.c.l.b16 %v296
      %v677 = vunpack.c.l.b16 %v297
      %v678 = vunpack.c.l.b16 %v298
      %v679 = vunpack.c.l.b16 %v299
      %v680 = vunpack.c.l.b16 %v300
      %v681 = vunpack.c.l.b16 %v301
      %v682 = vunpack.c.l.b16 %v302
      %v683 = vunpack.c.l.b16 %v303
      %v684 = vunpack.c.l.b16 %v304
      %v685 = vunpack.c.l.b16 %v305
      %v686 = vunpack.c.l.b16 %v306
      %v687 = vunpack.c.l.b16 %v307
      %v688 = vunpack.c.l.b16 %v308
      %v689 = vunpack.c.l.b16 %v309
      %v690 = vunpack.c.l.b16 %v310
      %v691 = vunpack.c.l.b16 %v311
      %v692 = vunpack.c.l.b16 %v312
      %v693 = vunpack.c.l.b16 %v313
      %v694 = vunpack.c.l.b16 %v314
      %v695 = vunpack.c.l.b16 %v315
      %v696 = vunpack.c.l.b16 %v316
      %v697 = vunpack.c.l.b16 %v317
      %v698 = vunpack.c.l.b16 %v318
      %v699 = vunpack.c.l.b16 %v319
      %v700 = vunpack.c.l.b16 %v320
      %v701 = vunpack.c.l.b16 %v321
      %v702 = vunpack.c.l.b16 %v322
      %v703 = vunpack.c.l.b16 %v323
      %v704 = vunpack.c.l.b16 %v324
      %v705 = vunpack.c.l.b16 %v325
      %v706 = vunpack.c.l.b16 %v326
      %v707 = vunpack.c.l.b16 %v327
      %v708 = vunpack.c.l.b16 %v328
      %v709 = vunpack.c.l.b16 %v329
      %v710 = vunpack.c.l.b16 %v330
      %v711 = vunpack.c.l.b16 %v331
      %v712 = vunpack.c.l.b16 %v332
      %v713 = vunpack.c.l.b16 %v333
      %v714 = vunpack.c.l.b16 %v334
      %v715 = vunpack.c.l.b16 %v335
      %v716 = vunpack.c.l.b16 %v336
      %v717 = vunpack.c.l.b16 %v337
      %v718 = vunpack.c.l.b16 %v338
      %v719 = vunpack.c.l.b16 %v339
      %v720 = vunpack.c.l.b16 %v340
      %v721 = vunpack.c.l.b16 %v341
      %v722 = vunpack.c.l.b16 %v342
      %v723 = vunpack.c.l.b16 %v343
      %v724 = vunpack.c.l.b16 %v344
      %v725 = vunpack.c.l.b16 %v345
      %v726 = vunpack.c.l.b16 %v346
      %v727 = vunpack.c.l.b16 %v347
      %v728 = vunpack.c.l.b16 %v348
      %v729 = vunpack.c.l.b16 %v349
      %v730 = vunpack.c.l.b16 %v350
      %v731 = vunpack.c.l.b16 %v351
      %v732 = vunpack.c.l.b16 %v352
      %v733 = vunpack.c.l.b16 %v353
      %v734 = vunpack.c.l.b16 %v354
      %v735 = vunpack.c.l.b16 %v355
      %v736 = vunpack.c.l.b16 %v356
      %v737 = vunpack.c.l.b16 %v357
      %v738 = vunpack.c.l.b16 %v358
      %v739 = vunpack.c.l.b16 %v359
      %v740 = vunpack.c.l.b16 %v360
      %v741 = vunpack.c.l.b16 %v361
      %v742 = vunpack.c.l.b16 %v362
      %v743 = vunpack.c.l.b16 %v363
      %v744 = vunpack.c.l.b16 %v364
      %v745 = vunpack.c.l.b16 %v365
      %v746 = vunpack.c.l.b16 %v366
      %v747 = vunpack.c.l.b16 %v367
      %v748 = vunpack.c.l.b16 %v368
      %v749 = vunpack.c.l.b16 %v369
      %v750 = vunpack.c.l.b16 %v370
      %v751 = vunpack.c.l.b16 %v371
      %v752 = vunpack.c.l.b16 %v372
      %v753 = vunpack.c.l.b16 %v373
      %v754 = vunpack.c.l.b16 %v374
      %v755 = vunpack.c.l.b16 %v375
      %v756 = vunpack.c.l.b16 %v376
      %v757 = vunpack.c.l.b16 %v377
      %v758 = vunpack.c.l.b16 %v378
      %v759 = vunpack.c.l.b16 %v379
      %v760 = vunpack.c.l.b16 %v380
      %v761 = vunpack.c.l.b16 %v381
      %v762 = vunpack.c.l.b16 %v382
      %v763 = vunpack.c.l.b16 %v383
      %v764 = vunpack.c.l.b16 %v384
      %v765 = vunpack.c.l.b16 %v385
      %v766 = vunpack.c.l.b16 %v386
      %v767 = vunpack.c.l.b16 %v387
      %v768 = vunpack.c.l.b16 %v388
      %v769 = vunpack.c.l.b16 %v389
      %v770 = vunpack.c.l.b16 %v390
      %v771 = vunpack.c.l.b16 %v391
      %v772 = vunpack.c.l.b16 %v392
      %v773 = vunpack.c.l.b16 %v393
      %v774 = vunpack.c.l.b16 %v394
      %v775 = vunpack.c.l.b16 %v395
      %v776 = vunpack.c.l.b16 %v396
      %v777 = vunpack.c.l.b16 %v397
      %v778 = vunpack.c.l.b16 %v398
      %v779 = vunpack.c.l.b16 %v399
      %v780 = vunpack.c.l.b16 %v400
      %v781 = vunpack.c.l.b16 %v401
      %v782 = vunpack.c.l.b16 %v402
      %v783 = vunpack.c.l.b16 %v403
      %v784 = vunpack.c.l.b16 %v404
      %v785 = vunpack.c.l.b16 %v405
      %v786 = vunpack.c.l.b16 %v406
      %v787 = vunpack.c.l.b16 %v407
      %v788 = vunpack.c.l.b16 %v408
      %v789 = vunpack.c.l.b16 %v409
      %v790 = vunpack.c.l.b16 %v410
      %v791 = vpack.c.b16 %v648, %v647
      %v792 = vpack.c.b16 %v650, %v649
      %v793 = vpack.c.b16 %v652, %v651
      %v794 = vpack.c.b16 %v654, %v653
      %v795 = vpack.c.b16 %v656, %v655
      %v796 = vpack.c.b16 %v658, %v657
      %v797 = vpack.c.b16 %v660, %v659
      %v798 = vpack.c.b16 %v662, %v661
      %v799 = vpack.c.b16 %v664, %v663
      %v800 = vpack.c.b16 %v666, %v665
      %v801 = vpack.c.b16 %v668, %v667
      %v802 = vpack.c.b16 %v670, %v669
      %v803 = vpack.c.b16 %v672, %v671
      %v804 = vpack.c.b16 %v674, %v673
      %v805 = vpack.c.b16 %v676, %v675
      %v806 = vpack.c.b16 %v678, %v677
      %v807 = vpack.c.b16 %v680, %v679
      %v808 = vpack.c.b16 %v682, %v681
      %v809 = vpack.c.b16 %v684, %v683
      %v810 = vpack.c.b16 %v686, %v685
      %v811 = vpack.c.b16 %v688, %v687
      %v812 = vpack.c.b16 %v690, %v689
      %v813 = vpack.c.b16 %v692, %v691
      %v814 = vpack.c.b16 %v694, %v693
      %v815 = vpack.c.b16 %v696, %v695
      %v816 = vpack.c.b16 %v698, %v697
      %v817 = vpack.c.b16 %v700, %v699
      %v818 = vpack.c.b16 %v702, %v701
      %v819 = vpack.c.b16 %v704, %v703
      %v820 = vpack.c.b16 %v706, %v705
      %v821 = vpack.c.b16 %v708, %v707
      %v822 = vpack.c.b16 %v710, %v709
      %v823 = vpack.c.b16 %v712, %v711
      %v824 = vpack.c.b16 %v714, %v713
      %v825 = vpack.c.b16 %v716, %v715
      %v826 = vpack.c.b16 %v718, %v717
      %v827 = vpack.c.b16 %v720, %v719
      %v828 = vpack.c.b16 %v722, %v721
      %v829 = vpack.c.b16 %v724, %v723
      %v830 = vpack.c.b16 %v726, %v725
      %v831 = vpack.c.b16 %v728, %v727
      %v832 = vpack.c.b16 %v730, %v729
      %v833 = vpack.c.b16 %v732, %v731
      %v834 = vpack.c.b16 %v734, %v733
      %v835 = vpack.c.b16 %v736, %v735
      %v836 = vpack.c.b16 %v738, %v737
      %v837 = vpack.c.b16 %v740, %v739
      %v838 = vpack.c.b16 %v742, %v741
      %v839 = vpack.c.b16 %v744, %v743
      %v840 = vpack.c.b16 %v746, %v745
      %v841 = vpack.c.b16 %v748, %v747
      %v842 = vpack.c.b16 %v750, %v749
      %v843 = vpack.c.b16 %v752, %v751
      %v844 = vpack.c.b16 %v754, %v753
      %v845 = vpack.c.b16 %v756, %v755
      %v846 = vpack.c.b16 %v758, %v757
      %v847 = vpack.c.b16 %v760, %v759
      %v848 = vpack.c.b16 %v762, %v761
      %v849 = vpack.c.b16 %v764, %v763
      %v850 = vpack.c.b16 %v766, %v765
      %v851 = vpack.c.b16 %v768, %v767
      %v852 = vpack.c.b16 %v770, %v769
      %v853 = vpack.c.b16 %v772, %v771
      %v854 = vpack.c.b16 %v774, %v773
      %v855 = vpack.c.b16 %v776, %v775
      %v856 = vpack.c.b16 %v778, %v777
      %v857 = vpack.c.b16 %v780, %v779
      %v858 = vpack.c.b16 %v782, %v781
      %v859 = vpack.c.b16 %v784, %v783
      %v860 = vpack.c.b16 %v786, %v785
      %v861 = vpack.c.b16 %v788, %v787
      %v862 = vpack.c.b16 %v790, %v789
      %935 = vmatprep.subr.bf16.mxu0 0
      %936 = vmatpush1.bf16.msra.mxu0 %v798
      %937 = vmatprep.subr.bf16.mxu0 0
      %938 = vmatpush1.bf16.msra.mxu0 %v797
      %939 = vmatprep.subr.bf16.mxu0 0
      %940 = vmatpush1.bf16.msra.mxu0 %v796
      %941 = vmatprep.subr.bf16.mxu0 0
      %942 = vmatpush1.bf16.msra.mxu0 %v795
      %943 = vmatprep.subr.bf16.mxu0 0
      %944 = vmatpush1.bf16.msra.mxu0 %v794
      %945 = vmatprep.subr.bf16.mxu0 0
      %946 = vmatpush1.bf16.msra.mxu0 %v793
      %947 = vmatprep.subr.bf16.mxu0 0
      %948 = vmatpush1.bf16.msra.mxu0 %v792
      %949 = vmatprep.subr.bf16.mxu0 0
      %950 = vmatpush1.bf16.msra.mxu0 %v791
      %951 = vmatprep.subr.bf16.mxu0 0
      %952 = vmatpush2.bf16.msra.mxu0 %v806
      %953 = vmatprep.subr.bf16.mxu0 0
      %954 = vmatpush2.bf16.msra.mxu0 %v805
      %955 = vmatprep.subr.bf16.mxu0 0
      %956 = vmatpush2.bf16.msra.mxu0 %v804
      %957 = vmatprep.subr.bf16.mxu0 0
      %958 = vmatpush2.bf16.msra.mxu0 %v803
      %959 = vmatprep.subr.bf16.mxu0 0
      %960 = vmatpush2.bf16.msra.mxu0 %v802
      %961 = vmatprep.subr.bf16.mxu0 0
      %962 = vmatpush2.bf16.msra.mxu0 %v801
      %963 = vmatprep.subr.bf16.mxu0 0
      %964 = vmatpush2.bf16.msra.mxu0 %v800
      %965 = vmatprep.subr.bf16.mxu0 0
      %966 = vmatpush2.bf16.msra.mxu0 %v799
      %967 = vmatprep.mubr.bf16.mxu0 %v468
      %968 = vmatmul.mubr.bf16.gmra.mxu0 %v467
      %v969 = vpop.f32.mrf.mxu0
      %v970 = vadd.f32 0.0, %v969
      %v971 = vpop.f32.mrf.mxu0
      %v972 = vpop.f32.mrf.mxu0
      %v973 = vadd.f32 0.0, %v972
      %v974 = vpop.f32.mrf.mxu0
      %975 = vmatprep.mubr.bf16.mxu0 %v477
      %976 = vmatmul.mubr.bf16.gmra.mxu0 %v476
      %v977 = vpop.f32.mrf.mxu0
      %v978 = vadd.f32 0.0, %v977
      %v979 = vpop.f32.mrf.mxu0
      %v980 = vpop.f32.mrf.mxu0
      %v981 = vadd.f32 0.0, %v980
      %v982 = vpop.f32.mrf.mxu0
      %983 = vdwg.mxu0
      %984 = vmatprep.subr.bf16.mxu0 0
      %985 = vmatpush1.bf16.msra.mxu0 %v814
      %986 = vmatprep.subr.bf16.mxu0 0
      %987 = vmatpush1.bf16.msra.mxu0 %v813
      %988 = vmatprep.subr.bf16.mxu0 0
      %989 = vmatpush1.bf16.msra.mxu0 %v812
      %990 = vmatprep.subr.bf16.mxu0 0
      %991 = vmatpush1.bf16.msra.mxu0 %v811
      %992 = vmatprep.subr.bf16.mxu0 0
      %993 = vmatpush1.bf16.msra.mxu0 %v810
      %994 = vmatprep.subr.bf16.mxu0 0
      %995 = vmatpush1.bf16.msra.mxu0 %v809
      %996 = vmatprep.subr.bf16.mxu0 0
      %997 = vmatpush1.bf16.msra.mxu0 %v808
      %998 = vmatprep.subr.bf16.mxu0 0
      %999 = vmatpush1.bf16.msra.mxu0 %v807
      %1000 = vmatprep.subr.bf16.mxu0 0
      %1001 = vmatpush2.bf16.msra.mxu0 %v822
      %1002 = vmatprep.subr.bf16.mxu0 0
      %1003 = vmatpush2.bf16.msra.mxu0 %v821
      %1004 = vmatprep.subr.bf16.mxu0 0
      %1005 = vmatpush2.bf16.msra.mxu0 %v820
      %1006 = vmatprep.subr.bf16.mxu0 0
      %1007 = vmatpush2.bf16.msra.mxu0 %v819
      %1008 = vmatprep.subr.bf16.mxu0 0
      %1009 = vmatpush2.bf16.msra.mxu0 %v818
      %1010 = vmatprep.subr.bf16.mxu0 0
      %1011 = vmatpush2.bf16.msra.mxu0 %v817
      %1012 = vmatprep.subr.bf16.mxu0 0
      %1013 = vmatpush2.bf16.msra.mxu0 %v816
      %1014 = vmatprep.subr.bf16.mxu0 0
      %1015 = vmatpush2.bf16.msra.mxu0 %v815
      %1016 = vmatprep.mubr.bf16.mxu0 %v470
      %1017 = vmatmul.mubr.bf16.gmra.mxu0 %v469
      %v1018 = vpop.f32.mrf.mxu0
      %v1019 = vadd.f32 %v970, %v1018
      %v1020 = vpop.f32.mrf.mxu0
      %v1021 = vpop.f32.mrf.mxu0
      %v1022 = vadd.f32 %v973, %v1021
      %v1023 = vpop.f32.mrf.mxu0
      %1024 = vmatprep.mubr.bf16.mxu0 %v479
      %1025 = vmatmul.mubr.bf16.gmra.mxu0 %v478
      %v1026 = vpop.f32.mrf.mxu0
      %v1027 = vadd.f32 %v978, %v1026
      %v1028 = vpop.f32.mrf.mxu0
      %v1029 = vpop.f32.mrf.mxu0
      %v1030 = vadd.f32 %v981, %v1029
      %v1031 = vpop.f32.mrf.mxu0
      %1032 = vdwg.mxu0
      %1033 = vmatprep.subr.bf16.mxu0 0
      %1034 = vmatpush1.bf16.msra.mxu0 %v830
      %1035 = vmatprep.subr.bf16.mxu0 0
      %1036 = vmatpush1.bf16.msra.mxu0 %v829
      %1037 = vmatprep.subr.bf16.mxu0 0
      %1038 = vmatpush1.bf16.msra.mxu0 %v828
      %1039 = vmatprep.subr.bf16.mxu0 0
      %1040 = vmatpush1.bf16.msra.mxu0 %v827
      %1041 = vmatprep.subr.bf16.mxu0 0
      %1042 = vmatpush1.bf16.msra.mxu0 %v826
      %1043 = vmatprep.subr.bf16.mxu0 0
      %1044 = vmatpush1.bf16.msra.mxu0 %v825
      %1045 = vmatprep.subr.bf16.mxu0 0
      %1046 = vmatpush1.bf16.msra.mxu0 %v824
      %1047 = vmatprep.subr.bf16.mxu0 0
      %1048 = vmatpush1.bf16.msra.mxu0 %v823
      %1049 = vmatprep.subr.bf16.mxu0 0
      %1050 = vmatpush2.bf16.msra.mxu0 %v838
      %1051 = vmatprep.subr.bf16.mxu0 0
      %1052 = vmatpush2.bf16.msra.mxu0 %v837
      %1053 = vmatprep.subr.bf16.mxu0 0
      %1054 = vmatpush2.bf16.msra.mxu0 %v836
      %1055 = vmatprep.subr.bf16.mxu0 0
      %1056 = vmatpush2.bf16.msra.mxu0 %v835
      %1057 = vmatprep.subr.bf16.mxu0 0
      %1058 = vmatpush2.bf16.msra.mxu0 %v834
      %1059 = vmatprep.subr.bf16.mxu0 0
      %1060 = vmatpush2.bf16.msra.mxu0 %v833
      %1061 = vmatprep.subr.bf16.mxu0 0
      %1062 = vmatpush2.bf16.msra.mxu0 %v832
      %1063 = vmatprep.subr.bf16.mxu0 0
      %1064 = vmatpush2.bf16.msra.mxu0 %v831
      %1065 = vmatprep.mubr.bf16.mxu0 %v472
      %1066 = vmatmul.mubr.bf16.gmra.mxu0 %v471
      %v1067 = vpop.f32.mrf.mxu0
      %v1068 = vadd.f32 %v1019, %v1067
      %v1069 = vpop.f32.mrf.mxu0
      %v1070 = vpop.f32.mrf.mxu0
      %v1071 = vadd.f32 %v1022, %v1070
      %v1072 = vpop.f32.mrf.mxu0
      %1073 = vmatprep.mubr.bf16.mxu0 %v481
      %1074 = vmatmul.mubr.bf16.gmra.mxu0 %v480
      %v1075 = vpop.f32.mrf.mxu0
      %v1076 = vadd.f32 %v1027, %v1075
      %v1077 = vpop.f32.mrf.mxu0
      %v1078 = vpop.f32.mrf.mxu0
      %v1079 = vadd.f32 %v1030, %v1078
      %v1080 = vpop.f32.mrf.mxu0
      %1081 = vdwg.mxu0
      %1082 = vmatprep.subr.bf16.mxu0 0
      %1083 = vmatpush1.bf16.msra.mxu0 %v846
      %1084 = vmatprep.subr.bf16.mxu0 0
      %1085 = vmatpush1.bf16.msra.mxu0 %v845
      %1086 = vmatprep.subr.bf16.mxu0 0
      %1087 = vmatpush1.bf16.msra.mxu0 %v844
      %1088 = vmatprep.subr.bf16.mxu0 0
      %1089 = vmatpush1.bf16.msra.mxu0 %v843
      %1090 = vmatprep.subr.bf16.mxu0 0
      %1091 = vmatpush1.bf16.msra.mxu0 %v842
      %1092 = vmatprep.subr.bf16.mxu0 0
      %1093 = vmatpush1.bf16.msra.mxu0 %v841
      %1094 = vmatprep.subr.bf16.mxu0 0
      %1095 = vmatpush1.bf16.msra.mxu0 %v840
      %1096 = vmatprep.subr.bf16.mxu0 0
      %1097 = vmatpush1.bf16.msra.mxu0 %v839
      %1098 = vmatprep.subr.bf16.mxu0 0
      %1099 = vmatpush2.bf16.msra.mxu0 %v854
      %1100 = vmatprep.subr.bf16.mxu0 0
      %1101 = vmatpush2.bf16.msra.mxu0 %v853
      %1102 = vmatprep.subr.bf16.mxu0 0
      %1103 = vmatpush2.bf16.msra.mxu0 %v852
      %1104 = vmatprep.subr.bf16.mxu0 0
      %1105 = vmatpush2.bf16.msra.mxu0 %v851
      %1106 = vmatprep.subr.bf16.mxu0 0
      %1107 = vmatpush2.bf16.msra.mxu0 %v850
      %1108 = vmatprep.subr.bf16.mxu0 0
      %1109 = vmatpush2.bf16.msra.mxu0 %v849
      %1110 = vmatprep.subr.bf16.mxu0 0
      %1111 = vmatpush2.bf16.msra.mxu0 %v848
      %1112 = vmatprep.subr.bf16.mxu0 0
      %1113 = vmatpush2.bf16.msra.mxu0 %v847
      %1114 = vmatprep.mubr.bf16.mxu0 %v474
      %1115 = vmatmul.mubr.bf16.gmra.mxu0 %v473
      %v1116 = vpop.f32.mrf.mxu0
      %v1117 = vadd.f32 %v1068, %v1116
      %v1118 = vpop.f32.mrf.mxu0
      %v1119 = vpop.f32.mrf.mxu0
      %v1120 = vadd.f32 %v1071, %v1119
      %v1121 = vpop.f32.mrf.mxu0
      %1122 = vmatprep.mubr.bf16.mxu0 %v483
      %1123 = vmatmul.mubr.bf16.gmra.mxu0 %v482
      %v1124 = vpop.f32.mrf.mxu0
      %v1125 = vadd.f32 %v1076, %v1124
      %v1126 = vpop.f32.mrf.mxu0
      %v1127 = vpop.f32.mrf.mxu0
      %v1128 = vadd.f32 %v1079, %v1127
      %v1129 = vpop.f32.mrf.mxu0
      %1130 = vdwg.mxu0
      %1131 = vmatprep.subr.bf16.mxu0 0
      %1132 = vmatpush1.bf16.msra.mxu0 %v862
      %1133 = vmatprep.subr.bf16.mxu0 0
      %1134 = vmatpush1.bf16.msra.mxu0 %v861
      %1135 = vmatprep.subr.bf16.mxu0 0
      %1136 = vmatpush1.bf16.msra.mxu0 %v860
      %1137 = vmatprep.subr.bf16.mxu0 0
      %1138 = vmatpush1.bf16.msra.mxu0 %v859
      %1139 = vmatprep.subr.bf16.mxu0 0
      %1140 = vmatpush1.bf16.msra.mxu0 %v858
      %1141 = vmatprep.subr.bf16.mxu0 0
      %1142 = vmatpush1.bf16.msra.mxu0 %v857
      %1143 = vmatprep.subr.bf16.mxu0 0
      %1144 = vmatpush1.bf16.msra.mxu0 %v856
      %1145 = vmatprep.subr.bf16.mxu0 0
      %1146 = vmatpush1.bf16.msra.mxu0 %v855
      %1147 = vmatprep.subr.bf16.mxu0 0
      %1148 = vmatpush2.bf16.msra.mxu0 0
      %1149 = vmatprep.subr.bf16.mxu0 0
      %1150 = vmatpush2.bf16.msra.mxu0 0
      %1151 = vmatprep.subr.bf16.mxu0 0
      %1152 = vmatpush2.bf16.msra.mxu0 0
      %1153 = vmatprep.subr.bf16.mxu0 0
      %1154 = vmatpush2.bf16.msra.mxu0 0
      %1155 = vmatprep.subr.bf16.mxu0 0
      %1156 = vmatpush2.bf16.msra.mxu0 0
      %1157 = vmatprep.subr.bf16.mxu0 0
      %1158 = vmatpush2.bf16.msra.mxu0 0
      %1159 = vmatprep.subr.bf16.mxu0 0
      %1160 = vmatpush2.bf16.msra.mxu0 0
      %1161 = vmatprep.subr.bf16.mxu0 0
      %1162 = vmatpush2.bf16.msra.mxu0 0
      %1163 = vmatprep.mubr.bf16.mxu0 0
      %1164 = vmatmul.mubr.bf16.gmra.mxu0 %v475
      %v1165 = vpop.f32.mrf.mxu0
      %v1166 = vadd.f32 %v1117, %v1165
      %v1167 = vpop.f32.mrf.mxu0
      %v1168 = vpop.f32.mrf.mxu0
      %v1169 = vadd.f32 %v1120, %v1168
      %v1170 = vpop.f32.mrf.mxu0
      %1171 = vmatprep.mubr.bf16.mxu0 0
      %1172 = vmatmul.mubr.bf16.gmra.mxu0 %v484
      %v1173 = vpop.f32.mrf.mxu0
      %v1174 = vadd.f32 %v1125, %v1173
      %v1175 = vpop.f32.mrf.mxu0
      %v1176 = vpop.f32.mrf.mxu0
      %v1177 = vadd.f32 %v1128, %v1176
      %v1178 = vpop.f32.mrf.mxu0
      %1179 = vdwg.mxu0
      %vm1180 = vcmask 523264
      %v1181 = vsel %vm1180, %v1166, 0.0
      %v1182 = vsel %vm1180, %v1169, 0.0
      %v1183 = vadd.f32 %v1181, %v1182
      %v1184 = vsel %vm1180, %v1174, 0.0
      %v1185 = vadd.f32 %v1183, %v1184
      %v1186 = vsel %vm1180, %v1177, 0.0
      %v1187 = vadd.f32 %v1185, %v1186
      %v1188 = vrot.slane %v1187, 4
      %v1189 = vadd.f32 %v1187, %v1188
      %v1190 = vrot.slane %v1189, 2
      %v1191 = vadd.f32 %v1189, %v1190
      %v1192 = vrot.slane %v1191, 1
      %v1193 = vadd.f32 %v1191, %v1192
      %v1194 = vrcp.pop 32.0
      %v1195 = vmul.f32 %v1193, %v1194
      %v1196 = vsub.f32 %v1166, %v1195
      %v1197 = vsub.f32 %v1169, %v1195
      %v1198 = vsub.f32 %v1174, %v1195
      %v1199 = vsub.f32 %v1177, %v1195
      %v1200 = vmul.f32 %v1196, %v1196
      %v1201 = vmul.f32 %v1197, %v1197
      %v1202 = vmul.f32 %v1198, %v1198
      %v1203 = vmul.f32 %v1199, %v1199
      %v1204 = vsel %vm1180, %v1200, 0.0
      %v1205 = vsel %vm1180, %v1201, 0.0
      %v1206 = vadd.f32 %v1204, %v1205
      %v1207 = vsel %vm1180, %v1202, 0.0
      %v1208 = vadd.f32 %v1206, %v1207
      %v1209 = vsel %vm1180, %v1203, 0.0
      %v1210 = vadd.f32 %v1208, %v1209
      %v1211 = vrot.slane %v1210, 4
      %v1212 = vadd.f32 %v1210, %v1211
      %v1213 = vrot.slane %v1212, 2
      %v1214 = vadd.f32 %v1212, %v1213
      %v1215 = vrot.slane %v1214, 1
      %v1216 = vadd.f32 %v1214, %v1215
      %v1217 = vmul.f32 %v1216, %v1194
      %v1218 = vld [vmem:[%s237] sm:$0x1]
      %v1219 = vadd.f32 %v1217, 1e-05
      %v1220 = vrsqrt.pop %v1219
      %v1221 = vmul.f32 %v1218, %v1220
      %v1222 = vld [vmem:[%s240] sm:$0x1]
      %v1223 = vmul.f32 %v1195, %v1221
      %v1224 = vsub.f32 %v1222, %v1223
      %v1226 = vlaneseq
      %v1227 = vshrl.u32 %v1226, 7
      %v1228 = vsub.s32 0, %v1227
      %v1229 = vrot.slane %v1221, %v1228
      %v1231 = vmul.f32 %v1166, %v1229
      %v1232 = vmul.f32 %v1169, %v1229
      %v1233 = vmul.f32 %v1174, %v1229
      %v1234 = vmul.f32 %v1177, %v1229
      %v1236 = vlaneseq
      %v1237 = vshrl.u32 %v1236, 7
      %v1238 = vsub.s32 0, %v1237
      %v1239 = vrot.slane %v1224, %v1238
      %v1241 = vadd.f32 %v1231, %v1239
      %v1242 = vadd.f32 %v1232, %v1239
      %v1243 = vadd.f32 %v1233, %v1239
      %v1244 = vadd.f32 %v1234, %v1239
      %v1245 = vmax.f32 %v1241, 0.0
      %v1246 = vmax.f32 %v1242, 0.0
      %v1247 = vmax.f32 %v1243, 0.0
      %v1248 = vmax.f32 %v1244, 0.0
      %v1249 = vpack.c.bf16 %v1246, %v1245
      %v1250 = vpack.c.bf16 %v1248, %v1247
      %v1253 = vunpack.c.l.b16 %v1249
      %v1254 = vunpack.c.h.b16 %v1249
      %v1255 = vunpack.c.l.b16 %v1250
      %v1256 = vunpack.c.h.b16 %v1250
      %v1257 = vpack.c.b16 %v1253, %v1253
      %v1258 = vpack.c.b16 %v1254, %v1254
      %v1259 = vpack.c.b16 %v1255, %v1255
      %v1260 = vpack.c.b16 %v1256, %v1256
      %vm1265 = vcmask 519168
      %1266 = vst.msk [vmem:[%s245] sm:$0xf] %vm1265, %v1257
      %1267 = vst.msk [vmem:[%s245 + $0x4] sm:$0xf] %vm1265, %v1258
      %1268 = vst.msk [vmem:[%s245 + $0x8] sm:$0xf] %vm1265, %v1259
      %1269 = vst.msk [vmem:[%s245 + $0xc] sm:$0xf] %vm1265, %v1260
      %p1270 = scmp.lt.s32.totalorder %s15, 1
      %s1271 = scalar_select %p1270, %s15, 1
      %s1272 = smul.addr %s1271, 4
      %s1273 = smul.addr %s1272, 4
      %s1274 = scalar_lea.vmem %s4, %s1273
      // Predicated region
      $region37: #{dqn_forward.5} parent=35 // pred_check
        %p1275 = pneg %p137
      $region38: #{dqn_forward.5} parent=35 // pred_check_branch
        %1277 = sbr.rel (%p1275) target = $region40
      $region39: #{dqn_forward.5} parent=35 // pred_region
        _
      $region40: #{dqn_forward.5} parent=35 // pred_fallthru
        _
    $region36: #{dqn_forward.5} parent=5 // pred_fallthru
      _
    %p1278 = scmp.le.s32.totalorder 2, %s10
    // Predicated region
    $region41: #{dqn_forward.5} parent=5 // pred_check
      %p1279 = pneg %p1278
    $region42: #{dqn_forward.5} parent=5 // pred_check_branch
      %1281 = sbr.rel (%p1279) target = $region44
    $region43: #{dqn_forward.5} parent=5 // pred_region
      %s1282 = ssub.s32 %s10, 2
      // Predicated region
      $region45: #{dqn_forward.5} parent=43 // pred_check
        %p1283 = pneg %p143
      $region46: #{dqn_forward.5} parent=43 // pred_check_branch
        %1285 = sbr.rel (%p1283) target = $region48
      $region47: #{dqn_forward.5} parent=43 // pred_region
        %p1286 = scmp.lt.s32.totalorder %s16, 1
        %s1287 = scalar_select %p1286, %s16, 1
        %s1288 = smul.addr %s1287, 4
        %s1289 = smul.addr %s1288, 4
        %s1290 = scalar_lea.vmem %s4, %s1289
      $region48: #{dqn_forward.5} parent=43 // pred_fallthru
        _
    $region44: #{dqn_forward.5} parent=5 // pred_fallthru
      _
  $region6: #{dqn_forward.5} parent=0 // loop_footer
    %s14 = sadd.s32 1, %s10
  $region7: #{dqn_forward.5} parent=0 // loop_footer_branch
    %9 = sbr.rel target = $region3
  $region8: #{dqn_forward.5} parent=0 // loop_exit
    _

// kernel: squeeze.2
$region0: #{squeeze.2}
  %s0 = inlined_call_operand.vmem [shape: bf16[1,8,16], index: 0, kind: input, shape index: {}]
  %s1 = inlined_call_operand.vmem [shape: bf16[2,64], index: 1, kind: output, shape index: {}]
  $region1: #{squeeze.2} parent=0
    #allocation0 [shape = 'u8[4096]{0}', space=vmem, size = 0x1000, scoped, tag = 'scoped mem for output reshape']
    #allocation1 [shape = 'u8[4096]{0}', space=vmem, size = 0x1000, scoped, tag = 'scoped mem for input reshape']
    %s3 = smul.u32 4, 2
    %s4 = sshll.u32 1, %s3
    %s5 = ssub.s32 %s4, 1
    %s6 = sshrl.u32 %s5, 1
    %s7 = sor.u32 %s5, %s6
    %s8 = sand.u32 %s7, 85
    %s9 = sshrl.u32 %s8, 1
    %s10 = sor.u32 %s8, %s9
    %s11 = sand.u32 51, %s10
    %s12 = sshrl.u32 %s11, 2
    %s13 = sor.u32 %s11, %s12
    %s14 = sand.u32 15, %s13
    %v15 = vld [vmem:[%s0] sm:%s14]
    %v16 = vunpack.c.l.bf16 %v15
    %v17 = vunpack.c.h.bf16 %v15
    %18 = vst [vmem:[#allocation1] sm:%s5] %v16
    %s19 = smov 3
    %v20 = vld [vmem:[#allocation1] ss:$4 sm:%s19]
    %vm21 = vcmask 130048
    %22 = vst.msk [vmem:[#allocation0] sm:$0x3] %vm21, %v20
    %s23 = scalar_lea.vmem [#allocation1], 3
    %s24 = smov 3
    %v25 = vld [vmem:[%s23] ss:$4 sm:%s24]
    %26 = vrot.lane.b32.xlu0 %v25, 48
    %v27 = vpop.permute.xlu0 %26
    %vm28 = vcmask 523648
    %29 = vst.msk [vmem:[#allocation0] sm:$0x3] %vm28, %v27
    %s30 = scalar_lea.vmem [#allocation1], 2
    %s31 = smov 3
    %v32 = vld [vmem:[%s30] ss:$4 sm:%s31]
    %33 = vrot.lane.b32.xlu0 %v32, 32
    %v34 = vpop.permute.xlu0 %33
    %vm35 = vcmask 392448
    %36 = vst.msk [vmem:[#allocation0] sm:$0x3] %vm35, %v34
    %s37 = scalar_lea.vmem [#allocation1], 1
    %s38 = smov 3
    %v39 = vld [vmem:[%s37] ss:$4 sm:%s38]
    %40 = vrot.lane.b32.xlu0 %v39, 16
    %v41 = vpop.permute.xlu0 %40
    %vm42 = vcmask 261248
    %43 = vst.msk [vmem:[#allocation0] sm:$0x3] %vm42, %v41
    %s45 = smul.u32 1, 2
    %s46 = sshll.u32 1, %s45
    %s47 = ssub.s32 %s46, 1
    %s48 = sshrl.u32 %s45, 1
    %v49 = vld [vmem:[#allocation0] sm:%s47]
    %v50 = vpack.c.bf16 0.0, %v49
    %s51 = sshll.u32 1, %s48
    %s52 = ssub.s32 %s51, 1
    %53 = vst [vmem:[%s1] sm:%s52] %v50

// kernel: squeeze.3
$region0: #{squeeze.3}
  %s0 = inlined_call_operand.vmem [shape: bf16[1,2,2,2,16], index: 0, kind: input, shape index: {}]
  %s1 = inlined_call_operand.vmem [shape: bf16[2,64], index: 1, kind: output, shape index: {}]
  $region1: #{squeeze.3} parent=0
    #allocation0 [shape = 'u8[4096]{0}', space=vmem, size = 0x1000, scoped, tag = 'scoped mem for output reshape']
    #allocation1 [shape = 'u8[16384]{0}', space=vmem, size = 0x4000, scoped, tag = 'scoped mem for input reshape']
    %s3 = smul.u32 1, 2
    %s4 = sshll.u32 1, %s3
    %s5 = ssub.s32 %s4, 1
    %s6 = smul.addr 1, 3
    %s7 = scalar_lea.vmem %s0, %s6
    %s8 = sshrl.u32 %s5, 1
    %s9 = sor.u32 %s5, %s8
    %s10 = sand.u32 %s9, 85
    %s11 = sshrl.u32 %s10, 1
    %s12 = sor.u32 %s10, %s11
    %s13 = sand.u32 51, %s12
    %s14 = sshrl.u32 %s13, 2
    %s15 = sor.u32 %s13, %s14
    %s16 = sand.u32 15, %s15
    %v17 = vld [vmem:[%s7] sm:%s16]
    %v18 = vunpack.c.l.bf16 %v17
    %v19 = vunpack.c.h.bf16 %v17
    %s20 = scalar_lea.vmem [#allocation1], 24
    %21 = vst [vmem:[%s20] sm:%s5] %v18
    %s22 = smul.addr 1, 2
    %s23 = scalar_lea.vmem %s0, %s22
    %s24 = sshrl.u32 %s5, 1
    %s25 = sor.u32 %s5, %s24
    %s26 = sand.u32 %s25, 85
    %s27 = sshrl.u32 %s26, 1
    %s28 = sor.u32 %s26, %s27
    %s29 = sand.u32 51, %s28
    %s30 = sshrl.u32 %s29, 2
    %s31 = sor.u32 %s29, %s30
    %s32 = sand.u32 15, %s31
    %v33 = vld [vmem:[%s23] sm:%s32]
    %v34 = vunpack.c.l.bf16 %v33
    %v35 = vunpack.c.h.bf16 %v33
    %s36 = scalar_lea.vmem [#allocation1], 16
    %37 = vst [vmem:[%s36] sm:%s5] %v34
    %s38 = scalar_lea.vmem %s0, 1
    %s39 = sshrl.u32 %s5, 1
    %s40 = sor.u32 %s5, %s39
    %s41 = sand.u32 %s40, 85
    %s42 = sshrl.u32 %s41, 1
    %s43 = sor.u32 %s41, %s42
    %s44 = sand.u32 51, %s43
    %s45 = sshrl.u32 %s44, 2
    %s46 = sor.u32 %s44, %s45
    %s47 = sand.u32 15, %s46
    %v48 = vld [vmem:[%s38] sm:%s47]
    %v49 = vunpack.c.l.bf16 %v48
    %v50 = vunpack.c.h.bf16 %v48
    %s51 = scalar_lea.vmem [#allocation1], 8
    %52 = vst [vmem:[%s51] sm:%s5] %v49
    %s53 = sshrl.u32 %s5, 1
    %s54 = sor.u32 %s5, %s53
    %s55 = sand.u32 %s54, 85
    %s56 = sshrl.u32 %s55, 1
    %s57 = sor.u32 %s55, %s56
    %s58 = sand.u32 51, %s57
    %s59 = sshrl.u32 %s58, 2
    %s60 = sor.u32 %s58, %s59
    %s61 = sand.u32 15, %s60
    %v62 = vld [vmem:[%s0] sm:%s61]
    %v63 = vunpack.c.l.bf16 %v62
    %v64 = vunpack.c.h.bf16 %v62
    %65 = vst [vmem:[#allocation1] sm:%s5] %v63
    %s66 = smov 3
    %v67 = vld [vmem:[#allocation1] ss:$16 sm:%s66]
    %vm68 = vcmask 130048
    %69 = vst.msk [vmem:[#allocation0] sm:$0x3] %vm68, %v67
    %s70 = scalar_lea.vmem [#allocation1], 9
    %s71 = smov 3
    %v72 = vld [vmem:[%s70] ss:$16 sm:%s71]
    %73 = vrot.lane.b32.xlu0 %v72, 48
    %v74 = vpop.permute.xlu0 %73
    %vm75 = vcmask 523648
    %76 = vst.msk [vmem:[#allocation0] sm:$0x3] %vm75, %v74
    %s77 = scalar_lea.vmem [#allocation1], 8
    %s78 = smov 3
    %v79 = vld [vmem:[%s77] ss:$16 sm:%s78]
    %80 = vrot.lane.b32.xlu0 %v79, 32
    %v81 = vpop.permute.xlu0 %80
    %vm82 = vcmask 392448
    %83 = vst.msk [vmem:[#allocation0] sm:$0x3] %vm82, %v81
    %s84 = scalar_lea.vmem [#allocation1], 1
    %s85 = smov 3
    %v86 = vld [vmem:[%s84] ss:$16 sm:%s85]
    %87 = vrot.lane.b32.xlu0 %v86, 16
    %v88 = vpop.permute.xlu0 %87
    %vm89 = vcmask 261248
    %90 = vst.msk [vmem:[#allocation0] sm:$0x3] %vm89, %v88
    %s92 = smul.u32 1, 2
    %s93 = sshll.u32 1, %s92
    %s94 = ssub.s32 %s93, 1
    %s95 = sshrl.u32 %s92, 1
    %v96 = vld [vmem:[#allocation0] sm:%s94]
    %v97 = vpack.c.bf16 0.0, %v96
    %s98 = sshll.u32 1, %s95
    %s99 = ssub.s32 %s98, 1
    %100 = vst [vmem:[%s1] sm:%s99] %v97

// kernel: dqn_forward.6
$region0: #{dqn_forward.6}
  #allocation0 [shape = 'u32[]', space=smem, size = 0x4, offset = 0x4, fixed_abs, tag = 'smem constant byte address 0x4 - core index']
  #allocation1 [shape = 'u32[144,128]{1,0:T(1,128)}', space=vmem, size = 0x12000, scoped, tag = 'internal scratch']
  %s0 = inlined_call_operand.vmem [shape: bf16[2,8,576], index: 0, kind: input, shape index: {}]
  %s1 = inlined_call_operand.vmem [shape: bf16[2,576,16], index: 1, kind: input, shape index: {}]
  %s2 = inlined_call_operand.vmem [shape: f32[2,1,16], index: 2, kind: input, shape index: {}]
  %s3 = inlined_call_operand.vmem [shape: f32[2,1,16], index: 3, kind: input, shape index: {}]
  %s4 = inlined_call_operand.vmem [shape: bf16[2,8,16], index: 4, kind: output, shape index: {}]
  %s5 = sld [smem:[#allocation0]]
  $region49: #{dqn_forward.6} parent=0
    _
  %s7 = ssub.s32 1, %s5
  %s8 = scalar_select 0, %s7, %s5
  loop: start=0, step=1, limit=4
  $region2: #{dqn_forward.6} parent=0 // loop_pre_header
    _
  $region3: #{dqn_forward.6} parent=0 // loop_header
    %s10 = sphi 0, %s14
    %p11 = scmp.ge.s32.totalorder %s10, 4
    %s20 = sphi 0, %s22
    %s23 = sphi 0, %s20
    %s24 = sphi 0, %s23
    %s40 = sphi 0, %s24
    %s46 = sphi 0, %s48
    %s49 = sphi 0, %s46
    %s50 = sphi 0, %s49
    %s66 = sphi 0, %s50
    %s72 = sphi 0, %s74
    %s75 = sphi 0, %s72
    %s76 = sphi 0, %s75
    %s92 = sphi 0, %s76
    %s98 = sphi 0, %s100
    %s101 = sphi 0, %s98
    %s102 = sphi 0, %s101
    %s118 = sphi 0, %s102
    %s124 = sphi 0, %s126
    %s127 = sphi 0, %s124
    %s128 = sphi 0, %s127
    %s144 = sphi 0, %s128
  $region4: #{dqn_forward.6} parent=0 // loop_header_branch
    %13 = sbr.rel (%p11) target = $region8
  $region5: #{dqn_forward.6} parent=0 // loop_body
    %s15 = ssub.s32 %s10, 1
    %s16 = ssub.s32 %s10, 2
    %s17 = sadd.s32 %s10, 1
    %s18 = ssub.s32 %s10, %s17
    %p19 = scmp.eq.s32.totalorder %s18, 0
    %s21 = sadd.s32 %s20, 1
    %s22 = scalar_select %p19, %s20, %s21
    %p25 = pneg %p19
    %p26 = scmp.eq.s32.totalorder %s10, 1
    %p27 = por %p25, %p26
    %p28 = scmp.ne.s32.totalorder %s20, %s23
    %p29 = scmp.eq.s32.totalorder %s10, 0
    %p30 = por %p28, %p29
    %p31 = scmp.ne.s32.totalorder %s20, %s23
    %p32 = scmp.eq.s32.totalorder %s15, 1
    %p33 = por %p31, %p32
    %p34 = scmp.ne.s32.totalorder %s23, %s24
    %p35 = scmp.eq.s32.totalorder %s15, 0
    %p36 = por %p34, %p35
    %p37 = scmp.ne.s32.totalorder %s23, %s24
    %p38 = scmp.eq.s32.totalorder %s16, 1
    %p39 = por %p37, %p38
    %p41 = scmp.ne.s32.totalorder %s24, %s40
    %p42 = scmp.eq.s32.totalorder %s16, 0
    %p43 = por %p41, %p42
    %s44 = ssub.s32 %s10, %s17
    %p45 = scmp.eq.s32.totalorder %s44, 0
    %s47 = sadd.s32 %s46, 1
    %s48 = scalar_select %p45, %s46, %s47
    %p51 = pneg %p45
    %p52 = scmp.eq.s32.totalorder %s10, 1
    %p53 = por %p51, %p52
    %p54 = scmp.ne.s32.totalorder %s46, %s49
    %p55 = scmp.eq.s32.totalorder %s10, 0
    %p56 = por %p54, %p55
    %p57 = scmp.ne.s32.totalorder %s46, %s49
    %p58 = scmp.eq.s32.totalorder %s15, 1
    %p59 = por %p57, %p58
    %p60 = scmp.ne.s32.totalorder %s49, %s50
    %p61 = scmp.eq.s32.totalorder %s15, 0
    %p62 = por %p60, %p61
    %p63 = scmp.ne.s32.totalorder %s49, %s50
    %p64 = scmp.eq.s32.totalorder %s16, 1
    %p65 = por %p63, %p64
    %p67 = scmp.ne.s32.totalorder %s50, %s66
    %p68 = scmp.eq.s32.totalorder %s16, 0
    %p69 = por %p67, %p68
    %s70 = ssub.s32 %s10, %s17
    %p71 = scmp.eq.s32.totalorder %s70, 0
    %s73 = sadd.s32 %s72, 1
    %s74 = scalar_select %p71, %s72, %s73
    %p77 = pneg %p71
    %p78 = scmp.eq.s32.totalorder %s10, 1
    %p79 = por %p77, %p78
    %p80 = scmp.ne.s32.totalorder %s72, %s75
    %p81 = scmp.eq.s32.totalorder %s10, 0
    %p82 = por %p80, %p81
    %p83 = scmp.ne.s32.totalorder %s72, %s75
    %p84 = scmp.eq.s32.totalorder %s15, 1
    %p85 = por %p83, %p84
    %p86 = scmp.ne.s32.totalorder %s75, %s76
    %p87 = scmp.eq.s32.totalorder %s15, 0
    %p88 = por %p86, %p87
    %p89 = scmp.ne.s32.totalorder %s75, %s76
    %p90 = scmp.eq.s32.totalorder %s16, 1
    %p91 = por %p89, %p90
    %p93 = scmp.ne.s32.totalorder %s76, %s92
    %p94 = scmp.eq.s32.totalorder %s16, 0
    %p95 = por %p93, %p94
    %s96 = ssub.s32 %s10, %s17
    %p97 = scmp.eq.s32.totalorder %s96, 0
    %s99 = sadd.s32 %s98, 1
    %s100 = scalar_select %p97, %s98, %s99
    %p103 = pneg %p97
    %p104 = scmp.eq.s32.totalorder %s10, 1
    %p105 = por %p103, %p104
    %p106 = scmp.ne.s32.totalorder %s98, %s101
    %p107 = scmp.eq.s32.totalorder %s10, 0
    %p108 = por %p106, %p107
    %p109 = scmp.ne.s32.totalorder %s98, %s101
    %p110 = scmp.eq.s32.totalorder %s15, 1
    %p111 = por %p109, %p110
    %p112 = scmp.ne.s32.totalorder %s101, %s102
    %p113 = scmp.eq.s32.totalorder %s15, 0
    %p114 = por %p112, %p113
    %p115 = scmp.ne.s32.totalorder %s101, %s102
    %p116 = scmp.eq.s32.totalorder %s16, 1
    %p117 = por %p115, %p116
    %p119 = scmp.ne.s32.totalorder %s102, %s118
    %p120 = scmp.eq.s32.totalorder %s16, 0
    %p121 = por %p119, %p120
    %s122 = ssub.s32 %s10, %s17
    %p123 = scmp.eq.s32.totalorder %s122, 0
    %s125 = sadd.s32 %s124, 1
    %s126 = scalar_select %p123, %s124, %s125
    %p129 = pneg %p123
    %p130 = scmp.eq.s32.totalorder %s10, 1
    %p131 = por %p129, %p130
    %p132 = scmp.ne.s32.totalorder %s124, %s127
    %p133 = scmp.eq.s32.totalorder %s10, 0
    %p134 = por %p132, %p133
    %p135 = scmp.ne.s32.totalorder %s124, %s127
    %p136 = scmp.eq.s32.totalorder %s15, 1
    %p137 = por %p135, %p136
    %p138 = scmp.ne.s32.totalorder %s127, %s128
    %p139 = scmp.eq.s32.totalorder %s15, 0
    %p140 = por %p138, %p139
    %p141 = scmp.ne.s32.totalorder %s127, %s128
    %p142 = scmp.eq.s32.totalorder %s16, 1
    %p143 = por %p141, %p142
    %p145 = scmp.ne.s32.totalorder %s128, %s144
    %p146 = scmp.eq.s32.totalorder %s16, 0
    %p147 = por %p145, %p146
    %p148 = scmp.le.s32.totalorder 1, %s10
    %p149 = scmp.lt.s32.totalorder %s10, 3
    %p150 = pnand %p148, %p149
    %p151 = pneg %p150
    // Predicated region
    $region9: #{dqn_forward.6} parent=5 // pred_check
      _
    $region10: #{dqn_forward.6} parent=5 // pred_check_branch
      %153 = sbr.rel (%p150) target = $region12
    $region11: #{dqn_forward.6} parent=5 // pred_region
      %s154 = ssub.s32 %s10, 1
    $region12: #{dqn_forward.6} parent=5 // pred_fallthru
      _
    %p155 = scmp.lt.s32.totalorder %s10, 2
    // Predicated region
    $region13: #{dqn_forward.6} parent=5 // pred_check
      %p156 = pneg %p155
    $region14: #{dqn_forward.6} parent=5 // pred_check_branch
      %158 = sbr.rel (%p156) target = $region16
    $region15: #{dqn_forward.6} parent=5 // pred_region
      // Predicated region
      $region17: #{dqn_forward.6} parent=15 // pred_check
        %p159 = pneg %p30
      $region18: #{dqn_forward.6} parent=15 // pred_check_branch
        %161 = sbr.rel (%p159) target = $region20
      $region19: #{dqn_forward.6} parent=15 // pred_region
        %p162 = scmp.lt.s32.totalorder %s10, 1
        %s163 = scalar_select %p162, %s10, 1
        %s164 = smul.addr %s163, 5
        %s165 = smul.addr %s164, 4
        %s166 = scalar_lea.vmem %s0, %s165
      $region20: #{dqn_forward.6} parent=15 // pred_fallthru
        _
      // Predicated region
      $region21: #{dqn_forward.6} parent=15 // pred_check
        %p167 = pneg %p56
      $region22: #{dqn_forward.6} parent=15 // pred_check_branch
        %169 = sbr.rel (%p167) target = $region24
      $region23: #{dqn_forward.6} parent=15 // pred_region
        %p170 = scmp.lt.s32.totalorder %s10, 1
        %s171 = scalar_select %p170, %s10, 1
        %s172 = smul.addr %s171, 72
        %s173 = smul.addr %s172, 4
        %s174 = scalar_lea.vmem %s1, %s173
      $region24: #{dqn_forward.6} parent=15 // pred_fallthru
        _
      // Predicated region
      $region25: #{dqn_forward.6} parent=15 // pred_check
        %p175 = pneg %p82
      $region26: #{dqn_forward.6} parent=15 // pred_check_branch
        %177 = sbr.rel (%p175) target = $region28
      $region27: #{dqn_forward.6} parent=15 // pred_region
        %p178 = scmp.lt.s32.totalorder %s10, 1
        %s179 = scalar_select %p178, %s10, 1
        %s180 = scalar_lea.vmem %s2, %s179
      $region28: #{dqn_forward.6} parent=15 // pred_fallthru
        _
      // Predicated region
      $region29: #{dqn_forward.6} parent=15 // pred_check
        %p181 = pneg %p108
      $region30: #{dqn_forward.6} parent=15 // pred_check_branch
        %183 = sbr.rel (%p181) target = $region32
      $region31: #{dqn_forward.6} parent=15 // pred_region
        %p184 = scmp.lt.s32.totalorder %s10, 1
        %s185 = scalar_select %p184, %s10, 1
        %s186 = scalar_lea.vmem %s3, %s185
      $region32: #{dqn_forward.6} parent=15 // pred_fallthru
        _
    $region16: #{dqn_forward.6} parent=5 // pred_fallthru
      _
    %p187 = scmp.le.s32.totalorder 1, %s10
    %p188 = scmp.lt.s32.totalorder %s10, 3
    %p189 = pnand %p187, %p188
    %p190 = pneg %p189
    // Predicated region
    $region33: #{dqn_forward.6} parent=5 // pred_check
      _
    $region34: #{dqn_forward.6} parent=5 // pred_check_branch
      %192 = sbr.rel (%p189) target = $region36
    $region35: #{dqn_forward.6} parent=5 // pred_region
      %s193 = ssub.s32 %s10, 1
      %p194 = scmp.lt.s32.totalorder %s15, 1
      %s195 = scalar_select %p194, %s15, 1
      %s196 = smul.addr %s195, 5
      %s197 = smul.addr %s196, 4
      %s198 = scalar_lea.vmem %s0, %s197
      %p199 = pneg %p36
      %p200 = pneg %p33
      %p201 = scmp.lt.s32.totalorder %s15, 1
      %s202 = scalar_select %p201, %s15, 1
      %s203 = smul.addr %s202, 72
      %s204 = smul.addr %s203, 4
      %s205 = scalar_lea.vmem %s1, %s204
      %p206 = pneg %p62
      %p207 = pneg %p59
      %p208 = scmp.lt.s32.totalorder %s15, 1
      %s209 = scalar_select %p208, %s15, 1
      %s210 = scalar_lea.vmem %s2, %s209
      %p211 = pneg %p88
      %p212 = pneg %p85
      %p213 = scmp.lt.s32.totalorder %s15, 1
      %s214 = scalar_select %p213, %s15, 1
      %s215 = scalar_lea.vmem %s3, %s214
      %p216 = pneg %p114
      %p217 = pneg %p111
      %p218 = pneg %p140
      %p219 = pneg %p137
      %p220 = scmp.lt.s32.totalorder %s15, 1
      %s221 = scalar_select %p220, %s15, 1
      %s222 = smul.addr %s221, 4
      %s223 = scalar_lea.vmem %s4, %s222
      %p224 = scmp.lt.s32.totalorder %s15, 1
      %s225 = scalar_select %p224, %s15, 1
      %s226 = smul.addr %s225, 5
      %s227 = smul.addr %s226, 4
      %s228 = scalar_lea.vmem %s0, %s227
      %p229 = scmp.lt.s32.totalorder %s15, 1
      %s230 = scalar_select %p229, %s15, 1
      %s231 = smul.addr %s230, 72
      %s232 = smul.addr %s231, 4
      %s233 = scalar_lea.vmem %s1, %s232
      %p234 = scmp.lt.s32.totalorder %s15, 1
      %s235 = scalar_select %p234, %s15, 1
      %s236 = scalar_lea.vmem %s2, %s235
      %p237 = scmp.lt.s32.totalorder %s15, 1
      %s238 = scalar_select %p237, %s15, 1
      %s239 = scalar_lea.vmem %s3, %s238
      %p240 = scmp.lt.s32.totalorder %s15, 1
      %s241 = scalar_select %p240, %s15, 1
      %s242 = smul.addr %s241, 4
      %s243 = scalar_lea.vmem %s4, %s242
      %v245 = vld [vmem:[%s228] sm:$0xff]
      %v246 = vld [vmem:[%s228 + $0x8] sm:$0xff]
      %v247 = vld [vmem:[%s228 + $0x10] sm:$0xf]
      %v248 = vld [vmem:[%s233] sm:$0xf]
      %v249 = vld [vmem:[%s233 + $0x4] sm:$0xf]
      %v250 = vld [vmem:[%s233 + $0x8] sm:$0xf]
      %v251 = vld [vmem:[%s233 + $0xc] sm:$0xf]
      %v252 = vld [vmem:[%s233 + $0x10] sm:$0xf]
      %v253 = vld [vmem:[%s233 + $0x14] sm:$0xf]
      %v254 = vld [vmem:[%s233 + $0x18] sm:$0xf]
      %v255 = vld [vmem:[%s233 + $0x1c] sm:$0xf]
      %v256 = vld [vmem:[%s233 + $0x20] sm:$0xf]
      %v257 = vld [vmem:[%s233 + $0x24] sm:$0xf]
      %v258 = vld [vmem:[%s233 + $0x28] sm:$0xf]
      %v259 = vld [vmem:[%s233 + $0x2c] sm:$0xf]
      %v260 = vld [vmem:[%s233 + $0x30] sm:$0xf]
      %v261 = vld [vmem:[%s233 + $0x34] sm:$0xf]
      %v262 = vld [vmem:[%s233 + $0x38] sm:$0xf]
      %v263 = vld [vmem:[%s233 + $0x3c] sm:$0xf]
      %v264 = vld [vmem:[%s233 + $0x40] sm:$0xf]
      %v265 = vld [vmem:[%s233 + $0x44] sm:$0xf]
      %v266 = vld [vmem:[%s233 + $0x48] sm:$0xf]
      %v267 = vld [vmem:[%s233 + $0x4c] sm:$0xf]
      %v268 = vld [vmem:[%s233 + $0x50] sm:$0xf]
      %v269 = vld [vmem:[%s233 + $0x54] sm:$0xf]
      %v270 = vld [vmem:[%s233 + $0x58] sm:$0xf]
      %v271 = vld [vmem:[%s233 + $0x5c] sm:$0xf]
      %v272 = vld [vmem:[%s233 + $0x60] sm:$0xf]
      %v273 = vld [vmem:[%s233 + $0x64] sm:$0xf]
      %v274 = vld [vmem:[%s233 + $0x68] sm:$0xf]
      %v275 = vld [vmem:[%s233 + $0x6c] sm:$0xf]
      %v276 = vld [vmem:[%s233 + $0x70] sm:$0xf]
      %v277 = vld [vmem:[%s233 + $0x74] sm:$0xf]
      %v278 = vld [vmem:[%s233 + $0x78] sm:$0xf]
      %v279 = vld [vmem:[%s233 + $0x7c] sm:$0xf]
      %v280 = vld [vmem:[%s233 + $0x80] sm:$0xf]
      %v281 = vld [vmem:[%s233 + $0x84] sm:$0xf]
      %v282 = vld [vmem:[%s233 + $0x88] sm:$0xf]
      %v283 = vld [vmem:[%s233 + $0x8c] sm:$0xf]
      %v284 = vld [vmem:[%s233 + $0x90] sm:$0xf]
      %v285 = vld [vmem:[%s233 + $0x94] sm:$0xf]
      %v286 = vld [vmem:[%s233 + $0x98] sm:$0xf]
      %v287 = vld [vmem:[%s233 + $0x9c] sm:$0xf]
      %v288 = vld [vmem:[%s233 + $0xa0] sm:$0xf]
      %v289 = vld [vmem:[%s233 + $0xa4] sm:$0xf]
      %v290 = vld [vmem:[%s233 + $0xa8] sm:$0xf]
      %v291 = vld [vmem:[%s233 + $0xac] sm:$0xf]
      %v292 = vld [vmem:[%s233 + $0xb0] sm:$0xf]
      %v293 = vld [vmem:[%s233 + $0xb4] sm:$0xf]
      %v294 = vld [vmem:[%s233 + $0xb8] sm:$0xf]
      %v295 = vld [vmem:[%s233 + $0xbc] sm:$0xf]
      %v296 = vld [vmem:[%s233 + $0xc0] sm:$0xf]
      %v297 = vld [vmem:[%s233 + $0xc4] sm:$0xf]
      %v298 = vld [vmem:[%s233 + $0xc8] sm:$0xf]
      %v299 = vld [vmem:[%s233 + $0xcc] sm:$0xf]
      %v300 = vld [vmem:[%s233 + $0xd0] sm:$0xf]
      %v301 = vld [vmem:[%s233 + $0xd4] sm:$0xf]
      %v302 = vld [vmem:[%s233 + $0xd8] sm:$0xf]
      %v303 = vld [vmem:[%s233 + $0xdc] sm:$0xf]
      %v304 = vld [vmem:[%s233 + $0xe0] sm:$0xf]
      %v305 = vld [vmem:[%s233 + $0xe4] sm:$0xf]
      %v306 = vld [vmem:[%s233 + $0xe8] sm:$0xf]
      %v307 = vld [vmem:[%s233 + $0xec] sm:$0xf]
      %v308 = vld [vmem:[%s233 + $0xf0] sm:$0xf]
      %v309 = vld [vmem:[%s233 + $0xf4] sm:$0xf]
      %v310 = vld [vmem:[%s233 + $0xf8] sm:$0xf]
      %v311 = vld [vmem:[%s233 + $0xfc] sm:$0xf]
      %v312 = vld [vmem:[%s233 + $0x100] sm:$0xf]
      %v313 = vld [vmem:[%s233 + $0x104] sm:$0xf]
      %v314 = vld [vmem:[%s233 + $0x108] sm:$0xf]
      %v315 = vld [vmem:[%s233 + $0x10c] sm:$0xf]
      %v316 = vld [vmem:[%s233 + $0x110] sm:$0xf]
      %v317 = vld [vmem:[%s233 + $0x114] sm:$0xf]
      %v318 = vld [vmem:[%s233 + $0x118] sm:$0xf]
      %v319 = vld [vmem:[%s233 + $0x11c] sm:$0xf]
      %v323 = vunpack.c.l.b16 %v245
      %v324 = vunpack.c.h.b16 %v245
      %v325 = vunpack.c.l.b16 %v246
      %v326 = vunpack.c.h.b16 %v246
      %v327 = vunpack.c.l.b16 %v247
      %v328 = vpack.c.b16 %v323, %v323
      %v329 = vpack.c.b16 %v324, %v324
      %v330 = vpack.c.b16 %v325, %v325
      %v331 = vpack.c.b16 %v326, %v326
      %v332 = vpack.c.b16 %v327, %v327
      %v409 = vunpack.c.l.b16 %v248
      %v410 = vunpack.c.l.b16 %v249
      %v411 = vunpack.c.l.b16 %v250
      %v412 = vunpack.c.l.b16 %v251
      %v413 = vunpack.c.l.b16 %v252
      %v414 = vunpack.c.l.b16 %v253
      %v415 = vunpack.c.l.b16 %v254
      %v416 = vunpack.c.l.b16 %v255
      %v417 = vunpack.c.l.b16 %v256
      %v418 = vunpack.c.l.b16 %v257
      %v419 = vunpack.c.l.b16 %v258
      %v420 = vunpack.c.l.b16 %v259
      %v421 = vunpack.c.l.b16 %v260
      %v422 = vunpack.c.l.b16 %v261
      %v423 = vunpack.c.l.b16 %v262
      %v424 = vunpack.c.l.b16 %v263
      %v425 = vunpack.c.l.b16 %v264
      %v426 = vunpack.c.l.b16 %v265
      %v427 = vunpack.c.l.b16 %v266
      %v428 = vunpack.c.l.b16 %v267
      %v429 = vunpack.c.l.b16 %v268
      %v430 = vunpack.c.l.b16 %v269
      %v431 = vunpack.c.l.b16 %v270
      %v432 = vunpack.c.l.b16 %v271
      %v433 = vunpack.c.l.b16 %v272
      %v434 = vunpack.c.l.b16 %v273
      %v435 = vunpack.c.l.b16 %v274
      %v436 = vunpack.c.l.b16 %v275
      %v437 = vunpack.c.l.b16 %v276
      %v438 = vunpack.c.l.b16 %v277
      %v439 = vunpack.c.l.b16 %v278
      %v440 = vunpack.c.l.b16 %v279
      %v441 = vunpack.c.l.b16 %v280
      %v442 = vunpack.c.l.b16 %v281
      %v443 = vunpack.c.l.b16 %v282
      %v444 = vunpack.c.l.b16 %v283
      %v445 = vunpack.c.l.b16 %v284
      %v446 = vunpack.c.l.b16 %v285
      %v447 = vunpack.c.l.b16 %v286
      %v448 = vunpack.c.l.b16 %v287
      %v449 = vunpack.c.l.b16 %v288
      %v450 = vunpack.c.l.b16 %v289
      %v451 = vunpack.c.l.b16 %v290
      %v452 = vunpack.c.l.b16 %v291
      %v453 = vunpack.c.l.b16 %v292
      %v454 = vunpack.c.l.b16 %v293
      %v455 = vunpack.c.l.b16 %v294
      %v456 = vunpack.c.l.b16 %v295
      %v457 = vunpack.c.l.b16 %v296
      %v458 = vunpack.c.l.b16 %v297
      %v459 = vunpack.c.l.b16 %v298
      %v460 = vunpack.c.l.b16 %v299
      %v461 = vunpack.c.l.b16 %v300
      %v462 = vunpack.c.l.b16 %v301
      %v463 = vunpack.c.l.b16 %v302
      %v464 = vunpack.c.l.b16 %v303
      %v465 = vunpack.c.l.b16 %v304
      %v466 = vunpack.c.l.b16 %v305
      %v467 = vunpack.c.l.b16 %v306
      %v468 = vunpack.c.l.b16 %v307
      %v469 = vunpack.c.l.b16 %v308
      %v470 = vunpack.c.l.b16 %v309
      %v471 = vunpack.c.l.b16 %v310
      %v472 = vunpack.c.l.b16 %v311
      %v473 = vunpack.c.l.b16 %v312
      %v474 = vunpack.c.l.b16 %v313
      %v475 = vunpack.c.l.b16 %v314
      %v476 = vunpack.c.l.b16 %v315
      %v477 = vunpack.c.l.b16 %v316
      %v478 = vunpack.c.l.b16 %v317
      %v479 = vunpack.c.l.b16 %v318
      %v480 = vunpack.c.l.b16 %v319
      %v481 = vpack.c.b16 %v410, %v409
      %v482 = vpack.c.b16 %v412, %v411
      %v483 = vpack.c.b16 %v414, %v413
      %v484 = vpack.c.b16 %v416, %v415
      %v485 = vpack.c.b16 %v418, %v417
      %v486 = vpack.c.b16 %v420, %v419
      %v487 = vpack.c.b16 %v422, %v421
      %v488 = vpack.c.b16 %v424, %v423
      %v489 = vpack.c.b16 %v426, %v425
      %v490 = vpack.c.b16 %v428, %v427
      %v491 = vpack.c.b16 %v430, %v429
      %v492 = vpack.c.b16 %v432, %v431
      %v493 = vpack.c.b16 %v434, %v433
      %v494 = vpack.c.b16 %v436, %v435
      %v495 = vpack.c.b16 %v438, %v437
      %v496 = vpack.c.b16 %v440, %v439
      %v497 = vpack.c.b16 %v442, %v441
      %v498 = vpack.c.b16 %v444, %v443
      %v499 = vpack.c.b16 %v446, %v445
      %v500 = vpack.c.b16 %v448, %v447
      %v501 = vpack.c.b16 %v450, %v449
      %v502 = vpack.c.b16 %v452, %v451
      %v503 = vpack.c.b16 %v454, %v453
      %v504 = vpack.c.b16 %v456, %v455
      %v505 = vpack.c.b16 %v458, %v457
      %v506 = vpack.c.b16 %v460, %v459
      %v507 = vpack.c.b16 %v462, %v461
      %v508 = vpack.c.b16 %v464, %v463
      %v509 = vpack.c.b16 %v466, %v465
      %v510 = vpack.c.b16 %v468, %v467
      %v511 = vpack.c.b16 %v470, %v469
      %v512 = vpack.c.b16 %v472, %v471
      %v513 = vpack.c.b16 %v474, %v473
      %v514 = vpack.c.b16 %v476, %v475
      %v515 = vpack.c.b16 %v478, %v477
      %v516 = vpack.c.b16 %v480, %v479
      %vm553 = vcmask 523264
      %v555 = vsel %vm553, %v332, 0
      %557 = vmatprep.subr.bf16.mxu0 0
      %558 = vmatpush1.bf16.msra.mxu0 %v488
      %559 = vmatprep.subr.bf16.mxu0 0
      %560 = vmatpush1.bf16.msra.mxu0 %v487
      %561 = vmatprep.subr.bf16.mxu0 0
      %562 = vmatpush1.bf16.msra.mxu0 %v486
      %563 = vmatprep.subr.bf16.mxu0 0
      %564 = vmatpush1.bf16.msra.mxu0 %v485
      %565 = vmatprep.subr.bf16.mxu0 0
      %566 = vmatpush1.bf16.msra.mxu0 %v484
      %567 = vmatprep.subr.bf16.mxu0 0
      %568 = vmatpush1.bf16.msra.mxu0 %v483
      %569 = vmatprep.subr.bf16.mxu0 0
      %570 = vmatpush1.bf16.msra.mxu0 %v482
      %571 = vmatprep.subr.bf16.mxu0 0
      %572 = vmatpush1.bf16.msra.mxu0 %v481
      %573 = vmatprep.subr.bf16.mxu0 0
      %574 = vmatpush2.bf16.msra.mxu0 %v496
      %575 = vmatprep.subr.bf16.mxu0 0
      %576 = vmatpush2.bf16.msra.mxu0 %v495
      %577 = vmatprep.subr.bf16.mxu0 0
      %578 = vmatpush2.bf16.msra.mxu0 %v494
      %579 = vmatprep.subr.bf16.mxu0 0
      %580 = vmatpush2.bf16.msra.mxu0 %v493
      %581 = vmatprep.subr.bf16.mxu0 0
      %582 = vmatpush2.bf16.msra.mxu0 %v492
      %583 = vmatprep.subr.bf16.mxu0 0
      %584 = vmatpush2.bf16.msra.mxu0 %v491
      %585 = vmatprep.subr.bf16.mxu0 0
      %586 = vmatpush2.bf16.msra.mxu0 %v490
      %587 = vmatprep.subr.bf16.mxu0 0
      %588 = vmatpush2.bf16.msra.mxu0 %v489
      %589 = vmatprep.mubr.bf16.mxu0 %v329
      %590 = vmatmul.mubr.bf16.gmra.mxu0 %v328
      %v591 = vpop.f32.mrf.mxu0
      %v592 = vadd.f32 0.0, %v591
      %v593 = vpop.f32.mrf.mxu0
      %v594 = vpop.f32.mrf.mxu0
      %v595 = vpop.f32.mrf.mxu0
      %596 = vdwg.mxu0
      %597 = vmatprep.subr.bf16.mxu0 0
      %598 = vmatpush1.bf16.msra.mxu0 %v504
      %599 = vmatprep.subr.bf16.mxu0 0
      %600 = vmatpush1.bf16.msra.mxu0 %v503
      %601 = vmatprep.subr.bf16.mxu0 0
      %602 = vmatpush1.bf16.msra.mxu0 %v502
      %603 = vmatprep.subr.bf16.mxu0 0
      %604 = vmatpush1.bf16.msra.mxu0 %v501
      %605 = vmatprep.subr.bf16.mxu0 0
      %606 = vmatpush1.bf16.msra.mxu0 %v500
      %607 = vmatprep.subr.bf16.mxu0 0
      %608 = vmatpush1.bf16.msra.mxu0 %v499
      %609 = vmatprep.subr.bf16.mxu0 0
      %610 = vmatpush1.bf16.msra.mxu0 %v498
      %611 = vmatprep.subr.bf16.mxu0 0
      %612 = vmatpush1.bf16.msra.mxu0 %v497
      %613 = vmatprep.subr.bf16.mxu0 0
      %614 = vmatpush2.bf16.msra.mxu0 %v512
      %615 = vmatprep.subr.bf16.mxu0 0
      %616 = vmatpush2.bf16.msra.mxu0 %v511
      %617 = vmatprep.subr.bf16.mxu0 0
      %618 = vmatpush2.bf16.msra.mxu0 %v510
      %619 = vmatprep.subr.bf16.mxu0 0
      %620 = vmatpush2.bf16.msra.mxu0 %v509
      %621 = vmatprep.subr.bf16.mxu0 0
      %622 = vmatpush2.bf16.msra.mxu0 %v508
      %623 = vmatprep.subr.bf16.mxu0 0
      %624 = vmatpush2.bf16.msra.mxu0 %v507
      %625 = vmatprep.subr.bf16.mxu0 0
      %626 = vmatpush2.bf16.msra.mxu0 %v506
      %627 = vmatprep.subr.bf16.mxu0 0
      %628 = vmatpush2.bf16.msra.mxu0 %v505
      %629 = vmatprep.mubr.bf16.mxu0 %v331
      %630 = vmatmul.mubr.bf16.gmra.mxu0 %v330
      %v631 = vpop.f32.mrf.mxu0
      %v632 = vadd.f32 %v592, %v631
      %v633 = vpop.f32.mrf.mxu0
      %v634 = vpop.f32.mrf.mxu0
      %v635 = vpop.f32.mrf.mxu0
      %636 = vdwg.mxu0
      %637 = vmatprep.subr.bf16.mxu0 0
      %638 = vmatpush1.bf16.msra.mxu0 0
      %639 = vmatprep.subr.bf16.mxu0 0
      %640 = vmatpush1.bf16.msra.mxu0 0
      %641 = vmatprep.subr.bf16.mxu0 0
      %642 = vmatpush1.bf16.msra.mxu0 0
      %643 = vmatprep.subr.bf16.mxu0 0
      %644 = vmatpush1.bf16.msra.mxu0 0
      %645 = vmatprep.subr.bf16.mxu0 0
      %646 = vmatpush1.bf16.msra.mxu0 %v516
      %647 = vmatprep.subr.bf16.mxu0 0
      %648 = vmatpush1.bf16.msra.mxu0 %v515
      %649 = vmatprep.subr.bf16.mxu0 0
      %650 = vmatpush1.bf16.msra.mxu0 %v514
      %651 = vmatprep.subr.bf16.mxu0 0
      %652 = vmatpush1.bf16.msra.mxu0 %v513
      %653 = vmatprep.subr.bf16.mxu0 0
      %654 = vmatpush2.bf16.msra.mxu0 0
      %655 = vmatprep.subr.bf16.mxu0 0
      %656 = vmatpush2.bf16.msra.mxu0 0
      %657 = vmatprep.subr.bf16.mxu0 0
      %658 = vmatpush2.bf16.msra.mxu0 0
      %659 = vmatprep.subr.bf16.mxu0 0
      %660 = vmatpush2.bf16.msra.mxu0 0
      %661 = vmatprep.subr.bf16.mxu0 0
      %662 = vmatpush2.bf16.msra.mxu0 0
      %663 = vmatprep.subr.bf16.mxu0 0
      %664 = vmatpush2.bf16.msra.mxu0 0
      %665 = vmatprep.subr.bf16.mxu0 0
      %666 = vmatpush2.bf16.msra.mxu0 0
      %667 = vmatprep.subr.bf16.mxu0 0
      %668 = vmatpush2.bf16.msra.mxu0 0
      %669 = vmatprep.mubr.bf16.mxu0 0
      %670 = vmatmul.mubr.bf16.gmra.mxu0 %v555
      %v671 = vpop.f32.mrf.mxu0
      %v672 = vadd.f32 %v632, %v671
      %v673 = vpop.f32.mrf.mxu0
      %v674 = vpop.f32.mrf.mxu0
      %v675 = vpop.f32.mrf.mxu0
      %676 = vdwg.mxu0
      %vm677 = vcmask 130048
      %v678 = vsel %vm677, %v672, 0.0
      %v679 = vrot.slane %v678, 4
      %v680 = vadd.f32 %v678, %v679
      %v681 = vrot.slane %v680, 2
      %v682 = vadd.f32 %v680, %v681
      %v683 = vrot.slane %v682, 1
      %v684 = vadd.f32 %v682, %v683
      %v685 = vrcp.pop 8.0
      %v686 = vmul.f32 %v684, %v685
      %v687 = vsub.f32 %v672, %v686
      %v688 = vmul.f32 %v687, %v687
      %v689 = vsel %vm677, %v688, 0.0
      %v690 = vrot.slane %v689, 4
      %v691 = vadd.f32 %v689, %v690
      %v692 = vrot.slane %v691, 2
      %v693 = vadd.f32 %v691, %v692
      %v694 = vrot.slane %v693, 1
      %v695 = vadd.f32 %v693, %v694
      %v696 = vmul.f32 %v695, %v685
      %v697 = vld [vmem:[%s236] sm:$0x1]
      %v698 = vadd.f32 %v696, 1e-05
      %v699 = vrsqrt.pop %v698
      %v700 = vmul.f32 %v697, %v699
      %v701 = vld [vmem:[%s239] sm:$0x1]
      %v702 = vmul.f32 %v686, %v700
      %v703 = vsub.f32 %v701, %v702
      %v705 = vlaneseq
      %v706 = vshrl.u32 %v705, 7
      %v707 = vsub.s32 0, %v706
      %v708 = vrot.slane %v700, %v707
      %v710 = vmul.f32 %v672, %v708
      %v712 = vlaneseq
      %v713 = vshrl.u32 %v712, 7
      %v714 = vsub.s32 0, %v713
      %v715 = vrot.slane %v703, %v714
      %v717 = vadd.f32 %v710, %v715
      %v718 = vmax.f32 %v717, 0.0
      %v719 = vpack.c.bf16 %v718, %v718
      %vm720 = vcmask 125952
      %721 = vst.msk [vmem:[%s243] sm:$0xf] %vm720, %v719
      %p722 = scmp.lt.s32.totalorder %s15, 1
      %s723 = scalar_select %p722, %s15, 1
      %s724 = smul.addr %s723, 4
      %s725 = scalar_lea.vmem %s4, %s724
      // Predicated region
      $region37: #{dqn_forward.6} parent=35 // pred_check
        %p726 = pneg %p137
      $region38: #{dqn_forward.6} parent=35 // pred_check_branch
        %728 = sbr.rel (%p726) target = $region40
      $region39: #{dqn_forward.6} parent=35 // pred_region
        _
      $region40: #{dqn_forward.6} parent=35 // pred_fallthru
        _
    $region36: #{dqn_forward.6} parent=5 // pred_fallthru
      _
    %p729 = scmp.le.s32.totalorder 2, %s10
    // Predicated region
    $region41: #{dqn_forward.6} parent=5 // pred_check
      %p730 = pneg %p729
    $region42: #{dqn_forward.6} parent=5 // pred_check_branch
      %732 = sbr.rel (%p730) target = $region44
    $region43: #{dqn_forward.6} parent=5 // pred_region
      %s733 = ssub.s32 %s10, 2
      // Predicated region
      $region45: #{dqn_forward.6} parent=43 // pred_check
        %p734 = pneg %p143
      $region46: #{dqn_forward.6} parent=43 // pred_check_branch
        %736 = sbr.rel (%p734) target = $region48
      $region47: #{dqn_forward.6} parent=43 // pred_region
        %p737 = scmp.lt.s32.totalorder %s16, 1
        %s738 = scalar_select %p737, %s16, 1
        %s739 = smul.addr %s738, 4
        %s740 = scalar_lea.vmem %s4, %s739
      $region48: #{dqn_forward.6} parent=43 // pred_fallthru
        _
    $region44: #{dqn_forward.6} parent=5 // pred_fallthru
      _
  $region6: #{dqn_forward.6} parent=0 // loop_footer
    %s14 = sadd.s32 1, %s10
  $region7: #{dqn_forward.6} parent=0 // loop_footer_branch
    %9 = sbr.rel target = $region3
  $region8: #{dqn_forward.6} parent=0 // loop_exit
    _

// kernel: dqn_forward.7
$region0: #{dqn_forward.7}
  #allocation0 [shape = 'u32[]', space=smem, size = 0x4, offset = 0x4, fixed_abs, tag = 'smem constant byte address 0x4 - core index']
  #allocation1 [shape = 'u32[144,128]{1,0:T(1,128)}', space=vmem, size = 0x12000, scoped, tag = 'internal scratch']
  #allocation2 [shape = 'f32[1,1]{1,0:T(1,128)S(1)}', space=vmem, size = 0x200, scoped, tag = 'scoped memory for dqn_forward.7']
  %s0 = inlined_call_operand.vmem [shape: bf16[2,64], index: 0, kind: input, shape index: {}]
  %s1 = inlined_call_operand.vmem [shape: f32[2,8], index: 1, kind: input, shape index: {}]
  %s2 = inlined_call_operand.vmem [shape: bf16[2,64], index: 2, kind: input, shape index: {}]
  %s3 = inlined_call_operand.vmem [shape: f32[64,64], index: 3, kind: input, shape index: {}]
  %s4 = inlined_call_operand.vmem [shape: f32[1,64], index: 4, kind: input, shape index: {}]
  %s5 = inlined_call_operand.vmem [shape: f32[64,64], index: 5, kind: input, shape index: {}]
  %s6 = inlined_call_operand.vmem [shape: f32[1,64], index: 6, kind: input, shape index: {}]
  %s7 = inlined_call_operand.vmem [shape: f32[8,64], index: 7, kind: input, shape index: {}]
  %s8 = inlined_call_operand.vmem [shape: f32[1,64], index: 8, kind: input, shape index: {}]
  %s9 = inlined_call_operand.vmem [shape: f32[64,64], index: 9, kind: input, shape index: {}]
  %s10 = inlined_call_operand.vmem [shape: f32[1,64], index: 10, kind: input, shape index: {}]
  %s11 = inlined_call_operand.vmem [shape: f32[64,64], index: 11, kind: input, shape index: {}]
  %s12 = inlined_call_operand.vmem [shape: f32[1,64], index: 12, kind: input, shape index: {}]
  %s13 = inlined_call_operand.vmem [shape: f32[64,64], index: 13, kind: input, shape index: {}]
  %s14 = inlined_call_operand.vmem [shape: f32[64,64], index: 14, kind: input, shape index: {}]
  %s15 = inlined_call_operand.vmem [shape: f32[64,64], index: 15, kind: input, shape index: {}]
  %s16 = inlined_call_operand.vmem [shape: f32[1,64], index: 16, kind: input, shape index: {}]
  %s17 = inlined_call_operand.vmem [shape: f32[64,64], index: 17, kind: input, shape index: {}]
  %s18 = inlined_call_operand.vmem [shape: f32[1,64], index: 18, kind: input, shape index: {}]
  %s19 = inlined_call_operand.vmem [shape: f32[64,1], index: 19, kind: input, shape index: {}]
  %s20 = inlined_call_operand.<no memory space> [shape: f32[1,1], index: 20, kind: input, shape index: {}]
  %s21 = inlined_call_operand.vmem [shape: f32[2,1], index: 21, kind: output, shape index: {}]
  %s22 = sld [smem:[#allocation0]]
  $region94: #{dqn_forward.7} parent=0
    _
  %s24 = ssub.s32 1, %s22
  %s25 = scalar_select 0, %s24, %s22
  %v26 = vstv %s20
  %27 = vst [vmem:[#allocation2] sm:$0x1] %v26
  // Predicated region
  $region2: #{dqn_forward.7} parent=0 // pred_check
    _
  $region3: #{dqn_forward.7} parent=0 // pred_check_branch
    %29 = sbr.rel (0) target = $region5
  $region4: #{dqn_forward.7} parent=0 // pred_region
    _
  $region5: #{dqn_forward.7} parent=0 // pred_fallthru
    _
  // Predicated region
  $region6: #{dqn_forward.7} parent=0 // pred_check
    _
  $region7: #{dqn_forward.7} parent=0 // pred_check_branch
    %31 = sbr.rel (0) target = $region9
  $region8: #{dqn_forward.7} parent=0 // pred_region
    _
  $region9: #{dqn_forward.7} parent=0 // pred_fallthru
    _
  // Predicated region
  $region10: #{dqn_forward.7} parent=0 // pred_check
    _
  $region11: #{dqn_forward.7} parent=0 // pred_check_branch
    %33 = sbr.rel (0) target = $region13
  $region12: #{dqn_forward.7} parent=0 // pred_region
    _
  $region13: #{dqn_forward.7} parent=0 // pred_fallthru
    _
  // Predicated region
  $region14: #{dqn_forward.7} parent=0 // pred_check
    _
  $region15: #{dqn_forward.7} parent=0 // pred_check_branch
    %35 = sbr.rel (0) target = $region17
  $region16: #{dqn_forward.7} parent=0 // pred_region
    _
  $region17: #{dqn_forward.7} parent=0 // pred_fallthru
    _
  // Predicated region
  $region18: #{dqn_forward.7} parent=0 // pred_check
    _
  $region19: #{dqn_forward.7} parent=0 // pred_check_branch
    %37 = sbr.rel (0) target = $region21
  $region20: #{dqn_forward.7} parent=0 // pred_region
    _
  $region21: #{dqn_forward.7} parent=0 // pred_fallthru
    _
  // Predicated region
  $region22: #{dqn_forward.7} parent=0 // pred_check
    _
  $region23: #{dqn_forward.7} parent=0 // pred_check_branch
    %39 = sbr.rel (0) target = $region25
  $region24: #{dqn_forward.7} parent=0 // pred_region
    _
  $region25: #{dqn_forward.7} parent=0 // pred_fallthru
    _
  // Predicated region
  $region26: #{dqn_forward.7} parent=0 // pred_check
    _
  $region27: #{dqn_forward.7} parent=0 // pred_check_branch
    %41 = sbr.rel (0) target = $region29
  $region28: #{dqn_forward.7} parent=0 // pred_region
    _
  $region29: #{dqn_forward.7} parent=0 // pred_fallthru
    _
  // Predicated region
  $region30: #{dqn_forward.7} parent=0 // pred_check
    _
  $region31: #{dqn_forward.7} parent=0 // pred_check_branch
    %43 = sbr.rel (0) target = $region33
  $region32: #{dqn_forward.7} parent=0 // pred_region
    _
  $region33: #{dqn_forward.7} parent=0 // pred_fallthru
    _
  // Predicated region
  $region34: #{dqn_forward.7} parent=0 // pred_check
    _
  $region35: #{dqn_forward.7} parent=0 // pred_check_branch
    %45 = sbr.rel (0) target = $region37
  $region36: #{dqn_forward.7} parent=0 // pred_region
    _
  $region37: #{dqn_forward.7} parent=0 // pred_fallthru
    _
  // Predicated region
  $region38: #{dqn_forward.7} parent=0 // pred_check
    _
  $region39: #{dqn_forward.7} parent=0 // pred_check_branch
    %47 = sbr.rel (0) target = $region41
  $region40: #{dqn_forward.7} parent=0 // pred_region
    _
  $region41: #{dqn_forward.7} parent=0 // pred_fallthru
    _
  // Predicated region
  $region42: #{dqn_forward.7} parent=0 // pred_check
    _
  $region43: #{dqn_forward.7} parent=0 // pred_check_branch
    %49 = sbr.rel (0) target = $region45
  $region44: #{dqn_forward.7} parent=0 // pred_region
    _
  $region45: #{dqn_forward.7} parent=0 // pred_fallthru
    _
  // Predicated region
  $region46: #{dqn_forward.7} parent=0 // pred_check
    _
  $region47: #{dqn_forward.7} parent=0 // pred_check_branch
    %51 = sbr.rel (0) target = $region49
  $region48: #{dqn_forward.7} parent=0 // pred_region
    _
  $region49: #{dqn_forward.7} parent=0 // pred_fallthru
    _
  // Predicated region
  $region50: #{dqn_forward.7} parent=0 // pred_check
    _
  $region51: #{dqn_forward.7} parent=0 // pred_check_branch
    %53 = sbr.rel (0) target = $region53
  $region52: #{dqn_forward.7} parent=0 // pred_region
    _
  $region53: #{dqn_forward.7} parent=0 // pred_fallthru
    _
  // Predicated region
  $region54: #{dqn_forward.7} parent=0 // pred_check
    _
  $region55: #{dqn_forward.7} parent=0 // pred_check_branch
    %55 = sbr.rel (0) target = $region57
  $region56: #{dqn_forward.7} parent=0 // pred_region
    _
  $region57: #{dqn_forward.7} parent=0 // pred_fallthru
    _
  // Predicated region
  $region58: #{dqn_forward.7} parent=0 // pred_check
    _
  $region59: #{dqn_forward.7} parent=0 // pred_check_branch
    %57 = sbr.rel (0) target = $region61
  $region60: #{dqn_forward.7} parent=0 // pred_region
    _
  $region61: #{dqn_forward.7} parent=0 // pred_fallthru
    _
  // Predicated region
  $region62: #{dqn_forward.7} parent=0 // pred_check
    _
  $region63: #{dqn_forward.7} parent=0 // pred_check_branch
    %59 = sbr.rel (0) target = $region65
  $region64: #{dqn_forward.7} parent=0 // pred_region
    _
  $region65: #{dqn_forward.7} parent=0 // pred_fallthru
    _
  // Predicated region
  $region66: #{dqn_forward.7} parent=0 // pred_check
    _
  $region67: #{dqn_forward.7} parent=0 // pred_check_branch
    %61 = sbr.rel (0) target = $region69
  $region68: #{dqn_forward.7} parent=0 // pred_region
    _
  $region69: #{dqn_forward.7} parent=0 // pred_fallthru
    _
  // Predicated region
  $region70: #{dqn_forward.7} parent=0 // pred_check
    _
  $region71: #{dqn_forward.7} parent=0 // pred_check_branch
    %63 = sbr.rel (0) target = $region73
  $region72: #{dqn_forward.7} parent=0 // pred_region
    _
  $region73: #{dqn_forward.7} parent=0 // pred_fallthru
    _
  // Predicated region
  $region74: #{dqn_forward.7} parent=0 // pred_check
    _
  $region75: #{dqn_forward.7} parent=0 // pred_check_branch
    %65 = sbr.rel (0) target = $region77
  $region76: #{dqn_forward.7} parent=0 // pred_region
    _
  $region77: #{dqn_forward.7} parent=0 // pred_fallthru
    _
  // Predicated region
  $region78: #{dqn_forward.7} parent=0 // pred_check
    _
  $region79: #{dqn_forward.7} parent=0 // pred_check_branch
    %67 = sbr.rel (0) target = $region81
  $region80: #{dqn_forward.7} parent=0 // pred_region
    _
  $region81: #{dqn_forward.7} parent=0 // pred_fallthru
    _
  // Predicated region
  $region82: #{dqn_forward.7} parent=0 // pred_check
    _
  $region83: #{dqn_forward.7} parent=0 // pred_check_branch
    %69 = sbr.rel (0) target = $region85
  $region84: #{dqn_forward.7} parent=0 // pred_region
    _
  $region85: #{dqn_forward.7} parent=0 // pred_fallthru
    _
  %v70 = vld [vmem:[%s0] sm:$0x1]
  %v71 = vunpack.c.l.bf16 %v70
  %v72 = vld [vmem:[%s3] sm:$0xff]
  %v73 = vld [vmem:[%s3 + $0x8] sm:$0xff]
  %v74 = vld [vmem:[%s3 + $0x10] sm:$0xff]
  %v75 = vld [vmem:[%s3 + $0x18] sm:$0xff]
  %v76 = vld [vmem:[%s3 + $0x20] sm:$0xff]
  %v77 = vld [vmem:[%s3 + $0x28] sm:$0xff]
  %v78 = vld [vmem:[%s3 + $0x30] sm:$0xff]
  %v79 = vld [vmem:[%s3 + $0x38] sm:$0xff]
  %v80 = vld [vmem:[%s4] sm:$0x1]
  %v82 = vlaneseq
  %v83 = vshrl.u32 %v82, 7
  %v84 = vsub.s32 0, %v83
  %v85 = vrot.slane %v80, %v84
  %vm87 = vcmask 523264
  %v89 = vsel %vm87, %v71, 0
  %91 = vmatprep.subr.mxu0 0.0
  %92 = vmatpush1.msra.mxu0 0.0
  %93 = vmatprep.subr.mxu0 0.0
  %94 = vmatpush1.msra.mxu0 0.0
  %95 = vmatprep.subr.mxu0 0.0
  %96 = vmatpush1.msra.mxu0 0.0
  %97 = vmatprep.subr.mxu0 0.0
  %98 = vmatpush1.msra.mxu0 0.0
  %99 = vmatprep.subr.mxu0 0.0
  %100 = vmatpush1.msra.mxu0 0.0
  %101 = vmatprep.subr.mxu0 0.0
  %102 = vmatpush1.msra.mxu0 0.0
  %103 = vmatprep.subr.mxu0 0.0
  %104 = vmatpush1.msra.mxu0 0.0
  %105 = vmatprep.subr.mxu0 0.0
  %106 = vmatpush1.msra.mxu0 0.0
  %107 = vmatprep.subr.mxu0 0.0
  %108 = vmatpush1.msra.mxu0 %v79
  %109 = vmatprep.subr.mxu0 0.0
  %110 = vmatpush1.msra.mxu0 %v78
  %111 = vmatprep.subr.mxu0 0.0
  %112 = vmatpush1.msra.mxu0 %v77
  %113 = vmatprep.subr.mxu0 0.0
  %114 = vmatpush1.msra.mxu0 %v76
  %115 = vmatprep.subr.mxu0 0.0
  %116 = vmatpush1.msra.mxu0 %v75
  %117 = vmatprep.subr.mxu0 0.0
  %118 = vmatpush1.msra.mxu0 %v74
  %119 = vmatprep.subr.mxu0 0.0
  %120 = vmatpush1.msra.mxu0 %v73
  %121 = vmatprep.subr.mxu0 0.0
  %122 = vmatpush1.msra.mxu0 %v72
  %123 = vmatprep.subr.mxu0 0.0
  %124 = vmatpush2.msra.mxu0 0.0
  %125 = vmatprep.subr.mxu0 0.0
  %126 = vmatpush2.msra.mxu0 0.0
  %127 = vmatprep.subr.mxu0 0.0
  %128 = vmatpush2.msra.mxu0 0.0
  %129 = vmatprep.subr.mxu0 0.0
  %130 = vmatpush2.msra.mxu0 0.0
  %131 = vmatprep.subr.mxu0 0.0
  %132 = vmatpush2.msra.mxu0 0.0
  %133 = vmatprep.subr.mxu0 0.0
  %134 = vmatpush2.msra.mxu0 0.0
  %135 = vmatprep.subr.mxu0 0.0
  %136 = vmatpush2.msra.mxu0 0.0
  %137 = vmatprep.subr.mxu0 0.0
  %138 = vmatpush2.msra.mxu0 0.0
  %139 = vmatprep.subr.mxu0 0.0
  %140 = vmatpush2.msra.mxu0 0.0
  %141 = vmatprep.subr.mxu0 0.0
  %142 = vmatpush2.msra.mxu0 0.0
  %143 = vmatprep.subr.mxu0 0.0
  %144 = vmatpush2.msra.mxu0 0.0
  %145 = vmatprep.subr.mxu0 0.0
  %146 = vmatpush2.msra.mxu0 0.0
  %147 = vmatprep.subr.mxu0 0.0
  %148 = vmatpush2.msra.mxu0 0.0
  %149 = vmatprep.subr.mxu0 0.0
  %150 = vmatpush2.msra.mxu0 0.0
  %151 = vmatprep.subr.mxu0 0.0
  %152 = vmatpush2.msra.mxu0 0.0
  %153 = vmatprep.subr.mxu0 0.0
  %154 = vmatpush2.msra.mxu0 0.0
  %155 = vmatprep.mubr.f32.mxu0 0.0
  %156 = vmatmul.mubr.f32.gmra.mxu0 %v89
  %v157 = vpop.f32.mrf.mxu0
  %v158 = vadd.f32 %v85, %v157
  %v159 = vpop.f32.mrf.mxu0
  %160 = vdwg.mxu0
  %v161 = vmax.f32 %v158, 0.0
  %v162 = vld [vmem:[%s2] sm:$0x1]
  %v163 = vunpack.c.l.bf16 %v162
  %v164 = vld [vmem:[%s5] sm:$0xff]
  %v165 = vld [vmem:[%s5 + $0x8] sm:$0xff]
  %v166 = vld [vmem:[%s5 + $0x10] sm:$0xff]
  %v167 = vld [vmem:[%s5 + $0x18] sm:$0xff]
  %v168 = vld [vmem:[%s5 + $0x20] sm:$0xff]
  %v169 = vld [vmem:[%s5 + $0x28] sm:$0xff]
  %v170 = vld [vmem:[%s5 + $0x30] sm:$0xff]
  %v171 = vld [vmem:[%s5 + $0x38] sm:$0xff]
  %v172 = vld [vmem:[%s6] sm:$0x1]
  %v174 = vlaneseq
  %v175 = vshrl.u32 %v174, 7
  %v176 = vsub.s32 0, %v175
  %v177 = vrot.slane %v172, %v176
  %v180 = vsel %vm87, %v163, 0
  %182 = vmatprep.subr.mxu0 0.0
  %183 = vmatpush1.msra.mxu0 0.0
  %184 = vmatprep.subr.mxu0 0.0
  %185 = vmatpush1.msra.mxu0 0.0
  %186 = vmatprep.subr.mxu0 0.0
  %187 = vmatpush1.msra.mxu0 0.0
  %188 = vmatprep.subr.mxu0 0.0
  %189 = vmatpush1.msra.mxu0 0.0
  %190 = vmatprep.subr.mxu0 0.0
  %191 = vmatpush1.msra.mxu0 0.0
  %192 = vmatprep.subr.mxu0 0.0
  %193 = vmatpush1.msra.mxu0 0.0
  %194 = vmatprep.subr.mxu0 0.0
  %195 = vmatpush1.msra.mxu0 0.0
  %196 = vmatprep.subr.mxu0 0.0
  %197 = vmatpush1.msra.mxu0 0.0
  %198 = vmatprep.subr.mxu0 0.0
  %199 = vmatpush1.msra.mxu0 %v171
  %200 = vmatprep.subr.mxu0 0.0
  %201 = vmatpush1.msra.mxu0 %v170
  %202 = vmatprep.subr.mxu0 0.0
  %203 = vmatpush1.msra.mxu0 %v169
  %204 = vmatprep.subr.mxu0 0.0
  %205 = vmatpush1.msra.mxu0 %v168
  %206 = vmatprep.subr.mxu0 0.0
  %207 = vmatpush1.msra.mxu0 %v167
  %208 = vmatprep.subr.mxu0 0.0
  %209 = vmatpush1.msra.mxu0 %v166
  %210 = vmatprep.subr.mxu0 0.0
  %211 = vmatpush1.msra.mxu0 %v165
  %212 = vmatprep.subr.mxu0 0.0
  %213 = vmatpush1.msra.mxu0 %v164
  %214 = vmatprep.subr.mxu0 0.0
  %215 = vmatpush2.msra.mxu0 0.0
  %216 = vmatprep.subr.mxu0 0.0
  %217 = vmatpush2.msra.mxu0 0.0
  %218 = vmatprep.subr.mxu0 0.0
  %219 = vmatpush2.msra.mxu0 0.0
  %220 = vmatprep.subr.mxu0 0.0
  %221 = vmatpush2.msra.mxu0 0.0
  %222 = vmatprep.subr.mxu0 0.0
  %223 = vmatpush2.msra.mxu0 0.0
  %224 = vmatprep.subr.mxu0 0.0
  %225 = vmatpush2.msra.mxu0 0.0
  %226 = vmatprep.subr.mxu0 0.0
  %227 = vmatpush2.msra.mxu0 0.0
  %228 = vmatprep.subr.mxu0 0.0
  %229 = vmatpush2.msra.mxu0 0.0
  %230 = vmatprep.subr.mxu0 0.0
  %231 = vmatpush2.msra.mxu0 0.0
  %232 = vmatprep.subr.mxu0 0.0
  %233 = vmatpush2.msra.mxu0 0.0
  %234 = vmatprep.subr.mxu0 0.0
  %235 = vmatpush2.msra.mxu0 0.0
  %236 = vmatprep.subr.mxu0 0.0
  %237 = vmatpush2.msra.mxu0 0.0
  %238 = vmatprep.subr.mxu0 0.0
  %239 = vmatpush2.msra.mxu0 0.0
  %240 = vmatprep.subr.mxu0 0.0
  %241 = vmatpush2.msra.mxu0 0.0
  %242 = vmatprep.subr.mxu0 0.0
  %243 = vmatpush2.msra.mxu0 0.0
  %244 = vmatprep.subr.mxu0 0.0
  %245 = vmatpush2.msra.mxu0 0.0
  %246 = vmatprep.mubr.f32.mxu0 0.0
  %247 = vmatmul.mubr.f32.gmra.mxu0 %v180
  %v248 = vpop.f32.mrf.mxu0
  %v249 = vadd.f32 %v177, %v248
  %v250 = vpop.f32.mrf.mxu0
  %251 = vdwg.mxu0
  %v252 = vmax.f32 %v249, 0.0
  %v253 = vld [vmem:[%s1] sm:$0x3]
  %v254 = vld [vmem:[%s7] sm:$0xff]
  %v255 = vld [vmem:[%s8] sm:$0x1]
  %v257 = vlaneseq
  %v258 = vshrl.u32 %v257, 7
  %v259 = vsub.s32 0, %v258
  %v260 = vrot.slane %v255, %v259
  %vm262 = vcmask 64512
  %v264 = vsel %vm262, %v253, 0
  %266 = vmatprep.subr.mxu0 0.0
  %267 = vmatpush1.msra.mxu0 0.0
  %268 = vmatprep.subr.mxu0 0.0
  %269 = vmatpush1.msra.mxu0 0.0
  %270 = vmatprep.subr.mxu0 0.0
  %271 = vmatpush1.msra.mxu0 0.0
  %272 = vmatprep.subr.mxu0 0.0
  %273 = vmatpush1.msra.mxu0 0.0
  %274 = vmatprep.subr.mxu0 0.0
  %275 = vmatpush1.msra.mxu0 0.0
  %276 = vmatprep.subr.mxu0 0.0
  %277 = vmatpush1.msra.mxu0 0.0
  %278 = vmatprep.subr.mxu0 0.0
  %279 = vmatpush1.msra.mxu0 0.0
  %280 = vmatprep.subr.mxu0 0.0
  %281 = vmatpush1.msra.mxu0 0.0
  %282 = vmatprep.subr.mxu0 0.0
  %283 = vmatpush1.msra.mxu0 0.0
  %284 = vmatprep.subr.mxu0 0.0
  %285 = vmatpush1.msra.mxu0 0.0
  %286 = vmatprep.subr.mxu0 0.0
  %287 = vmatpush1.msra.mxu0 0.0
  %288 = vmatprep.subr.mxu0 0.0
  %289 = vmatpush1.msra.mxu0 0.0
  %290 = vmatprep.subr.mxu0 0.0
  %291 = vmatpush1.msra.mxu0 0.0
  %292 = vmatprep.subr.mxu0 0.0
  %293 = vmatpush1.msra.mxu0 0.0
  %294 = vmatprep.subr.mxu0 0.0
  %295 = vmatpush1.msra.mxu0 0.0
  %296 = vmatprep.subr.mxu0 0.0
  %297 = vmatpush1.msra.mxu0 %v254
  %298 = vmatprep.subr.mxu0 0.0
  %299 = vmatpush2.msra.mxu0 0.0
  %300 = vmatprep.subr.mxu0 0.0
  %301 = vmatpush2.msra.mxu0 0.0
  %302 = vmatprep.subr.mxu0 0.0
  %303 = vmatpush2.msra.mxu0 0.0
  %304 = vmatprep.subr.mxu0 0.0
  %305 = vmatpush2.msra.mxu0 0.0
  %306 = vmatprep.subr.mxu0 0.0
  %307 = vmatpush2.msra.mxu0 0.0
  %308 = vmatprep.subr.mxu0 0.0
  %309 = vmatpush2.msra.mxu0 0.0
  %310 = vmatprep.subr.mxu0 0.0
  %311 = vmatpush2.msra.mxu0 0.0
  %312 = vmatprep.subr.mxu0 0.0
  %313 = vmatpush2.msra.mxu0 0.0
  %314 = vmatprep.subr.mxu0 0.0
  %315 = vmatpush2.msra.mxu0 0.0
  %316 = vmatprep.subr.mxu0 0.0
  %317 = vmatpush2.msra.mxu0 0.0
  %318 = vmatprep.subr.mxu0 0.0
  %319 = vmatpush2.msra.mxu0 0.0
  %320 = vmatprep.subr.mxu0 0.0
  %321 = vmatpush2.msra.mxu0 0.0
  %322 = vmatprep.subr.mxu0 0.0
  %323 = vmatpush2.msra.mxu0 0.0
  %324 = vmatprep.subr.mxu0 0.0
  %325 = vmatpush2.msra.mxu0 0.0
  %326 = vmatprep.subr.mxu0 0.0
  %327 = vmatpush2.msra.mxu0 0.0
  %328 = vmatprep.subr.mxu0 0.0
  %329 = vmatpush2.msra.mxu0 0.0
  %330 = vmatprep.mubr.f32.mxu0 0.0
  %331 = vmatmul.mubr.f32.gmra.mxu0 %v264
  %v332 = vpop.f32.mrf.mxu0
  %v333 = vadd.f32 %v260, %v332
  %v334 = vpop.f32.mrf.mxu0
  %335 = vdwg.mxu0
  %v336 = vmax.f32 %v333, 0.0
  %v337 = vld [vmem:[%s9] sm:$0xff]
  %v338 = vld [vmem:[%s9 + $0x8] sm:$0xff]
  %v339 = vld [vmem:[%s9 + $0x10] sm:$0xff]
  %v340 = vld [vmem:[%s9 + $0x18] sm:$0xff]
  %v341 = vld [vmem:[%s9 + $0x20] sm:$0xff]
  %v342 = vld [vmem:[%s9 + $0x28] sm:$0xff]
  %v343 = vld [vmem:[%s9 + $0x30] sm:$0xff]
  %v344 = vld [vmem:[%s9 + $0x38] sm:$0xff]
  %v345 = vld [vmem:[%s10] sm:$0x1]
  %v347 = vlaneseq
  %v348 = vshrl.u32 %v347, 7
  %v349 = vsub.s32 0, %v348
  %v350 = vrot.slane %v345, %v349
  %v353 = vsel %vm87, %v336, 0
  %355 = vmatprep.subr.mxu0 0.0
  %356 = vmatpush1.msra.mxu0 0.0
  %357 = vmatprep.subr.mxu0 0.0
  %358 = vmatpush1.msra.mxu0 0.0
  %359 = vmatprep.subr.mxu0 0.0
  %360 = vmatpush1.msra.mxu0 0.0
  %361 = vmatprep.subr.mxu0 0.0
  %362 = vmatpush1.msra.mxu0 0.0
  %363 = vmatprep.subr.mxu0 0.0
  %364 = vmatpush1.msra.mxu0 0.0
  %365 = vmatprep.subr.mxu0 0.0
  %366 = vmatpush1.msra.mxu0 0.0
  %367 = vmatprep.subr.mxu0 0.0
  %368 = vmatpush1.msra.mxu0 0.0
  %369 = vmatprep.subr.mxu0 0.0
  %370 = vmatpush1.msra.mxu0 0.0
  %371 = vmatprep.subr.mxu0 0.0
  %372 = vmatpush1.msra.mxu0 %v344
  %373 = vmatprep.subr.mxu0 0.0
  %374 = vmatpush1.msra.mxu0 %v343
  %375 = vmatprep.subr.mxu0 0.0
  %376 = vmatpush1.msra.mxu0 %v342
  %377 = vmatprep.subr.mxu0 0.0
  %378 = vmatpush1.msra.mxu0 %v341
  %379 = vmatprep.subr.mxu0 0.0
  %380 = vmatpush1.msra.mxu0 %v340
  %381 = vmatprep.subr.mxu0 0.0
  %382 = vmatpush1.msra.mxu0 %v339
  %383 = vmatprep.subr.mxu0 0.0
  %384 = vmatpush1.msra.mxu0 %v338
  %385 = vmatprep.subr.mxu0 0.0
  %386 = vmatpush1.msra.mxu0 %v337
  %387 = vmatprep.subr.mxu0 0.0
  %388 = vmatpush2.msra.mxu0 0.0
  %389 = vmatprep.subr.mxu0 0.0
  %390 = vmatpush2.msra.mxu0 0.0
  %391 = vmatprep.subr.mxu0 0.0
  %392 = vmatpush2.msra.mxu0 0.0
  %393 = vmatprep.subr.mxu0 0.0
  %394 = vmatpush2.msra.mxu0 0.0
  %395 = vmatprep.subr.mxu0 0.0
  %396 = vmatpush2.msra.mxu0 0.0
  %397 = vmatprep.subr.mxu0 0.0
  %398 = vmatpush2.msra.mxu0 0.0
  %399 = vmatprep.subr.mxu0 0.0
  %400 = vmatpush2.msra.mxu0 0.0
  %401 = vmatprep.subr.mxu0 0.0
  %402 = vmatpush2.msra.mxu0 0.0
  %403 = vmatprep.subr.mxu0 0.0
  %404 = vmatpush2.msra.mxu0 0.0
  %405 = vmatprep.subr.mxu0 0.0
  %406 = vmatpush2.msra.mxu0 0.0
  %407 = vmatprep.subr.mxu0 0.0
  %408 = vmatpush2.msra.mxu0 0.0
  %409 = vmatprep.subr.mxu0 0.0
  %410 = vmatpush2.msra.mxu0 0.0
  %411 = vmatprep.subr.mxu0 0.0
  %412 = vmatpush2.msra.mxu0 0.0
  %413 = vmatprep.subr.mxu0 0.0
  %414 = vmatpush2.msra.mxu0 0.0
  %415 = vmatprep.subr.mxu0 0.0
  %416 = vmatpush2.msra.mxu0 0.0
  %417 = vmatprep.subr.mxu0 0.0
  %418 = vmatpush2.msra.mxu0 0.0
  %419 = vmatprep.mubr.f32.mxu0 0.0
  %420 = vmatmul.mubr.f32.gmra.mxu0 %v353
  %v421 = vpop.f32.mrf.mxu0
  %v422 = vadd.f32 %v350, %v421
  %v423 = vpop.f32.mrf.mxu0
  %424 = vdwg.mxu0
  %v425 = vmax.f32 %v422, 0.0
  %v426 = vld [vmem:[%s11] sm:$0xff]
  %v427 = vld [vmem:[%s11 + $0x8] sm:$0xff]
  %v428 = vld [vmem:[%s11 + $0x10] sm:$0xff]
  %v429 = vld [vmem:[%s11 + $0x18] sm:$0xff]
  %v430 = vld [vmem:[%s11 + $0x20] sm:$0xff]
  %v431 = vld [vmem:[%s11 + $0x28] sm:$0xff]
  %v432 = vld [vmem:[%s11 + $0x30] sm:$0xff]
  %v433 = vld [vmem:[%s11 + $0x38] sm:$0xff]
  %v434 = vld [vmem:[%s12] sm:$0x1]
  %v436 = vlaneseq
  %v437 = vshrl.u32 %v436, 7
  %v438 = vsub.s32 0, %v437
  %v439 = vrot.slane %v434, %v438
  %v442 = vsel %vm87, %v425, 0
  %444 = vmatprep.subr.mxu0 0.0
  %445 = vmatpush1.msra.mxu0 0.0
  %446 = vmatprep.subr.mxu0 0.0
  %447 = vmatpush1.msra.mxu0 0.0
  %448 = vmatprep.subr.mxu0 0.0
  %449 = vmatpush1.msra.mxu0 0.0
  %450 = vmatprep.subr.mxu0 0.0
  %451 = vmatpush1.msra.mxu0 0.0
  %452 = vmatprep.subr.mxu0 0.0
  %453 = vmatpush1.msra.mxu0 0.0
  %454 = vmatprep.subr.mxu0 0.0
  %455 = vmatpush1.msra.mxu0 0.0
  %456 = vmatprep.subr.mxu0 0.0
  %457 = vmatpush1.msra.mxu0 0.0
  %458 = vmatprep.subr.mxu0 0.0
  %459 = vmatpush1.msra.mxu0 0.0
  %460 = vmatprep.subr.mxu0 0.0
  %461 = vmatpush1.msra.mxu0 %v433
  %462 = vmatprep.subr.mxu0 0.0
  %463 = vmatpush1.msra.mxu0 %v432
  %464 = vmatprep.subr.mxu0 0.0
  %465 = vmatpush1.msra.mxu0 %v431
  %466 = vmatprep.subr.mxu0 0.0
  %467 = vmatpush1.msra.mxu0 %v430
  %468 = vmatprep.subr.mxu0 0.0
  %469 = vmatpush1.msra.mxu0 %v429
  %470 = vmatprep.subr.mxu0 0.0
  %471 = vmatpush1.msra.mxu0 %v428
  %472 = vmatprep.subr.mxu0 0.0
  %473 = vmatpush1.msra.mxu0 %v427
  %474 = vmatprep.subr.mxu0 0.0
  %475 = vmatpush1.msra.mxu0 %v426
  %476 = vmatprep.subr.mxu0 0.0
  %477 = vmatpush2.msra.mxu0 0.0
  %478 = vmatprep.subr.mxu0 0.0
  %479 = vmatpush2.msra.mxu0 0.0
  %480 = vmatprep.subr.mxu0 0.0
  %481 = vmatpush2.msra.mxu0 0.0
  %482 = vmatprep.subr.mxu0 0.0
  %483 = vmatpush2.msra.mxu0 0.0
  %484 = vmatprep.subr.mxu0 0.0
  %485 = vmatpush2.msra.mxu0 0.0
  %486 = vmatprep.subr.mxu0 0.0
  %487 = vmatpush2.msra.mxu0 0.0
  %488 = vmatprep.subr.mxu0 0.0
  %489 = vmatpush2.msra.mxu0 0.0
  %490 = vmatprep.subr.mxu0 0.0
  %491 = vmatpush2.msra.mxu0 0.0
  %492 = vmatprep.subr.mxu0 0.0
  %493 = vmatpush2.msra.mxu0 0.0
  %494 = vmatprep.subr.mxu0 0.0
  %495 = vmatpush2.msra.mxu0 0.0
  %496 = vmatprep.subr.mxu0 0.0
  %497 = vmatpush2.msra.mxu0 0.0
  %498 = vmatprep.subr.mxu0 0.0
  %499 = vmatpush2.msra.mxu0 0.0
  %500 = vmatprep.subr.mxu0 0.0
  %501 = vmatpush2.msra.mxu0 0.0
  %502 = vmatprep.subr.mxu0 0.0
  %503 = vmatpush2.msra.mxu0 0.0
  %504 = vmatprep.subr.mxu0 0.0
  %505 = vmatpush2.msra.mxu0 0.0
  %506 = vmatprep.subr.mxu0 0.0
  %507 = vmatpush2.msra.mxu0 0.0
  %508 = vmatprep.mubr.f32.mxu0 0.0
  %509 = vmatmul.mubr.f32.gmra.mxu0 %v442
  %v510 = vpop.f32.mrf.mxu0
  %v511 = vadd.f32 %v439, %v510
  %v512 = vpop.f32.mrf.mxu0
  %513 = vdwg.mxu0
  %v514 = vld [vmem:[%s13] sm:$0xff]
  %v515 = vld [vmem:[%s13 + $0x8] sm:$0xff]
  %v516 = vld [vmem:[%s13 + $0x10] sm:$0xff]
  %v517 = vld [vmem:[%s13 + $0x18] sm:$0xff]
  %v518 = vld [vmem:[%s13 + $0x20] sm:$0xff]
  %v519 = vld [vmem:[%s13 + $0x28] sm:$0xff]
  %v520 = vld [vmem:[%s13 + $0x30] sm:$0xff]
  %v521 = vld [vmem:[%s13 + $0x38] sm:$0xff]
  %v522 = vld [vmem:[%s14] sm:$0xff]
  %v523 = vld [vmem:[%s14 + $0x8] sm:$0xff]
  %v524 = vld [vmem:[%s14 + $0x10] sm:$0xff]
  %v525 = vld [vmem:[%s14 + $0x18] sm:$0xff]
  %v526 = vld [vmem:[%s14 + $0x20] sm:$0xff]
  %v527 = vld [vmem:[%s14 + $0x28] sm:$0xff]
  %v528 = vld [vmem:[%s14 + $0x30] sm:$0xff]
  %v529 = vld [vmem:[%s14 + $0x38] sm:$0xff]
  %v531 = vsel %vm87, %v511, 0
  %533 = vmatprep.subr.mxu0 0.0
  %534 = vmatpush1.msra.mxu0 0.0
  %535 = vmatprep.subr.mxu0 0.0
  %536 = vmatpush1.msra.mxu0 0.0
  %537 = vmatprep.subr.mxu0 0.0
  %538 = vmatpush1.msra.mxu0 0.0
  %539 = vmatprep.subr.mxu0 0.0
  %540 = vmatpush1.msra.mxu0 0.0
  %541 = vmatprep.subr.mxu0 0.0
  %542 = vmatpush1.msra.mxu0 0.0
  %543 = vmatprep.subr.mxu0 0.0
  %544 = vmatpush1.msra.mxu0 0.0
  %545 = vmatprep.subr.mxu0 0.0
  %546 = vmatpush1.msra.mxu0 0.0
  %547 = vmatprep.subr.mxu0 0.0
  %548 = vmatpush1.msra.mxu0 0.0
  %549 = vmatprep.subr.mxu0 0.0
  %550 = vmatpush1.msra.mxu0 %v529
  %551 = vmatprep.subr.mxu0 0.0
  %552 = vmatpush1.msra.mxu0 %v528
  %553 = vmatprep.subr.mxu0 0.0
  %554 = vmatpush1.msra.mxu0 %v527
  %555 = vmatprep.subr.mxu0 0.0
  %556 = vmatpush1.msra.mxu0 %v526
  %557 = vmatprep.subr.mxu0 0.0
  %558 = vmatpush1.msra.mxu0 %v525
  %559 = vmatprep.subr.mxu0 0.0
  %560 = vmatpush1.msra.mxu0 %v524
  %561 = vmatprep.subr.mxu0 0.0
  %562 = vmatpush1.msra.mxu0 %v523
  %563 = vmatprep.subr.mxu0 0.0
  %564 = vmatpush1.msra.mxu0 %v522
  %565 = vmatprep.subr.mxu0 0.0
  %566 = vmatpush2.msra.mxu0 0.0
  %567 = vmatprep.subr.mxu0 0.0
  %568 = vmatpush2.msra.mxu0 0.0
  %569 = vmatprep.subr.mxu0 0.0
  %570 = vmatpush2.msra.mxu0 0.0
  %571 = vmatprep.subr.mxu0 0.0
  %572 = vmatpush2.msra.mxu0 0.0
  %573 = vmatprep.subr.mxu0 0.0
  %574 = vmatpush2.msra.mxu0 0.0
  %575 = vmatprep.subr.mxu0 0.0
  %576 = vmatpush2.msra.mxu0 0.0
  %577 = vmatprep.subr.mxu0 0.0
  %578 = vmatpush2.msra.mxu0 0.0
  %579 = vmatprep.subr.mxu0 0.0
  %580 = vmatpush2.msra.mxu0 0.0
  %581 = vmatprep.subr.mxu0 0.0
  %582 = vmatpush2.msra.mxu0 0.0
  %583 = vmatprep.subr.mxu0 0.0
  %584 = vmatpush2.msra.mxu0 0.0
  %585 = vmatprep.subr.mxu0 0.0
  %586 = vmatpush2.msra.mxu0 0.0
  %587 = vmatprep.subr.mxu0 0.0
  %588 = vmatpush2.msra.mxu0 0.0
  %589 = vmatprep.subr.mxu0 0.0
  %590 = vmatpush2.msra.mxu0 0.0
  %591 = vmatprep.subr.mxu0 0.0
  %592 = vmatpush2.msra.mxu0 0.0
  %593 = vmatprep.subr.mxu0 0.0
  %594 = vmatpush2.msra.mxu0 0.0
  %595 = vmatprep.subr.mxu0 0.0
  %596 = vmatpush2.msra.mxu0 0.0
  %597 = vmatprep.mubr.f32.mxu0 0.0
  %598 = vmatmul.mubr.f32.gmra.mxu0 %v531
  %v599 = vpop.f32.mrf.mxu0
  %v600 = vadd.f32 0.0, %v599
  %v601 = vpop.f32.mrf.mxu0
  %602 = vdwg.mxu0
  %v604 = vsel %vm87, %v161, 0
  %606 = vmatprep.subr.mxu0 0.0
  %607 = vmatpush1.msra.mxu0 0.0
  %608 = vmatprep.subr.mxu0 0.0
  %609 = vmatpush1.msra.mxu0 0.0
  %610 = vmatprep.subr.mxu0 0.0
  %611 = vmatpush1.msra.mxu0 0.0
  %612 = vmatprep.subr.mxu0 0.0
  %613 = vmatpush1.msra.mxu0 0.0
  %614 = vmatprep.subr.mxu0 0.0
  %615 = vmatpush1.msra.mxu0 0.0
  %616 = vmatprep.subr.mxu0 0.0
  %617 = vmatpush1.msra.mxu0 0.0
  %618 = vmatprep.subr.mxu0 0.0
  %619 = vmatpush1.msra.mxu0 0.0
  %620 = vmatprep.subr.mxu0 0.0
  %621 = vmatpush1.msra.mxu0 0.0
  %622 = vmatprep.subr.mxu0 0.0
  %623 = vmatpush1.msra.mxu0 %v521
  %624 = vmatprep.subr.mxu0 0.0
  %625 = vmatpush1.msra.mxu0 %v520
  %626 = vmatprep.subr.mxu0 0.0
  %627 = vmatpush1.msra.mxu0 %v519
  %628 = vmatprep.subr.mxu0 0.0
  %629 = vmatpush1.msra.mxu0 %v518
  %630 = vmatprep.subr.mxu0 0.0
  %631 = vmatpush1.msra.mxu0 %v517
  %632 = vmatprep.subr.mxu0 0.0
  %633 = vmatpush1.msra.mxu0 %v516
  %634 = vmatprep.subr.mxu0 0.0
  %635 = vmatpush1.msra.mxu0 %v515
  %636 = vmatprep.subr.mxu0 0.0
  %637 = vmatpush1.msra.mxu0 %v514
  %638 = vmatprep.subr.mxu0 0.0
  %639 = vmatpush2.msra.mxu0 0.0
  %640 = vmatprep.subr.mxu0 0.0
  %641 = vmatpush2.msra.mxu0 0.0
  %642 = vmatprep.subr.mxu0 0.0
  %643 = vmatpush2.msra.mxu0 0.0
  %644 = vmatprep.subr.mxu0 0.0
  %645 = vmatpush2.msra.mxu0 0.0
  %646 = vmatprep.subr.mxu0 0.0
  %647 = vmatpush2.msra.mxu0 0.0
  %648 = vmatprep.subr.mxu0 0.0
  %649 = vmatpush2.msra.mxu0 0.0
  %650 = vmatprep.subr.mxu0 0.0
  %651 = vmatpush2.msra.mxu0 0.0
  %652 = vmatprep.subr.mxu0 0.0
  %653 = vmatpush2.msra.mxu0 0.0
  %654 = vmatprep.subr.mxu0 0.0
  %655 = vmatpush2.msra.mxu0 0.0
  %656 = vmatprep.subr.mxu0 0.0
  %657 = vmatpush2.msra.mxu0 0.0
  %658 = vmatprep.subr.mxu0 0.0
  %659 = vmatpush2.msra.mxu0 0.0
  %660 = vmatprep.subr.mxu0 0.0
  %661 = vmatpush2.msra.mxu0 0.0
  %662 = vmatprep.subr.mxu0 0.0
  %663 = vmatpush2.msra.mxu0 0.0
  %664 = vmatprep.subr.mxu0 0.0
  %665 = vmatpush2.msra.mxu0 0.0
  %666 = vmatprep.subr.mxu0 0.0
  %667 = vmatpush2.msra.mxu0 0.0
  %668 = vmatprep.subr.mxu0 0.0
  %669 = vmatpush2.msra.mxu0 0.0
  %670 = vmatprep.mubr.f32.mxu0 0.0
  %671 = vmatmul.mubr.f32.gmra.mxu0 %v604
  %v672 = vpop.f32.mrf.mxu0
  %v673 = vadd.f32 %v600, %v672
  %v674 = vpop.f32.mrf.mxu0
  %675 = vdwg.mxu0
  %v676 = vld [vmem:[%s15] sm:$0xff]
  %v677 = vld [vmem:[%s15 + $0x8] sm:$0xff]
  %v678 = vld [vmem:[%s15 + $0x10] sm:$0xff]
  %v679 = vld [vmem:[%s15 + $0x18] sm:$0xff]
  %v680 = vld [vmem:[%s15 + $0x20] sm:$0xff]
  %v681 = vld [vmem:[%s15 + $0x28] sm:$0xff]
  %v682 = vld [vmem:[%s15 + $0x30] sm:$0xff]
  %v683 = vld [vmem:[%s15 + $0x38] sm:$0xff]
  %v685 = vsel %vm87, %v252, 0
  %687 = vmatprep.subr.mxu0 0.0
  %688 = vmatpush1.msra.mxu0 0.0
  %689 = vmatprep.subr.mxu0 0.0
  %690 = vmatpush1.msra.mxu0 0.0
  %691 = vmatprep.subr.mxu0 0.0
  %692 = vmatpush1.msra.mxu0 0.0
  %693 = vmatprep.subr.mxu0 0.0
  %694 = vmatpush1.msra.mxu0 0.0
  %695 = vmatprep.subr.mxu0 0.0
  %696 = vmatpush1.msra.mxu0 0.0
  %697 = vmatprep.subr.mxu0 0.0
  %698 = vmatpush1.msra.mxu0 0.0
  %699 = vmatprep.subr.mxu0 0.0
  %700 = vmatpush1.msra.mxu0 0.0
  %701 = vmatprep.subr.mxu0 0.0
  %702 = vmatpush1.msra.mxu0 0.0
  %703 = vmatprep.subr.mxu0 0.0
  %704 = vmatpush1.msra.mxu0 %v683
  %705 = vmatprep.subr.mxu0 0.0
  %706 = vmatpush1.msra.mxu0 %v682
  %707 = vmatprep.subr.mxu0 0.0
  %708 = vmatpush1.msra.mxu0 %v681
  %709 = vmatprep.subr.mxu0 0.0
  %710 = vmatpush1.msra.mxu0 %v680
  %711 = vmatprep.subr.mxu0 0.0
  %712 = vmatpush1.msra.mxu0 %v679
  %713 = vmatprep.subr.mxu0 0.0
  %714 = vmatpush1.msra.mxu0 %v678
  %715 = vmatprep.subr.mxu0 0.0
  %716 = vmatpush1.msra.mxu0 %v677
  %717 = vmatprep.subr.mxu0 0.0
  %718 = vmatpush1.msra.mxu0 %v676
  %719 = vmatprep.subr.mxu0 0.0
  %720 = vmatpush2.msra.mxu0 0.0
  %721 = vmatprep.subr.mxu0 0.0
  %722 = vmatpush2.msra.mxu0 0.0
  %723 = vmatprep.subr.mxu0 0.0
  %724 = vmatpush2.msra.mxu0 0.0
  %725 = vmatprep.subr.mxu0 0.0
  %726 = vmatpush2.msra.mxu0 0.0
  %727 = vmatprep.subr.mxu0 0.0
  %728 = vmatpush2.msra.mxu0 0.0
  %729 = vmatprep.subr.mxu0 0.0
  %730 = vmatpush2.msra.mxu0 0.0
  %731 = vmatprep.subr.mxu0 0.0
  %732 = vmatpush2.msra.mxu0 0.0
  %733 = vmatprep.subr.mxu0 0.0
  %734 = vmatpush2.msra.mxu0 0.0
  %735 = vmatprep.subr.mxu0 0.0
  %736 = vmatpush2.msra.mxu0 0.0
  %737 = vmatprep.subr.mxu0 0.0
  %738 = vmatpush2.msra.mxu0 0.0
  %739 = vmatprep.subr.mxu0 0.0
  %740 = vmatpush2.msra.mxu0 0.0
  %741 = vmatprep.subr.mxu0 0.0
  %742 = vmatpush2.msra.mxu0 0.0
  %743 = vmatprep.subr.mxu0 0.0
  %744 = vmatpush2.msra.mxu0 0.0
  %745 = vmatprep.subr.mxu0 0.0
  %746 = vmatpush2.msra.mxu0 0.0
  %747 = vmatprep.subr.mxu0 0.0
  %748 = vmatpush2.msra.mxu0 0.0
  %749 = vmatprep.subr.mxu0 0.0
  %750 = vmatpush2.msra.mxu0 0.0
  %751 = vmatprep.mubr.f32.mxu0 0.0
  %752 = vmatmul.mubr.f32.gmra.mxu0 %v685
  %v753 = vpop.f32.mrf.mxu0
  %v754 = vadd.f32 0.0, %v753
  %v755 = vpop.f32.mrf.mxu0
  %756 = vdwg.mxu0
  %v757 = vadd.f32 %v673, %v754
  %v758 = vld [vmem:[%s16] sm:$0x1]
  %v760 = vlaneseq
  %v761 = vshrl.u32 %v760, 7
  %v762 = vsub.s32 0, %v761
  %v763 = vrot.slane %v758, %v762
  %v765 = vadd.f32 %v757, %v763
  %v766 = vmax.f32 %v765, 0.0
  %v767 = vld [vmem:[%s17] sm:$0xff]
  %v768 = vld [vmem:[%s17 + $0x8] sm:$0xff]
  %v769 = vld [vmem:[%s17 + $0x10] sm:$0xff]
  %v770 = vld [vmem:[%s17 + $0x18] sm:$0xff]
  %v771 = vld [vmem:[%s17 + $0x20] sm:$0xff]
  %v772 = vld [vmem:[%s17 + $0x28] sm:$0xff]
  %v773 = vld [vmem:[%s17 + $0x30] sm:$0xff]
  %v774 = vld [vmem:[%s17 + $0x38] sm:$0xff]
  %v775 = vld [vmem:[%s18] sm:$0x1]
  %v777 = vlaneseq
  %v778 = vshrl.u32 %v777, 7
  %v779 = vsub.s32 0, %v778
  %v780 = vrot.slane %v775, %v779
  %v783 = vsel %vm87, %v766, 0
  %785 = vmatprep.subr.mxu0 0.0
  %786 = vmatpush1.msra.mxu0 0.0
  %787 = vmatprep.subr.mxu0 0.0
  %788 = vmatpush1.msra.mxu0 0.0
  %789 = vmatprep.subr.mxu0 0.0
  %790 = vmatpush1.msra.mxu0 0.0
  %791 = vmatprep.subr.mxu0 0.0
  %792 = vmatpush1.msra.mxu0 0.0
  %793 = vmatprep.subr.mxu0 0.0
  %794 = vmatpush1.msra.mxu0 0.0
  %795 = vmatprep.subr.mxu0 0.0
  %796 = vmatpush1.msra.mxu0 0.0
  %797 = vmatprep.subr.mxu0 0.0
  %798 = vmatpush1.msra.mxu0 0.0
  %799 = vmatprep.subr.mxu0 0.0
  %800 = vmatpush1.msra.mxu0 0.0
  %801 = vmatprep.subr.mxu0 0.0
  %802 = vmatpush1.msra.mxu0 %v774
  %803 = vmatprep.subr.mxu0 0.0
  %804 = vmatpush1.msra.mxu0 %v773
  %805 = vmatprep.subr.mxu0 0.0
  %806 = vmatpush1.msra.mxu0 %v772
  %807 = vmatprep.subr.mxu0 0.0
  %808 = vmatpush1.msra.mxu0 %v771
  %809 = vmatprep.subr.mxu0 0.0
  %810 = vmatpush1.msra.mxu0 %v770
  %811 = vmatprep.subr.mxu0 0.0
  %812 = vmatpush1.msra.mxu0 %v769
  %813 = vmatprep.subr.mxu0 0.0
  %814 = vmatpush1.msra.mxu0 %v768
  %815 = vmatprep.subr.mxu0 0.0
  %816 = vmatpush1.msra.mxu0 %v767
  %817 = vmatprep.subr.mxu0 0.0
  %818 = vmatpush2.msra.mxu0 0.0
  %819 = vmatprep.subr.mxu0 0.0
  %820 = vmatpush2.msra.mxu0 0.0
  %821 = vmatprep.subr.mxu0 0.0
  %822 = vmatpush2.msra.mxu0 0.0
  %823 = vmatprep.subr.mxu0 0.0
  %824 = vmatpush2.msra.mxu0 0.0
  %825 = vmatprep.subr.mxu0 0.0
  %826 = vmatpush2.msra.mxu0 0.0
  %827 = vmatprep.subr.mxu0 0.0
  %828 = vmatpush2.msra.mxu0 0.0
  %829 = vmatprep.subr.mxu0 0.0
  %830 = vmatpush2.msra.mxu0 0.0
  %831 = vmatprep.subr.mxu0 0.0
  %832 = vmatpush2.msra.mxu0 0.0
  %833 = vmatprep.subr.mxu0 0.0
  %834 = vmatpush2.msra.mxu0 0.0
  %835 = vmatprep.subr.mxu0 0.0
  %836 = vmatpush2.msra.mxu0 0.0
  %837 = vmatprep.subr.mxu0 0.0
  %838 = vmatpush2.msra.mxu0 0.0
  %839 = vmatprep.subr.mxu0 0.0
  %840 = vmatpush2.msra.mxu0 0.0
  %841 = vmatprep.subr.mxu0 0.0
  %842 = vmatpush2.msra.mxu0 0.0
  %843 = vmatprep.subr.mxu0 0.0
  %844 = vmatpush2.msra.mxu0 0.0
  %845 = vmatprep.subr.mxu0 0.0
  %846 = vmatpush2.msra.mxu0 0.0
  %847 = vmatprep.subr.mxu0 0.0
  %848 = vmatpush2.msra.mxu0 0.0
  %849 = vmatprep.mubr.f32.mxu0 0.0
  %850 = vmatmul.mubr.f32.gmra.mxu0 %v783
  %v851 = vpop.f32.mrf.mxu0
  %v852 = vadd.f32 %v780, %v851
  %v853 = vpop.f32.mrf.mxu0
  %854 = vdwg.mxu0
  %v855 = vmax.f32 %v852, 0.0
  %v856 = vld [vmem:[%s19] sm:$0xff]
  %v857 = vld [vmem:[%s19 + $0x8] sm:$0xff]
  %v858 = vld [vmem:[%s19 + $0x10] sm:$0xff]
  %v859 = vld [vmem:[%s19 + $0x18] sm:$0xff]
  %v860 = vld [vmem:[%s19 + $0x20] sm:$0xff]
  %v861 = vld [vmem:[%s19 + $0x28] sm:$0xff]
  %v862 = vld [vmem:[%s19 + $0x30] sm:$0xff]
  %v863 = vld [vmem:[%s19 + $0x38] sm:$0xff]
  %v864 = vld [vmem:[#allocation2] sm:$0x1]
  %v866 = vlaneseq
  %v867 = vshrl.u32 %v866, 7
  %v868 = vsub.s32 0, %v867
  %v869 = vrot.slane %v864, %v868
  %v872 = vsel %vm87, %v855, 0
  %874 = vmatprep.subr.mxu0 0.0
  %875 = vmatpush1.msra.mxu0 0.0
  %876 = vmatprep.subr.mxu0 0.0
  %877 = vmatpush1.msra.mxu0 0.0
  %878 = vmatprep.subr.mxu0 0.0
  %879 = vmatpush1.msra.mxu0 0.0
  %880 = vmatprep.subr.mxu0 0.0
  %881 = vmatpush1.msra.mxu0 0.0
  %882 = vmatprep.subr.mxu0 0.0
  %883 = vmatpush1.msra.mxu0 0.0
  %884 = vmatprep.subr.mxu0 0.0
  %885 = vmatpush1.msra.mxu0 0.0
  %886 = vmatprep.subr.mxu0 0.0
  %887 = vmatpush1.msra.mxu0 0.0
  %888 = vmatprep.subr.mxu0 0.0
  %889 = vmatpush1.msra.mxu0 0.0
  %890 = vmatprep.subr.mxu0 0.0
  %891 = vmatpush1.msra.mxu0 %v863
  %892 = vmatprep.subr.mxu0 0.0
  %893 = vmatpush1.msra.mxu0 %v862
  %894 = vmatprep.subr.mxu0 0.0
  %895 = vmatpush1.msra.mxu0 %v861
  %896 = vmatprep.subr.mxu0 0.0
  %897 = vmatpush1.msra.mxu0 %v860
  %898 = vmatprep.subr.mxu0 0.0
  %899 = vmatpush1.msra.mxu0 %v859
  %900 = vmatprep.subr.mxu0 0.0
  %901 = vmatpush1.msra.mxu0 %v858
  %902 = vmatprep.subr.mxu0 0.0
  %903 = vmatpush1.msra.mxu0 %v857
  %904 = vmatprep.subr.mxu0 0.0
  %905 = vmatpush1.msra.mxu0 %v856
  %906 = vmatprep.subr.mxu0 0.0
  %907 = vmatpush2.msra.mxu0 0.0
  %908 = vmatprep.subr.mxu0 0.0
  %909 = vmatpush2.msra.mxu0 0.0
  %910 = vmatprep.subr.mxu0 0.0
  %911 = vmatpush2.msra.mxu0 0.0
  %912 = vmatprep.subr.mxu0 0.0
  %913 = vmatpush2.msra.mxu0 0.0
  %914 = vmatprep.subr.mxu0 0.0
  %915 = vmatpush2.msra.mxu0 0.0
  %916 = vmatprep.subr.mxu0 0.0
  %917 = vmatpush2.msra.mxu0 0.0
  %918 = vmatprep.subr.mxu0 0.0
  %919 = vmatpush2.msra.mxu0 0.0
  %920 = vmatprep.subr.mxu0 0.0
  %921 = vmatpush2.msra.mxu0 0.0
  %922 = vmatprep.subr.mxu0 0.0
  %923 = vmatpush2.msra.mxu0 0.0
  %924 = vmatprep.subr.mxu0 0.0
  %925 = vmatpush2.msra.mxu0 0.0
  %926 = vmatprep.subr.mxu0 0.0
  %927 = vmatpush2.msra.mxu0 0.0
  %928 = vmatprep.subr.mxu0 0.0
  %929 = vmatpush2.msra.mxu0 0.0
  %930 = vmatprep.subr.mxu0 0.0
  %931 = vmatpush2.msra.mxu0 0.0
  %932 = vmatprep.subr.mxu0 0.0
  %933 = vmatpush2.msra.mxu0 0.0
  %934 = vmatprep.subr.mxu0 0.0
  %935 = vmatpush2.msra.mxu0 0.0
  %936 = vmatprep.subr.mxu0 0.0
  %937 = vmatpush2.msra.mxu0 0.0
  %938 = vmatprep.mubr.f32.mxu0 0.0
  %939 = vmatmul.mubr.f32.gmra.mxu0 %v872
  %v940 = vpop.f32.mrf.mxu0
  %v941 = vadd.f32 %v869, %v940
  %v942 = vpop.f32.mrf.mxu0
  %943 = vdwg.mxu0
  %v944 = vmax.f32 %v941, 0.0
  %vm945 = vcmask 1024
  %946 = vst.msk [vmem:[%s21] sm:$0x3] %vm945, %v944
  // Predicated region
  $region86: #{dqn_forward.7} parent=0 // pred_check
    _
  $region87: #{dqn_forward.7} parent=0 // pred_check_branch
    %948 = sbr.rel (0) target = $region89
  $region88: #{dqn_forward.7} parent=0 // pred_region
    _
  $region89: #{dqn_forward.7} parent=0 // pred_fallthru
    _
  // Predicated region
  $region90: #{dqn_forward.7} parent=0 // pred_check
    _
  $region91: #{dqn_forward.7} parent=0 // pred_check_branch
    %950 = sbr.rel (0) target = $region93
  $region92: #{dqn_forward.7} parent=0 // pred_region
    _
  $region93: #{dqn_forward.7} parent=0 // pred_fallthru
    _

</llo_original>
